<compile_context>
chip_gen: v7x
topology: tpu7x:2x2x1
jax: 0.10.0
libtpu: 0.0.40
codegen_flags: <defaults>
</compile_context>

<pallas_src>
import functools

import jax
import jax.numpy as jnp
from jax.experimental import pallas as pl
from jax.experimental.pallas import tpu as pltpu


# -----------------------------------------------------------------------------
# Kernel 1: pre-gates = sum_s x_slab[s] @ W_ih_slab[s] + bias, for both
# directions (grid axis 0 = direction).  One big, fully pipelined MXU matmul.
# -----------------------------------------------------------------------------
def _pregates_kernel(x_ref, w_ref, b_ref, out_ref, *, nslab):
    acc = jnp.dot(x_ref[0], w_ref[0], preferred_element_type=jnp.float32)
    for s in range(1, nslab):
        acc = acc + jnp.dot(x_ref[s], w_ref[s],
                            preferred_element_type=jnp.float32)
    out_ref[...] = acc + b_ref[...]


def pregates(x, w_ih, b, hidden_dim):
    """x: (nslab, N, F) f32 ; w_ih: (2, nslab, F, 4H) ; b: (2, 1, 4H).

    Returns (2, N, 4H) pre-activation gates (direction 0 = fwd, 1 = bwd),
    where N = seq_len * padded_batch and rows [t*Bp:(t+1)*Bp] are timestep t.
    """
    nslab, N, F = x.shape
    H4 = 4 * hidden_dim
    return pl.pallas_call(
        functools.partial(_pregates_kernel, nslab=nslab),
        out_shape=jax.ShapeDtypeStruct((2, N, H4), jnp.float32),
        grid_spec=pltpu.PrefetchScalarGridSpec(
            num_scalar_prefetch=0,
            grid=(2,),
            in_specs=[
                pl.BlockSpec((nslab, N, F), lambda d: (0, 0, 0)),
                pl.BlockSpec((None, nslab, F, H4), lambda d: (d, 0, 0, 0)),
                pl.BlockSpec((None, 1, H4), lambda d: (d, 0, 0)),
            ],
            out_specs=pl.BlockSpec((None, N, H4), lambda d: (d, 0, 0)),
        ),
        compiler_params=pltpu.CompilerParams(
            dimension_semantics=("parallel",)),
    )(x, w_ih, b)


# -----------------------------------------------------------------------------
# Kernel 2: fused bidirectional recurrence.  grid = (direction, time_chunks).
# Each grid step processes `chunk` timesteps with an unrolled fori_loop; the
# per-step critical path is one (Bp,H)x(H,4H) matmul + gating.  The backward
# direction reads/writes reversed time via index_map + reversed in-chunk rows,
# so its per-timestep outputs land at the ORIGINAL time positions.
# -----------------------------------------------------------------------------
def _bilstm_kernel(pg_ref, whh_ref, out_ref, h_scr, c_scr,
                   *, hidden_dim, chunk, bp):
    d = pl.program_id(0)          # 0 = forward, 1 = backward
    c = pl.program_id(1)          # time-chunk index (internal order)

    @pl.when(c == 0)
    def _():
        h_scr[...] = jnp.zeros_like(h_scr)
        c_scr[...] = jnp.zeros_like(c_scr)

    H = hidden_dim
    w_hh = whh_ref[...]           # (H, 4H)

    def step(j, carry):
        h_prev, c_prev = carry
        # forward: rows in order; backward: reversed within the chunk.
        row = (1 - d) * j + d * (chunk - 1 - j)
        start = pl.multiple_of(row * bp, bp)
        gates = pg_ref[pl.ds(start, bp), :] + jnp.dot(
            h_prev, w_hh, preferred_element_type=jnp.float32)   # (bp, 4H)
        i_g = jax.nn.sigmoid(gates[:, 0 * H:1 * H])
        f_g = jax.nn.sigmoid(gates[:, 1 * H:2 * H])
        g_g = jnp.tanh(gates[:, 2 * H:3 * H])
        o_g = jax.nn.sigmoid(gates[:, 3 * H:4 * H])
        c_new = f_g * c_prev + i_g * g_g
        h_new = o_g * jnp.tanh(c_new)
        out_ref[pl.ds(start, bp), :] = h_new
        return h_new, c_new

    h_fin, c_fin = jax.lax.fori_loop(
        0, chunk, step, (h_scr[...], c_scr[...]), unroll=True)
    h_scr[...] = h_fin
    c_scr[...] = c_fin


def bilstm_recurrence(pg, w_hh, hidden_dim, seq_len, bp, time_chunk=32):
    """pg: (2, S*bp, 4H) pre-gates ; w_hh: (2, H, 4H) -> (2, S*bp, H) hiddens."""
    H = hidden_dim
    _, N, _ = pg.shape
    assert N == seq_len * bp
    T = min(seq_len, max(1, time_chunk))
    while seq_len % T:
        T -= 1
    nc = seq_len // T
    rows = T * bp

    def io_map(d, c):
        # forward: chunk c ; backward: chunk nc-1-c (time reversal via DMA addressing)
        return (d, (1 - d) * c + d * (nc - 1 - c), 0)

    return pl.pallas_call(
        functools.partial(_bilstm_kernel, hidden_dim=H, chunk=T, bp=bp),
        out_shape=jax.ShapeDtypeStruct((2, N, H), jnp.float32),
        grid_spec=pltpu.PrefetchScalarGridSpec(
            num_scalar_prefetch=0,
            grid=(2, nc),
            in_specs=[
                pl.BlockSpec((None, rows, 4 * H), io_map),
                pl.BlockSpec((None, H, 4 * H), lambda d, c: (d, 0, 0)),
            ],
            out_specs=pl.BlockSpec((None, rows, H), io_map),
            scratch_shapes=[
                pltpu.VMEM((bp, H), jnp.float32),
                pltpu.VMEM((bp, H), jnp.float32),
            ],
        ),
        compiler_params=pltpu.CompilerParams(
            # direction axis is independent (2 TCs on v7x); time is sequential.
            dimension_semantics=("parallel", "arbitrary")),
    )(pg, w_hh)


# -----------------------------------------------------------------------------
# Kernel 3: final fully-connected layer.  Takes the two final hidden states
# directly (no concat); output dim is pre-padded to 128 for a lane-dense store.
# -----------------------------------------------------------------------------
def _linear_kernel(hf_ref, hb_ref, wf_ref, wb_ref, b_ref, o_ref):
    o_ref[...] = (
        jnp.dot(hf_ref[...], wf_ref[...], preferred_element_type=jnp.float32)
        + jnp.dot(hb_ref[...], wb_ref[...], preferred_element_type=jnp.float32)
        + b_ref[...])


def linear_fc(h_f, h_b, w_f, w_b, b):
    Bp, H = h_f.shape
    Op = w_f.shape[1]
    return pl.pallas_call(
        _linear_kernel,
        out_shape=jax.ShapeDtypeStruct((Bp, Op), jnp.float32),
        grid_spec=pltpu.PrefetchScalarGridSpec(
            num_scalar_prefetch=0,
            grid=(1,),
            in_specs=[
                pl.BlockSpec((Bp, H), lambda i: (0, 0)),
                pl.BlockSpec((Bp, H), lambda i: (0, 0)),
                pl.BlockSpec((H, Op), lambda i: (0, 0)),
                pl.BlockSpec((H, Op), lambda i: (0, 0)),
                pl.BlockSpec((1, Op), lambda i: (0, 0)),
            ],
            out_specs=pl.BlockSpec((Bp, Op), lambda i: (0, 0)),
        ),
    )(h_f, h_b, w_f, w_b, b)


# -----------------------------------------------------------------------------
# Parameter init (PyTorch-like uniform(-1/sqrt(H), 1/sqrt(H)); gate order ifgo).
# -----------------------------------------------------------------------------
def init_params(key, input_dim, embedding_dim, hidden_dim, output_dim, n_layers):
    H = hidden_dim
    k = 1.0 / jnp.sqrt(jnp.float32(H))

    def unif(key, shape):
        return jax.random.uniform(key, shape, jnp.float32, -k, k)

    keys = iter(jax.random.split(key, 1 + 8 * n_layers + 2))

    params = {"embedding": jax.random.normal(
        next(keys), (input_dim, embedding_dim), jnp.float32)}

    layers = []
    for layer_idx in range(n_layers):
        in_dim = embedding_dim if layer_idx == 0 else 2 * H
        nslab = 1 if layer_idx == 0 else 2
        F = in_dim // nslab
        w_ih_dirs, w_hh_dirs, b_dirs = [], [], []
        for _ in range(2):                       # fwd, bwd
            w_ih = unif(next(keys), (in_dim, 4 * H)).reshape(nslab, F, 4 * H)
            w_hh = unif(next(keys), (H, 4 * H))
            b_ih = unif(next(keys), (1, 4 * H))
            b_hh = unif(next(keys), (1, 4 * H))
            w_ih_dirs.append(w_ih)
            w_hh_dirs.append(w_hh)
            b_dirs.append(b_ih + b_hh)
        layers.append({
            "w_ih": jnp.stack(w_ih_dirs),        # (2, nslab, F, 4H)
            "w_hh": jnp.stack(w_hh_dirs),        # (2, H, 4H)
            "b": jnp.stack(b_dirs),              # (2, 1, 4H)
        })
    params["lstm"] = layers

    O_pad = ((output_dim + 127) // 128) * 128
    fc_w = jnp.pad(unif(next(keys), (2 * H, output_dim)),
                   ((0, 0), (0, O_pad - output_dim)))
    fc_b = jnp.pad(unif(next(keys), (1, output_dim)),
                   ((0, 0), (0, O_pad - output_dim)))
    params["fc_wf"] = fc_w[:H]                   # applies to fwd final hidden
    params["fc_wb"] = fc_w[H:]                   # applies to bwd final hidden
    params["fc_b"] = fc_b
    return params


# -----------------------------------------------------------------------------
# Full forward pass (eval mode: both dropouts are identity).
# -----------------------------------------------------------------------------
@functools.partial(jax.jit,
                   static_argnames=("hidden_dim", "output_dim", "time_chunk"))
def simple_lstm_forward(params, text, *, hidden_dim, output_dim, time_chunk=32):
    S, B = text.shape
    H = hidden_dim
    Bp = ((B + 7) // 8) * 8                       # pad batch to sublane count

    # TODO(synk): embedding gather has no tidy Pallas tile pattern; done in XLA.
    x = params["embedding"][text]                 # (S, B, E)
    x = jnp.pad(x, ((0, 0), (0, Bp - B), (0, 0)))  # (S, Bp, E)
    x = x.reshape(1, S * Bp, x.shape[-1])         # slab layout (nslab=1, N, E)

    out = None
    for layer in params["lstm"]:
        pg = pregates(x, layer["w_ih"], layer["b"], H)            # (2, N, 4H)
        out = bilstm_recurrence(pg, layer["w_hh"], H, S, Bp, time_chunk)
        x = out            # (2, N, H): direction slabs feed the next layer
        # inter-layer LSTM dropout: identity in eval mode.

    h_fwd_final = out[0, (S - 1) * Bp: S * Bp]    # == hidden[-2] (PyTorch)
    h_bwd_final = out[1, 0:Bp]                    # == hidden[-1] (PyTorch)
    # nn.Dropout in eval mode -> identity.
    y = linear_fc(h_fwd_final, h_bwd_final,
                  params["fc_wf"], params["fc_wb"], params["fc_b"])
    return y[:B, :output_dim]


# -----------------------------------------------------------------------------
# Pure-JAX reference (same params) used as a correctness check.
# -----------------------------------------------------------------------------
def _reference_forward(params, text, hidden_dim, output_dim):
    H = hidden_dim
    S, B = text.shape
    x = params["embedding"][text]                 # (S, B, E)
    finals = []
    for layer in params["lstm"]:
        w_ih = layer["w_ih"].reshape(2, -1, 4 * H)   # (2, In, 4H)
        w_hh = layer["w_hh"]
        b = layer["b"]
        outs, finals = [], []
        for d in range(2):
            xs = x if d == 0 else x[::-1]
            h = jnp.zeros((B, H), jnp.float32)
            c = jnp.zeros((B, H), jnp.float32)
            hs = []
            for t in range(S):
                g = xs[t] @ w_ih[d] + h @ w_hh[d] + b[d]
                i = jax.nn.sigmoid(g[:, :H])
                f = jax.nn.sigmoid(g[:, H:2 * H])
                gg = jnp.tanh(g[:, 2 * H:3 * H])
                o = jax.nn.sigmoid(g[:, 3 * H:])
                c = f * c + i * gg
                h = o * jnp.tanh(c)
                hs.append(h)
            hs = jnp.stack(hs)
            if d == 1:
                hs = hs[::-1]
            outs.append(hs)
            finals.append(h)
        x = jnp.concatenate(outs, axis=-1)
    hidden = jnp.concatenate(finals, axis=-1)     # (B, 2H)
    w = jnp.concatenate([params["fc_wf"], params["fc_wb"]], axis=0)
    return (hidden @ w + params["fc_b"])[:, :output_dim]


if __name__ == "__main__":
    INPUT_DIM = 50        # vocab size
    EMBEDDING_DIM = 16
    HIDDEN_DIM = 32
    OUTPUT_DIM = 4
    N_LAYERS = 2
    BATCH = 2
    SEQ = 8

    key = jax.random.PRNGKey(0)
    pkey, tkey = jax.random.split(key)

    params = init_params(pkey, INPUT_DIM, EMBEDDING_DIM, HIDDEN_DIM,
                         OUTPUT_DIM, N_LAYERS)
    text = jax.random.randint(tkey, (SEQ, BATCH), 0, INPUT_DIM, jnp.int32)

    out = simple_lstm_forward(params, text,
                              hidden_dim=HIDDEN_DIM, output_dim=OUTPUT_DIM)
    jax.block_until_ready(out)
    assert out.shape == (BATCH, OUTPUT_DIM), out.shape

    ref = _reference_forward(params, text, HIDDEN_DIM, OUTPUT_DIM)
    assert bool(jnp.allclose(out, ref, atol=1e-2, rtol=1e-2)), (out, ref)

    print("KERNEL_OK")
</pallas_src>

<mosaic_0001>
module attributes {stable_mosaic.version = 11 : i64} {
  func.func @_pregates_kernel(%arg0: i32, %arg1: memref<1x64x16xf32, #tpu.memory_space<vmem>>, %arg2: memref<1x1x16x128xf32, #tpu.memory_space<vmem>>, %arg3: memref<1x1x128xf32, #tpu.memory_space<vmem>>, %arg4: memref<1x64x128xf32, #tpu.memory_space<vmem>>) attributes {dimension_semantics = [#tpu.dimension_semantics<parallel>], iteration_bounds = array<i64: 2>, scalar_prefetch = 0 : i64, scratch_operands = 0 : i64, tpu.core_type = #tpu.core_type<tc>, window_params = [{pipeline_mode = #tpu.pipeline_mode<synchronous>, transform_indices = @transform_0, window_bounds = array<i64: 1, 64, 16>}, {transform_indices = @transform_1, window_bounds = array<i64: 1, 1, 16, 128>}, {transform_indices = @transform_2, window_bounds = array<i64: 1, 1, 128>}, {transform_indices = @transform_3, window_bounds = array<i64: 1, 64, 128>}]} {
    %c0 = arith.constant 0 : index
    %c0_0 = arith.constant 0 : index
    %c0_1 = arith.constant 0 : index
    %0 = vector.load %arg1[%c0, %c0_0, %c0_1] : memref<1x64x16xf32, #tpu.memory_space<vmem>>, vector<1x64x16xf32>
    %1 = vector.shape_cast %0 : vector<1x64x16xf32> to vector<64x16xf32>
    %c0_2 = arith.constant 0 : index
    %c0_3 = arith.constant 0 : index
    %c0_4 = arith.constant 0 : index
    %c0_5 = arith.constant 0 : index
    %2 = vector.load %arg2[%c0_2, %c0_3, %c0_4, %c0_5] : memref<1x1x16x128xf32, #tpu.memory_space<vmem>>, vector<1x1x16x128xf32>
    %3 = vector.shape_cast %2 : vector<1x1x16x128xf32> to vector<16x128xf32>
    %cst = arith.constant dense<0.000000e+00> : vector<64x128xf32>
    %4 = tpu.matmul %1, %3, %cst {dimension_numbers = #tpu.dot_dimension_numbers<[1], [0], [0], [1], [0, 0, 1, 1], [], []>} : vector<64x16xf32>, vector<16x128xf32>, vector<64x128xf32> -> vector<64x128xf32>
    %c0_6 = arith.constant 0 : index
    %c0_7 = arith.constant 0 : index
    %c0_8 = arith.constant 0 : index
    %5 = vector.load %arg3[%c0_6, %c0_7, %c0_8] : memref<1x1x128xf32, #tpu.memory_space<vmem>>, vector<1x1x128xf32>
    %6 = vector.shape_cast %5 : vector<1x1x128xf32> to vector<1x128xf32>
    %7 = vector.broadcast %6 : vector<1x128xf32> to vector<64x128xf32>
    %8 = arith.addf %4, %7 : vector<64x128xf32>
    %c0_9 = arith.constant 0 : index
    %c0_10 = arith.constant 0 : index
    %c0_11 = arith.constant 0 : index
    %9 = vector.load %arg4[%c0_9, %c0_10, %c0_11] : memref<1x64x128xf32, #tpu.memory_space<vmem>>, vector<1x64x128xf32>
    %10 = vector.shape_cast %9 : vector<1x64x128xf32> to vector<64x128xf32>
    %11 = vector.shape_cast %8 : vector<64x128xf32> to vector<1x64x128xf32>
    tpu.vector_store %arg4[%c0_9, %c0_10, %c0_11], %11 {strides = array<i32>} : memref<1x64x128xf32, #tpu.memory_space<vmem>>, vector<1x64x128xf32>,
    return
  }
  func.func @transform_0(%arg0: i32) -> (i32, i32, i32) {
    %c0_i32 = arith.constant 0 : i32
    %c0_i32_0 = arith.constant 0 : i32
    %c0_i32_1 = arith.constant 0 : i32
    %c0_i32_2 = arith.constant 0 : i32
    return %c0_i32, %c0_i32_0, %c0_i32_1 : i32, i32, i32
  }
  func.func @transform_1(%arg0: i32) -> (i32, i32, i32, i32) {
    %c0_i32 = arith.constant 0 : i32
    %c0_i32_0 = arith.constant 0 : i32
    %c0_i32_1 = arith.constant 0 : i32
    %c0_i32_2 = arith.constant 0 : i32
    return %arg0, %c0_i32, %c0_i32_0, %c0_i32_1 : i32, i32, i32, i32
  }
  func.func @transform_2(%arg0: i32) -> (i32, i32, i32) {
    %c0_i32 = arith.constant 0 : i32
    %c0_i32_0 = arith.constant 0 : i32
    %c0_i32_1 = arith.constant 0 : i32
    return %arg0, %c0_i32, %c0_i32_0 : i32, i32, i32
  }
  func.func @transform_3(%arg0: i32) -> (i32, i32, i32) {
    %c0_i32 = arith.constant 0 : i32
    %c0_i32_0 = arith.constant 0 : i32
    %c0_i32_1 = arith.constant 0 : i32
    return %arg0, %c0_i32, %c0_i32_0 : i32, i32, i32
  }
}

module attributes {stable_mosaic.version = 11 : i64} {
  func.func @_bilstm_kernel(%arg0: i32, %arg1: i32, %arg2: memref<1x64x128xf32, #tpu.memory_space<vmem>>, %arg3: memref<1x32x128xf32, #tpu.memory_space<vmem>>, %arg4: memref<1x64x32xf32, #tpu.memory_space<vmem>>, %arg5: memref<8x32xf32, #tpu.memory_space<vmem>>, %arg6: memref<8x32xf32, #tpu.memory_space<vmem>>) attributes {dimension_semantics = [#tpu.dimension_semantics<parallel>, #tpu.dimension_semantics<arbitrary>], iteration_bounds = array<i64: 2, 1>, scalar_prefetch = 0 : i64, scratch_operands = 2 : i64, tpu.core_type = #tpu.core_type<tc>, window_params = [{transform_indices = @transform_0, window_bounds = array<i64: 1, 64, 128>}, {transform_indices = @transform_1, window_bounds = array<i64: 1, 32, 128>}, {transform_indices = @transform_2, window_bounds = array<i64: 1, 64, 32>}]} {
    %c0_i32 = arith.constant 0 : i32
    %0 = arith.cmpi eq, %arg1, %c0_i32 : i32
    %1 = arith.extui %0 : i1 to i32
    %c0_i32_0 = arith.constant 0 : i32
    %2 = arith.cmpi ne, %1, %c0_i32_0 : i32
    scf.if %2 {
      %cst_99 = arith.constant 0.000000e+00 : f32
      %337 = vector.broadcast %cst_99 : f32 to vector<8x32xf32>
      %c0_100 = arith.constant 0 : index
      %c0_101 = arith.constant 0 : index
      %338 = vector.load %arg5[%c0_100, %c0_101] : memref<8x32xf32, #tpu.memory_space<vmem>>, vector<8x32xf32>
      tpu.vector_store %arg5[%c0_100, %c0_101], %337 {strides = array<i32>} : memref<8x32xf32, #tpu.memory_space<vmem>>, vector<8x32xf32>,
      %cst_102 = arith.constant 0.000000e+00 : f32
      %339 = vector.broadcast %cst_102 : f32 to vector<8x32xf32>
      %c0_103 = arith.constant 0 : index
      %c0_104 = arith.constant 0 : index
      %340 = vector.load %arg6[%c0_103, %c0_104] : memref<8x32xf32, #tpu.memory_space<vmem>>, vector<8x32xf32>
      tpu.vector_store %arg6[%c0_103, %c0_104], %339 {strides = array<i32>} : memref<8x32xf32, #tpu.memory_space<vmem>>, vector<8x32xf32>,
    } else {
    }
    %c0 = arith.constant 0 : index
    %c0_1 = arith.constant 0 : index
    %c0_2 = arith.constant 0 : index
    %3 = vector.load %arg3[%c0, %c0_1, %c0_2] : memref<1x32x128xf32, #tpu.memory_space<vmem>>, vector<1x32x128xf32>
    %4 = vector.shape_cast %3 : vector<1x32x128xf32> to vector<32x128xf32>
    %c0_3 = arith.constant 0 : index
    %c0_4 = arith.constant 0 : index
    %5 = vector.load %arg5[%c0_3, %c0_4] : memref<8x32xf32, #tpu.memory_space<vmem>>, vector<8x32xf32>
    %c0_5 = arith.constant 0 : index
    %c0_6 = arith.constant 0 : index
    %6 = vector.load %arg6[%c0_5, %c0_6] : memref<8x32xf32, #tpu.memory_space<vmem>>, vector<8x32xf32>
    %c0_i32_7 = arith.constant 0 : i32
    %c1_i32 = arith.constant 1 : i32
    %7 = arith.subi %c1_i32, %arg0 : i32
    %8 = arith.muli %7, %c0_i32_7 : i32
    %c7_i32 = arith.constant 7 : i32
    %9 = arith.subi %c7_i32, %c0_i32_7 : i32
    %10 = arith.muli %arg0, %9 : i32
    %11 = arith.addi %8, %10 : i32
    %c8_i32 = arith.constant 8 : i32
    %12 = arith.muli %11, %c8_i32 : i32
    %13 = tpu.assume_multiple %12, 8 : i32
    %c0_8 = arith.constant 0 : index
    %14 = arith.index_cast %13 : i32 to index
    %c0_9 = arith.constant 0 : index
    %15 = vector.load %arg2[%c0_8, %14, %c0_9] : memref<1x64x128xf32, #tpu.memory_space<vmem>>, vector<1x8x128xf32>
    %16 = vector.shape_cast %15 : vector<1x8x128xf32> to vector<8x128xf32>
    %cst = arith.constant dense<0.000000e+00> : vector<8x128xf32>
    %17 = tpu.matmul %5, %4, %cst {dimension_numbers = #tpu.dot_dimension_numbers<[1], [0], [0], [1], [0, 0, 1, 1], [], []>} : vector<8x32xf32>, vector<32x128xf32>, vector<8x128xf32> -> vector<8x128xf32>
    %18 = arith.addf %16, %17 : vector<8x128xf32>
    %19 = vector.extract_strided_slice %18 {offsets = [0, 0], sizes = [8, 32], strides = [1, 1]} : vector<8x128xf32> to vector<8x32xf32>
    %20 = arith.negf %19 : vector<8x32xf32>
    %21 = math.exp %20 : vector<8x32xf32>
    %cst_10 = arith.constant 1.000000e+00 : f32
    %22 = vector.broadcast %cst_10 : f32 to vector<8x32xf32>
    %23 = arith.addf %22, %21 : vector<8x32xf32>
    %24 = arith.divf %22, %23 : vector<8x32xf32>
    %25 = vector.extract_strided_slice %18 {offsets = [0, 32], sizes = [8, 32], strides = [1, 1]} : vector<8x128xf32> to vector<8x32xf32>
    %26 = arith.negf %25 : vector<8x32xf32>
    %27 = math.exp %26 : vector<8x32xf32>
    %cst_11 = arith.constant 1.000000e+00 : f32
    %28 = vector.broadcast %cst_11 : f32 to vector<8x32xf32>
    %29 = arith.addf %28, %27 : vector<8x32xf32>
    %30 = arith.divf %28, %29 : vector<8x32xf32>
    %31 = vector.extract_strided_slice %18 {offsets = [0, 64], sizes = [8, 32], strides = [1, 1]} : vector<8x128xf32> to vector<8x32xf32>
    %32 = math.tanh %31 : vector<8x32xf32>
    %33 = vector.extract_strided_slice %18 {offsets = [0, 96], sizes = [8, 32], strides = [1, 1]} : vector<8x128xf32> to vector<8x32xf32>
    %34 = arith.negf %33 : vector<8x32xf32>
    %35 = math.exp %34 : vector<8x32xf32>
    %cst_12 = arith.constant 1.000000e+00 : f32
    %36 = vector.broadcast %cst_12 : f32 to vector<8x32xf32>
    %37 = arith.addf %36, %35 : vector<8x32xf32>
    %38 = arith.divf %36, %37 : vector<8x32xf32>
    %39 = arith.mulf %30, %6 : vector<8x32xf32>
    %40 = arith.mulf %24, %32 : vector<8x32xf32>
    %41 = arith.addf %39, %40 : vector<8x32xf32>
    %42 = math.tanh %41 : vector<8x32xf32>
    %43 = arith.mulf %38, %42 : vector<8x32xf32>
    %c0_13 = arith.constant 0 : index
    %44 = arith.index_cast %13 : i32 to index
    %c0_14 = arith.constant 0 : index
    %45 = vector.load %arg4[%c0_13, %44, %c0_14] : memref<1x64x32xf32, #tpu.memory_space<vmem>>, vector<1x8x32xf32>
    %46 = vector.shape_cast %45 : vector<1x8x32xf32> to vector<8x32xf32>
    %47 = vector.shape_cast %43 : vector<8x32xf32> to vector<1x8x32xf32>
    tpu.vector_store %arg4[%c0_13, %44, %c0_14], %47 {strides = array<i32>} : memref<1x64x32xf32, #tpu.memory_space<vmem>>, vector<1x8x32xf32>,
    %c1_i32_15 = arith.constant 1 : i32
    %c1_i32_16 = arith.constant 1 : i32
    %48 = arith.subi %c1_i32_16, %arg0 : i32
    %49 = arith.muli %48, %c1_i32_15 : i32
    %c7_i32_17 = arith.constant 7 : i32
    %50 = arith.subi %c7_i32_17, %c1_i32_15 : i32
    %51 = arith.muli %arg0, %50 : i32
    %52 = arith.addi %49, %51 : i32
    %c8_i32_18 = arith.constant 8 : i32
    %53 = arith.muli %52, %c8_i32_18 : i32
    %54 = tpu.assume_multiple %53, 8 : i32
    %c0_19 = arith.constant 0 : index
    %55 = arith.index_cast %54 : i32 to index
    %c0_20 = arith.constant 0 : index
    %56 = vector.load %arg2[%c0_19, %55, %c0_20] : memref<1x64x128xf32, #tpu.memory_space<vmem>>, vector<1x8x128xf32>
    %57 = vector.shape_cast %56 : vector<1x8x128xf32> to vector<8x128xf32>
    %cst_21 = arith.constant dense<0.000000e+00> : vector<8x128xf32>
    %58 = tpu.matmul %43, %4, %cst_21 {dimension_numbers = #tpu.dot_dimension_numbers<[1], [0], [0], [1], [0, 0, 1, 1], [], []>} : vector<8x32xf32>, vector<32x128xf32>, vector<8x128xf32> -> vector<8x128xf32>
    %59 = arith.addf %57, %58 : vector<8x128xf32>
    %60 = vector.extract_strided_slice %59 {offsets = [0, 0], sizes = [8, 32], strides = [1, 1]} : vector<8x128xf32> to vector<8x32xf32>
    %61 = arith.negf %60 : vector<8x32xf32>
    %62 = math.exp %61 : vector<8x32xf32>
    %cst_22 = arith.constant 1.000000e+00 : f32
    %63 = vector.broadcast %cst_22 : f32 to vector<8x32xf32>
    %64 = arith.addf %63, %62 : vector<8x32xf32>
    %65 = arith.divf %63, %64 : vector<8x32xf32>
    %66 = vector.extract_strided_slice %59 {offsets = [0, 32], sizes = [8, 32], strides = [1, 1]} : vector<8x128xf32> to vector<8x32xf32>
    %67 = arith.negf %66 : vector<8x32xf32>
    %68 = math.exp %67 : vector<8x32xf32>
    %cst_23 = arith.constant 1.000000e+00 : f32
    %69 = vector.broadcast %cst_23 : f32 to vector<8x32xf32>
    %70 = arith.addf %69, %68 : vector<8x32xf32>
    %71 = arith.divf %69, %70 : vector<8x32xf32>
    %72 = vector.extract_strided_slice %59 {offsets = [0, 64], sizes = [8, 32], strides = [1, 1]} : vector<8x128xf32> to vector<8x32xf32>
    %73 = math.tanh %72 : vector<8x32xf32>
    %74 = vector.extract_strided_slice %59 {offsets = [0, 96], sizes = [8, 32], strides = [1, 1]} : vector<8x128xf32> to vector<8x32xf32>
    %75 = arith.negf %74 : vector<8x32xf32>
    %76 = math.exp %75 : vector<8x32xf32>
    %cst_24 = arith.constant 1.000000e+00 : f32
    %77 = vector.broadcast %cst_24 : f32 to vector<8x32xf32>
    %78 = arith.addf %77, %76 : vector<8x32xf32>
    %79 = arith.divf %77, %78 : vector<8x32xf32>
    %80 = arith.mulf %71, %41 : vector<8x32xf32>
    %81 = arith.mulf %65, %73 : vector<8x32xf32>
    %82 = arith.addf %80, %81 : vector<8x32xf32>
    %83 = math.tanh %82 : vector<8x32xf32>
    %84 = arith.mulf %79, %83 : vector<8x32xf32>
    %c0_25 = arith.constant 0 : index
    %85 = arith.index_cast %54 : i32 to index
    %c0_26 = arith.constant 0 : index
    %86 = vector.load %arg4[%c0_25, %85, %c0_26] : memref<1x64x32xf32, #tpu.memory_space<vmem>>, vector<1x8x32xf32>
    %87 = vector.shape_cast %86 : vector<1x8x32xf32> to vector<8x32xf32>
    %88 = vector.shape_cast %84 : vector<8x32xf32> to vector<1x8x32xf32>
    tpu.vector_store %arg4[%c0_25, %85, %c0_26], %88 {strides = array<i32>} : memref<1x64x32xf32, #tpu.memory_space<vmem>>, vector<1x8x32xf32>,
    %c2_i32 = arith.constant 2 : i32
    %c1_i32_27 = arith.constant 1 : i32
    %89 = arith.subi %c1_i32_27, %arg0 : i32
    %90 = arith.muli %89, %c2_i32 : i32
    %c7_i32_28 = arith.constant 7 : i32
    %91 = arith.subi %c7_i32_28, %c2_i32 : i32
    %92 = arith.muli %arg0, %91 : i32
    %93 = arith.addi %90, %92 : i32
    %c8_i32_29 = arith.constant 8 : i32
    %94 = arith.muli %93, %c8_i32_29 : i32
    %95 = tpu.assume_multiple %94, 8 : i32
    %c0_30 = arith.constant 0 : index
    %96 = arith.index_cast %95 : i32 to index
    %c0_31 = arith.constant 0 : index
    %97 = vector.load %arg2[%c0_30, %96, %c0_31] : memref<1x64x128xf32, #tpu.memory_space<vmem>>, vector<1x8x128xf32>
    %98 = vector.shape_cast %97 : vector<1x8x128xf32> to vector<8x128xf32>
    %cst_32 = arith.constant dense<0.000000e+00> : vector<8x128xf32>
    %99 = tpu.matmul %84, %4, %cst_32 {dimension_numbers = #tpu.dot_dimension_numbers<[1], [0], [0], [1], [0, 0, 1, 1], [], []>} : vector<8x32xf32>, vector<32x128xf32>, vector<8x128xf32> -> vector<8x128xf32>
    %100 = arith.addf %98, %99 : vector<8x128xf32>
    %101 = vector.extract_strided_slice %100 {offsets = [0, 0], sizes = [8, 32], strides = [1, 1]} : vector<8x128xf32> to vector<8x32xf32>
    %102 = arith.negf %101 : vector<8x32xf32>
    %103 = math.exp %102 : vector<8x32xf32>
    %cst_33 = arith.constant 1.000000e+00 : f32
    %104 = vector.broadcast %cst_33 : f32 to vector<8x32xf32>
    %105 = arith.addf %104, %103 : vector<8x32xf32>
    %106 = arith.divf %104, %105 : vector<8x32xf32>
    %107 = vector.extract_strided_slice %100 {offsets = [0, 32], sizes = [8, 32], strides = [1, 1]} : vector<8x128xf32> to vector<8x32xf32>
    %108 = arith.negf %107 : vector<8x32xf32>
    %109 = math.exp %108 : vector<8x32xf32>
    %cst_34 = arith.constant 1.000000e+00 : f32
    %110 = vector.broadcast %cst_34 : f32 to vector<8x32xf32>
    %111 = arith.addf %110, %109 : vector<8x32xf32>
    %112 = arith.divf %110, %111 : vector<8x32xf32>
    %113 = vector.extract_strided_slice %100 {offsets = [0, 64], sizes = [8, 32], strides = [1, 1]} : vector<8x128xf32> to vector<8x32xf32>
    %114 = math.tanh %113 : vector<8x32xf32>
    %115 = vector.extract_strided_slice %100 {offsets = [0, 96], sizes = [8, 32], strides = [1, 1]} : vector<8x128xf32> to vector<8x32xf32>
    %116 = arith.negf %115 : vector<8x32xf32>
    %117 = math.exp %116 : vector<8x32xf32>
    %cst_35 = arith.constant 1.000000e+00 : f32
    %118 = vector.broadcast %cst_35 : f32 to vector<8x32xf32>
    %119 = arith.addf %118, %117 : vector<8x32xf32>
    %120 = arith.divf %118, %119 : vector<8x32xf32>
    %121 = arith.mulf %112, %82 : vector<8x32xf32>
    %122 = arith.mulf %106, %114 : vector<8x32xf32>
    %123 = arith.addf %121, %122 : vector<8x32xf32>
    %124 = math.tanh %123 : vector<8x32xf32>
    %125 = arith.mulf %120, %124 : vector<8x32xf32>
    %c0_36 = arith.constant 0 : index
    %126 = arith.index_cast %95 : i32 to index
    %c0_37 = arith.constant 0 : index
    %127 = vector.load %arg4[%c0_36, %126, %c0_37] : memref<1x64x32xf32, #tpu.memory_space<vmem>>, vector<1x8x32xf32>
    %128 = vector.shape_cast %127 : vector<1x8x32xf32> to vector<8x32xf32>
    %129 = vector.shape_cast %125 : vector<8x32xf32> to vector<1x8x32xf32>
    tpu.vector_store %arg4[%c0_36, %126, %c0_37], %129 {strides = array<i32>} : memref<1x64x32xf32, #tpu.memory_space<vmem>>, vector<1x8x32xf32>,
    %c3_i32 = arith.constant 3 : i32
    %c1_i32_38 = arith.constant 1 : i32
    %130 = arith.subi %c1_i32_38, %arg0 : i32
    %131 = arith.muli %130, %c3_i32 : i32
    %c7_i32_39 = arith.constant 7 : i32
    %132 = arith.subi %c7_i32_39, %c3_i32 : i32
    %133 = arith.muli %arg0, %132 : i32
    %134 = arith.addi %131, %133 : i32
    %c8_i32_40 = arith.constant 8 : i32
    %135 = arith.muli %134, %c8_i32_40 : i32
    %136 = tpu.assume_multiple %135, 8 : i32
    %c0_41 = arith.constant 0 : index
    %137 = arith.index_cast %136 : i32 to index
    %c0_42 = arith.constant 0 : index
    %138 = vector.load %arg2[%c0_41, %137, %c0_42] : memref<1x64x128xf32, #tpu.memory_space<vmem>>, vector<1x8x128xf32>
    %139 = vector.shape_cast %138 : vector<1x8x128xf32> to vector<8x128xf32>
    %cst_43 = arith.constant dense<0.000000e+00> : vector<8x128xf32>
    %140 = tpu.matmul %125, %4, %cst_43 {dimension_numbers = #tpu.dot_dimension_numbers<[1], [0], [0], [1], [0, 0, 1, 1], [], []>} : vector<8x32xf32>, vector<32x128xf32>, vector<8x128xf32> -> vector<8x128xf32>
    %141 = arith.addf %139, %140 : vector<8x128xf32>
    %142 = vector.extract_strided_slice %141 {offsets = [0, 0], sizes = [8, 32], strides = [1, 1]} : vector<8x128xf32> to vector<8x32xf32>
    %143 = arith.negf %142 : vector<8x32xf32>
    %144 = math.exp %143 : vector<8x32xf32>
    %cst_44 = arith.constant 1.000000e+00 : f32
    %145 = vector.broadcast %cst_44 : f32 to vector<8x32xf32>
    %146 = arith.addf %145, %144 : vector<8x32xf32>
    %147 = arith.divf %145, %146 : vector<8x32xf32>
    %148 = vector.extract_strided_slice %141 {offsets = [0, 32], sizes = [8, 32], strides = [1, 1]} : vector<8x128xf32> to vector<8x32xf32>
    %149 = arith.negf %148 : vector<8x32xf32>
    %150 = math.exp %149 : vector<8x32xf32>
    %cst_45 = arith.constant 1.000000e+00 : f32
    %151 = vector.broadcast %cst_45 : f32 to vector<8x32xf32>
    %152 = arith.addf %151, %150 : vector<8x32xf32>
    %153 = arith.divf %151, %152 : vector<8x32xf32>
    %154 = vector.extract_strided_slice %141 {offsets = [0, 64], sizes = [8, 32], strides = [1, 1]} : vector<8x128xf32> to vector<8x32xf32>
    %155 = math.tanh %154 : vector<8x32xf32>
    %156 = vector.extract_strided_slice %141 {offsets = [0, 96], sizes = [8, 32], strides = [1, 1]} : vector<8x128xf32> to vector<8x32xf32>
    %157 = arith.negf %156 : vector<8x32xf32>
    %158 = math.exp %157 : vector<8x32xf32>
    %cst_46 = arith.constant 1.000000e+00 : f32
    %159 = vector.broadcast %cst_46 : f32 to vector<8x32xf32>
    %160 = arith.addf %159, %158 : vector<8x32xf32>
    %161 = arith.divf %159, %160 : vector<8x32xf32>
    %162 = arith.mulf %153, %123 : vector<8x32xf32>
    %163 = arith.mulf %147, %155 : vector<8x32xf32>
    %164 = arith.addf %162, %163 : vector<8x32xf32>
    %165 = math.tanh %164 : vector<8x32xf32>
    %166 = arith.mulf %161, %165 : vector<8x32xf32>
    %c0_47 = arith.constant 0 : index
    %167 = arith.index_cast %136 : i32 to index
    %c0_48 = arith.constant 0 : index
    %168 = vector.load %arg4[%c0_47, %167, %c0_48] : memref<1x64x32xf32, #tpu.memory_space<vmem>>, vector<1x8x32xf32>
    %169 = vector.shape_cast %168 : vector<1x8x32xf32> to vector<8x32xf32>
    %170 = vector.shape_cast %166 : vector<8x32xf32> to vector<1x8x32xf32>
    tpu.vector_store %arg4[%c0_47, %167, %c0_48], %170 {strides = array<i32>} : memref<1x64x32xf32, #tpu.memory_space<vmem>>, vector<1x8x32xf32>,
    %c4_i32 = arith.constant 4 : i32
    %c1_i32_49 = arith.constant 1 : i32
    %171 = arith.subi %c1_i32_49, %arg0 : i32
    %172 = arith.muli %171, %c4_i32 : i32
    %c7_i32_50 = arith.constant 7 : i32
    %173 = arith.subi %c7_i32_50, %c4_i32 : i32
    %174 = arith.muli %arg0, %173 : i32
    %175 = arith.addi %172, %174 : i32
    %c8_i32_51 = arith.constant 8 : i32
    %176 = arith.muli %175, %c8_i32_51 : i32
    %177 = tpu.assume_multiple %176, 8 : i32
    %c0_52 = arith.constant 0 : index
    %178 = arith.index_cast %177 : i32 to index
    %c0_53 = arith.constant 0 : index
    %179 = vector.load %arg2[%c0_52, %178, %c0_53] : memref<1x64x128xf32, #tpu.memory_space<vmem>>, vector<1x8x128xf32>
    %180 = vector.shape_cast %179 : vector<1x8x128xf32> to vector<8x128xf32>
    %cst_54 = arith.constant dense<0.000000e+00> : vector<8x128xf32>
    %181 = tpu.matmul %166, %4, %cst_54 {dimension_numbers = #tpu.dot_dimension_numbers<[1], [0], [0], [1], [0, 0, 1, 1], [], []>} : vector<8x32xf32>, vector<32x128xf32>, vector<8x128xf32> -> vector<8x128xf32>
    %182 = arith.addf %180, %181 : vector<8x128xf32>
    %183 = vector.extract_strided_slice %182 {offsets = [0, 0], sizes = [8, 32], strides = [1, 1]} : vector<8x128xf32> to vector<8x32xf32>
    %184 = arith.negf %183 : vector<8x32xf32>
    %185 = math.exp %184 : vector<8x32xf32>
    %cst_55 = arith.constant 1.000000e+00 : f32
    %186 = vector.broadcast %cst_55 : f32 to vector<8x32xf32>
    %187 = arith.addf %186, %185 : vector<8x32xf32>
    %188 = arith.divf %186, %187 : vector<8x32xf32>
    %189 = vector.extract_strided_slice %182 {offsets = [0, 32], sizes = [8, 32], strides = [1, 1]} : vector<8x128xf32> to vector<8x32xf32>
    %190 = arith.negf %189 : vector<8x32xf32>
    %191 = math.exp %190 : vector<8x32xf32>
    %cst_56 = arith.constant 1.000000e+00 : f32
    %192 = vector.broadcast %cst_56 : f32 to vector<8x32xf32>
    %193 = arith.addf %192, %191 : vector<8x32xf32>
    %194 = arith.divf %192, %193 : vector<8x32xf32>
    %195 = vector.extract_strided_slice %182 {offsets = [0, 64], sizes = [8, 32], strides = [1, 1]} : vector<8x128xf32> to vector<8x32xf32>
    %196 = math.tanh %195 : vector<8x32xf32>
    %197 = vector.extract_strided_slice %182 {offsets = [0, 96], sizes = [8, 32], strides = [1, 1]} : vector<8x128xf32> to vector<8x32xf32>
    %198 = arith.negf %197 : vector<8x32xf32>
    %199 = math.exp %198 : vector<8x32xf32>
    %cst_57 = arith.constant 1.000000e+00 : f32
    %200 = vector.broadcast %cst_57 : f32 to vector<8x32xf32>
    %201 = arith.addf %200, %199 : vector<8x32xf32>
    %202 = arith.divf %200, %201 : vector<8x32xf32>
    %203 = arith.mulf %194, %164 : vector<8x32xf32>
    %204 = arith.mulf %188, %196 : vector<8x32xf32>
    %205 = arith.addf %203, %204 : vector<8x32xf32>
    %206 = math.tanh %205 : vector<8x32xf32>
    %207 = arith.mulf %202, %206 : vector<8x32xf32>
    %c0_58 = arith.constant 0 : index
    %208 = arith.index_cast %177 : i32 to index
    %c0_59 = arith.constant 0 : index
    %209 = vector.load %arg4[%c0_58, %208, %c0_59] : memref<1x64x32xf32, #tpu.memory_space<vmem>>, vector<1x8x32xf32>
    %210 = vector.shape_cast %209 : vector<1x8x32xf32> to vector<8x32xf32>
    %211 = vector.shape_cast %207 : vector<8x32xf32> to vector<1x8x32xf32>
    tpu.vector_store %arg4[%c0_58, %208, %c0_59], %211 {strides = array<i32>} : memref<1x64x32xf32, #tpu.memory_space<vmem>>, vector<1x8x32xf32>,
    %c5_i32 = arith.constant 5 : i32
    %c1_i32_60 = arith.constant 1 : i32
    %212 = arith.subi %c1_i32_60, %arg0 : i32
    %213 = arith.muli %212, %c5_i32 : i32
    %c7_i32_61 = arith.constant 7 : i32
    %214 = arith.subi %c7_i32_61, %c5_i32 : i32
    %215 = arith.muli %arg0, %214 : i32
    %216 = arith.addi %213, %215 : i32
    %c8_i32_62 = arith.constant 8 : i32
    %217 = arith.muli %216, %c8_i32_62 : i32
    %218 = tpu.assume_multiple %217, 8 : i32
    %c0_63 = arith.constant 0 : index
    %219 = arith.index_cast %218 : i32 to index
    %c0_64 = arith.constant 0 : index
    %220 = vector.load %arg2[%c0_63, %219, %c0_64] : memref<1x64x128xf32, #tpu.memory_space<vmem>>, vector<1x8x128xf32>
    %221 = vector.shape_cast %220 : vector<1x8x128xf32> to vector<8x128xf32>
    %cst_65 = arith.constant dense<0.000000e+00> : vector<8x128xf32>
    %222 = tpu.matmul %207, %4, %cst_65 {dimension_numbers = #tpu.dot_dimension_numbers<[1], [0], [0], [1], [0, 0, 1, 1], [], []>} : vector<8x32xf32>, vector<32x128xf32>, vector<8x128xf32> -> vector<8x128xf32>
    %223 = arith.addf %221, %222 : vector<8x128xf32>
    %224 = vector.extract_strided_slice %223 {offsets = [0, 0], sizes = [8, 32], strides = [1, 1]} : vector<8x128xf32> to vector<8x32xf32>
    %225 = arith.negf %224 : vector<8x32xf32>
    %226 = math.exp %225 : vector<8x32xf32>
    %cst_66 = arith.constant 1.000000e+00 : f32
    %227 = vector.broadcast %cst_66 : f32 to vector<8x32xf32>
    %228 = arith.addf %227, %226 : vector<8x32xf32>
    %229 = arith.divf %227, %228 : vector<8x32xf32>
    %230 = vector.extract_strided_slice %223 {offsets = [0, 32], sizes = [8, 32], strides = [1, 1]} : vector<8x128xf32> to vector<8x32xf32>
    %231 = arith.negf %230 : vector<8x32xf32>
    %232 = math.exp %231 : vector<8x32xf32>
    %cst_67 = arith.constant 1.000000e+00 : f32
    %233 = vector.broadcast %cst_67 : f32 to vector<8x32xf32>
    %234 = arith.addf %233, %232 : vector<8x32xf32>
    %235 = arith.divf %233, %234 : vector<8x32xf32>
    %236 = vector.extract_strided_slice %223 {offsets = [0, 64], sizes = [8, 32], strides = [1, 1]} : vector<8x128xf32> to vector<8x32xf32>
    %237 = math.tanh %236 : vector<8x32xf32>
    %238 = vector.extract_strided_slice %223 {offsets = [0, 96], sizes = [8, 32], strides = [1, 1]} : vector<8x128xf32> to vector<8x32xf32>
    %239 = arith.negf %238 : vector<8x32xf32>
    %240 = math.exp %239 : vector<8x32xf32>
    %cst_68 = arith.constant 1.000000e+00 : f32
    %241 = vector.broadcast %cst_68 : f32 to vector<8x32xf32>
    %242 = arith.addf %241, %240 : vector<8x32xf32>
    %243 = arith.divf %241, %242 : vector<8x32xf32>
    %244 = arith.mulf %235, %205 : vector<8x32xf32>
    %245 = arith.mulf %229, %237 : vector<8x32xf32>
    %246 = arith.addf %244, %245 : vector<8x32xf32>
    %247 = math.tanh %246 : vector<8x32xf32>
    %248 = arith.mulf %243, %247 : vector<8x32xf32>
    %c0_69 = arith.constant 0 : index
    %249 = arith.index_cast %218 : i32 to index
    %c0_70 = arith.constant 0 : index
    %250 = vector.load %arg4[%c0_69, %249, %c0_70] : memref<1x64x32xf32, #tpu.memory_space<vmem>>, vector<1x8x32xf32>
    %251 = vector.shape_cast %250 : vector<1x8x32xf32> to vector<8x32xf32>
    %252 = vector.shape_cast %248 : vector<8x32xf32> to vector<1x8x32xf32>
    tpu.vector_store %arg4[%c0_69, %249, %c0_70], %252 {strides = array<i32>} : memref<1x64x32xf32, #tpu.memory_space<vmem>>, vector<1x8x32xf32>,
    %c6_i32 = arith.constant 6 : i32
    %c1_i32_71 = arith.constant 1 : i32
    %253 = arith.subi %c1_i32_71, %arg0 : i32
    %254 = arith.muli %253, %c6_i32 : i32
    %c7_i32_72 = arith.constant 7 : i32
    %255 = arith.subi %c7_i32_72, %c6_i32 : i32
    %256 = arith.muli %arg0, %255 : i32
    %257 = arith.addi %254, %256 : i32
    %c8_i32_73 = arith.constant 8 : i32
    %258 = arith.muli %257, %c8_i32_73 : i32
    %259 = tpu.assume_multiple %258, 8 : i32
    %c0_74 = arith.constant 0 : index
    %260 = arith.index_cast %259 : i32 to index
    %c0_75 = arith.constant 0 : index
    %261 = vector.load %arg2[%c0_74, %260, %c0_75] : memref<1x64x128xf32, #tpu.memory_space<vmem>>, vector<1x8x128xf32>
    %262 = vector.shape_cast %261 : vector<1x8x128xf32> to vector<8x128xf32>
    %cst_76 = arith.constant dense<0.000000e+00> : vector<8x128xf32>
    %263 = tpu.matmul %248, %4, %cst_76 {dimension_numbers = #tpu.dot_dimension_numbers<[1], [0], [0], [1], [0, 0, 1, 1], [], []>} : vector<8x32xf32>, vector<32x128xf32>, vector<8x128xf32> -> vector<8x128xf32>
    %264 = arith.addf %262, %263 : vector<8x128xf32>
    %265 = vector.extract_strided_slice %264 {offsets = [0, 0], sizes = [8, 32], strides = [1, 1]} : vector<8x128xf32> to vector<8x32xf32>
    %266 = arith.negf %265 : vector<8x32xf32>
    %267 = math.exp %266 : vector<8x32xf32>
    %cst_77 = arith.constant 1.000000e+00 : f32
    %268 = vector.broadcast %cst_77 : f32 to vector<8x32xf32>
    %269 = arith.addf %268, %267 : vector<8x32xf32>
    %270 = arith.divf %268, %269 : vector<8x32xf32>
    %271 = vector.extract_strided_slice %264 {offsets = [0, 32], sizes = [8, 32], strides = [1, 1]} : vector<8x128xf32> to vector<8x32xf32>
    %272 = arith.negf %271 : vector<8x32xf32>
    %273 = math.exp %272 : vector<8x32xf32>
    %cst_78 = arith.constant 1.000000e+00 : f32
    %274 = vector.broadcast %cst_78 : f32 to vector<8x32xf32>
    %275 = arith.addf %274, %273 : vector<8x32xf32>
    %276 = arith.divf %274, %275 : vector<8x32xf32>
    %277 = vector.extract_strided_slice %264 {offsets = [0, 64], sizes = [8, 32], strides = [1, 1]} : vector<8x128xf32> to vector<8x32xf32>
    %278 = math.tanh %277 : vector<8x32xf32>
    %279 = vector.extract_strided_slice %264 {offsets = [0, 96], sizes = [8, 32], strides = [1, 1]} : vector<8x128xf32> to vector<8x32xf32>
    %280 = arith.negf %279 : vector<8x32xf32>
    %281 = math.exp %280 : vector<8x32xf32>
    %cst_79 = arith.constant 1.000000e+00 : f32
    %282 = vector.broadcast %cst_79 : f32 to vector<8x32xf32>
    %283 = arith.addf %282, %281 : vector<8x32xf32>
    %284 = arith.divf %282, %283 : vector<8x32xf32>
    %285 = arith.mulf %276, %246 : vector<8x32xf32>
    %286 = arith.mulf %270, %278 : vector<8x32xf32>
    %287 = arith.addf %285, %286 : vector<8x32xf32>
    %288 = math.tanh %287 : vector<8x32xf32>
    %289 = arith.mulf %284, %288 : vector<8x32xf32>
    %c0_80 = arith.constant 0 : index
    %290 = arith.index_cast %259 : i32 to index
    %c0_81 = arith.constant 0 : index
    %291 = vector.load %arg4[%c0_80, %290, %c0_81] : memref<1x64x32xf32, #tpu.memory_space<vmem>>, vector<1x8x32xf32>
    %292 = vector.shape_cast %291 : vector<1x8x32xf32> to vector<8x32xf32>
    %293 = vector.shape_cast %289 : vector<8x32xf32> to vector<1x8x32xf32>
    tpu.vector_store %arg4[%c0_80, %290, %c0_81], %293 {strides = array<i32>} : memref<1x64x32xf32, #tpu.memory_space<vmem>>, vector<1x8x32xf32>,
    %c7_i32_82 = arith.constant 7 : i32
    %c1_i32_83 = arith.constant 1 : i32
    %294 = arith.subi %c1_i32_83, %arg0 : i32
    %295 = arith.muli %294, %c7_i32_82 : i32
    %c7_i32_84 = arith.constant 7 : i32
    %296 = arith.subi %c7_i32_84, %c7_i32_82 : i32
    %297 = arith.muli %arg0, %296 : i32
    %298 = arith.addi %295, %297 : i32
    %c8_i32_85 = arith.constant 8 : i32
    %299 = arith.muli %298, %c8_i32_85 : i32
    %300 = tpu.assume_multiple %299, 8 : i32
    %c0_86 = arith.constant 0 : index
    %301 = arith.index_cast %300 : i32 to index
    %c0_87 = arith.constant 0 : index
    %302 = vector.load %arg2[%c0_86, %301, %c0_87] : memref<1x64x128xf32, #tpu.memory_space<vmem>>, vector<1x8x128xf32>
    %303 = vector.shape_cast %302 : vector<1x8x128xf32> to vector<8x128xf32>
    %cst_88 = arith.constant dense<0.000000e+00> : vector<8x128xf32>
    %304 = tpu.matmul %289, %4, %cst_88 {dimension_numbers = #tpu.dot_dimension_numbers<[1], [0], [0], [1], [0, 0, 1, 1], [], []>} : vector<8x32xf32>, vector<32x128xf32>, vector<8x128xf32> -> vector<8x128xf32>
    %305 = arith.addf %303, %304 : vector<8x128xf32>
    %306 = vector.extract_strided_slice %305 {offsets = [0, 0], sizes = [8, 32], strides = [1, 1]} : vector<8x128xf32> to vector<8x32xf32>
    %307 = arith.negf %306 : vector<8x32xf32>
    %308 = math.exp %307 : vector<8x32xf32>
    %cst_89 = arith.constant 1.000000e+00 : f32
    %309 = vector.broadcast %cst_89 : f32 to vector<8x32xf32>
    %310 = arith.addf %309, %308 : vector<8x32xf32>
    %311 = arith.divf %309, %310 : vector<8x32xf32>
    %312 = vector.extract_strided_slice %305 {offsets = [0, 32], sizes = [8, 32], strides = [1, 1]} : vector<8x128xf32> to vector<8x32xf32>
    %313 = arith.negf %312 : vector<8x32xf32>
    %314 = math.exp %313 : vector<8x32xf32>
    %cst_90 = arith.constant 1.000000e+00 : f32
    %315 = vector.broadcast %cst_90 : f32 to vector<8x32xf32>
    %316 = arith.addf %315, %314 : vector<8x32xf32>
    %317 = arith.divf %315, %316 : vector<8x32xf32>
    %318 = vector.extract_strided_slice %305 {offsets = [0, 64], sizes = [8, 32], strides = [1, 1]} : vector<8x128xf32> to vector<8x32xf32>
    %319 = math.tanh %318 : vector<8x32xf32>
    %320 = vector.extract_strided_slice %305 {offsets = [0, 96], sizes = [8, 32], strides = [1, 1]} : vector<8x128xf32> to vector<8x32xf32>
    %321 = arith.negf %320 : vector<8x32xf32>
    %322 = math.exp %321 : vector<8x32xf32>
    %cst_91 = arith.constant 1.000000e+00 : f32
    %323 = vector.broadcast %cst_91 : f32 to vector<8x32xf32>
    %324 = arith.addf %323, %322 : vector<8x32xf32>
    %325 = arith.divf %323, %324 : vector<8x32xf32>
    %326 = arith.mulf %317, %287 : vector<8x32xf32>
    %327 = arith.mulf %311, %319 : vector<8x32xf32>
    %328 = arith.addf %326, %327 : vector<8x32xf32>
    %329 = math.tanh %328 : vector<8x32xf32>
    %330 = arith.mulf %325, %329 : vector<8x32xf32>
    %c0_92 = arith.constant 0 : index
    %331 = arith.index_cast %300 : i32 to index
    %c0_93 = arith.constant 0 : index
    %332 = vector.load %arg4[%c0_92, %331, %c0_93] : memref<1x64x32xf32, #tpu.memory_space<vmem>>, vector<1x8x32xf32>
    %333 = vector.shape_cast %332 : vector<1x8x32xf32> to vector<8x32xf32>
    %334 = vector.shape_cast %330 : vector<8x32xf32> to vector<1x8x32xf32>
    tpu.vector_store %arg4[%c0_92, %331, %c0_93], %334 {strides = array<i32>} : memref<1x64x32xf32, #tpu.memory_space<vmem>>, vector<1x8x32xf32>,
    %c8_i32_94 = arith.constant 8 : i32
    %c0_95 = arith.constant 0 : index
    %c0_96 = arith.constant 0 : index
    %335 = vector.load %arg5[%c0_95, %c0_96] : memref<8x32xf32, #tpu.memory_space<vmem>>, vector<8x32xf32>
    tpu.vector_store %arg5[%c0_95, %c0_96], %330 {strides = array<i32>} : memref<8x32xf32, #tpu.memory_space<vmem>>, vector<8x32xf32>,
    %c0_97 = arith.constant 0 : index
    %c0_98 = arith.constant 0 : index
    %336 = vector.load %arg6[%c0_97, %c0_98] : memref<8x32xf32, #tpu.memory_space<vmem>>, vector<8x32xf32>
    tpu.vector_store %arg6[%c0_97, %c0_98], %328 {strides = array<i32>} : memref<8x32xf32, #tpu.memory_space<vmem>>, vector<8x32xf32>,
    return
  }
  func.func @transform_0(%arg0: i32, %arg1: i32) -> (i32, i32, i32) {
    %c1_i32 = arith.constant 1 : i32
    %0 = arith.subi %c1_i32, %arg0 : i32
    %1 = arith.muli %0, %arg1 : i32
    %c0_i32 = arith.constant 0 : i32
    %2 = arith.subi %c0_i32, %arg1 : i32
    %3 = arith.muli %arg0, %2 : i32
    %4 = arith.addi %1, %3 : i32
    %c0_i32_0 = arith.constant 0 : i32
    %c0_i32_1 = arith.constant 0 : i32
    return %arg0, %4, %c0_i32_0 : i32, i32, i32
  }
  func.func @transform_1(%arg0: i32, %arg1: i32) -> (i32, i32, i32) {
    %c0_i32 = arith.constant 0 : i32
    %c0_i32_0 = arith.constant 0 : i32
    %c0_i32_1 = arith.constant 0 : i32
    return %arg0, %c0_i32, %c0_i32_0 : i32, i32, i32
  }
  func.func @transform_2(%arg0: i32, %arg1: i32) -> (i32, i32, i32) {
    %c1_i32 = arith.constant 1 : i32
    %0 = arith.subi %c1_i32, %arg0 : i32
    %1 = arith.muli %0, %arg1 : i32
    %c0_i32 = arith.constant 0 : i32
    %2 = arith.subi %c0_i32, %arg1 : i32
    %3 = arith.muli %arg0, %2 : i32
    %4 = arith.addi %1, %3 : i32
    %c0_i32_0 = arith.constant 0 : i32
    %c0_i32_1 = arith.constant 0 : i32
    return %arg0, %4, %c0_i32_0 : i32, i32, i32
  }
}

module attributes {stable_mosaic.version = 11 : i64} {
  func.func @_linear_kernel(%arg0: i32, %arg1: memref<8x32xf32, #tpu.memory_space<vmem>>, %arg2: memref<8x32xf32, #tpu.memory_space<vmem>>, %arg3: memref<32x128xf32, #tpu.memory_space<vmem>>, %arg4: memref<32x128xf32, #tpu.memory_space<vmem>>, %arg5: memref<1x128xf32, #tpu.memory_space<vmem>>, %arg6: memref<8x128xf32, #tpu.memory_space<vmem>>) attributes {dimension_semantics = [#tpu.dimension_semantics<arbitrary>], iteration_bounds = array<i64: 1>, scalar_prefetch = 0 : i64, scratch_operands = 0 : i64, tpu.core_type = #tpu.core_type<tc>, window_params = [{pipeline_mode = #tpu.pipeline_mode<synchronous>, transform_indices = @transform_0, window_bounds = array<i64: 8, 32>}, {pipeline_mode = #tpu.pipeline_mode<synchronous>, transform_indices = @transform_1, window_bounds = array<i64: 8, 32>}, {pipeline_mode = #tpu.pipeline_mode<synchronous>, transform_indices = @transform_2, window_bounds = array<i64: 32, 128>}, {pipeline_mode = #tpu.pipeline_mode<synchronous>, transform_indices = @transform_3, window_bounds = array<i64: 32, 128>}, {pipeline_mode = #tpu.pipeline_mode<synchronous>, transform_indices = @transform_4, window_bounds = array<i64: 1, 128>}, {pipeline_mode = #tpu.pipeline_mode<synchronous>, transform_indices = @transform_5, window_bounds = array<i64: 8, 128>}]} {
    %c0 = arith.constant 0 : index
    %c0_0 = arith.constant 0 : index
    %0 = vector.load %arg1[%c0, %c0_0] : memref<8x32xf32, #tpu.memory_space<vmem>>, vector<8x32xf32>
    %c0_1 = arith.constant 0 : index
    %c0_2 = arith.constant 0 : index
    %1 = vector.load %arg3[%c0_1, %c0_2] : memref<32x128xf32, #tpu.memory_space<vmem>>, vector<32x128xf32>
    %cst = arith.constant dense<0.000000e+00> : vector<8x128xf32>
    %2 = tpu.matmul %0, %1, %cst {dimension_numbers = #tpu.dot_dimension_numbers<[1], [0], [0], [1], [0, 0, 1, 1], [], []>} : vector<8x32xf32>, vector<32x128xf32>, vector<8x128xf32> -> vector<8x128xf32>
    %c0_3 = arith.constant 0 : index
    %c0_4 = arith.constant 0 : index
    %3 = vector.load %arg2[%c0_3, %c0_4] : memref<8x32xf32, #tpu.memory_space<vmem>>, vector<8x32xf32>
    %c0_5 = arith.constant 0 : index
    %c0_6 = arith.constant 0 : index
    %4 = vector.load %arg4[%c0_5, %c0_6] : memref<32x128xf32, #tpu.memory_space<vmem>>, vector<32x128xf32>
    %cst_7 = arith.constant dense<0.000000e+00> : vector<8x128xf32>
    %5 = tpu.matmul %3, %4, %cst_7 {dimension_numbers = #tpu.dot_dimension_numbers<[1], [0], [0], [1], [0, 0, 1, 1], [], []>} : vector<8x32xf32>, vector<32x128xf32>, vector<8x128xf32> -> vector<8x128xf32>
    %6 = arith.addf %2, %5 : vector<8x128xf32>
    %c0_8 = arith.constant 0 : index
    %c0_9 = arith.constant 0 : index
    %7 = vector.load %arg5[%c0_8, %c0_9] : memref<1x128xf32, #tpu.memory_space<vmem>>, vector<1x128xf32>
    %8 = vector.broadcast %7 : vector<1x128xf32> to vector<8x128xf32>
    %9 = arith.addf %6, %8 : vector<8x128xf32>
    %c0_10 = arith.constant 0 : index
    %c0_11 = arith.constant 0 : index
    %10 = vector.load %arg6[%c0_10, %c0_11] : memref<8x128xf32, #tpu.memory_space<vmem>>, vector<8x128xf32>
    tpu.vector_store %arg6[%c0_10, %c0_11], %9 {strides = array<i32>} : memref<8x128xf32, #tpu.memory_space<vmem>>, vector<8x128xf32>,
    return
  }
  func.func @transform_0(%arg0: i32) -> (i32, i32) {
    %c0_i32 = arith.constant 0 : i32
    %c0_i32_0 = arith.constant 0 : i32
    %c0_i32_1 = arith.constant 0 : i32
    return %c0_i32, %c0_i32_0 : i32, i32
  }
  func.func @transform_1(%arg0: i32) -> (i32, i32) {
    %c0_i32 = arith.constant 0 : i32
    %c0_i32_0 = arith.constant 0 : i32
    %c0_i32_1 = arith.constant 0 : i32
    return %c0_i32, %c0_i32_0 : i32, i32
  }
  func.func @transform_2(%arg0: i32) -> (i32, i32) {
    %c0_i32 = arith.constant 0 : i32
    %c0_i32_0 = arith.constant 0 : i32
    %c0_i32_1 = arith.constant 0 : i32
    return %c0_i32, %c0_i32_0 : i32, i32
  }
  func.func @transform_3(%arg0: i32) -> (i32, i32) {
    %c0_i32 = arith.constant 0 : i32
    %c0_i32_0 = arith.constant 0 : i32
    %c0_i32_1 = arith.constant 0 : i32
    return %c0_i32, %c0_i32_0 : i32, i32
  }
  func.func @transform_4(%arg0: i32) -> (i32, i32) {
    %c0_i32 = arith.constant 0 : i32
    %c0_i32_0 = arith.constant 0 : i32
    %c0_i32_1 = arith.constant 0 : i32
    return %c0_i32, %c0_i32_0 : i32, i32
  }
  func.func @transform_5(%arg0: i32) -> (i32, i32) {
    %c0_i32 = arith.constant 0 : i32
    %c0_i32_0 = arith.constant 0 : i32
    %c0_i32_1 = arith.constant 0 : i32
    return %c0_i32, %c0_i32_0 : i32, i32
  }
}

module attributes {stable_mosaic.version = 11 : i64} {
  func.func @_pregates_kernel(%arg0: i32, %arg1: memref<2x64x32xf32, #tpu.memory_space<vmem>>, %arg2: memref<1x2x32x128xf32, #tpu.memory_space<vmem>>, %arg3: memref<1x1x128xf32, #tpu.memory_space<vmem>>, %arg4: memref<1x64x128xf32, #tpu.memory_space<vmem>>) attributes {dimension_semantics = [#tpu.dimension_semantics<parallel>], iteration_bounds = array<i64: 2>, scalar_prefetch = 0 : i64, scratch_operands = 0 : i64, tpu.core_type = #tpu.core_type<tc>, window_params = [{pipeline_mode = #tpu.pipeline_mode<synchronous>, transform_indices = @transform_0, window_bounds = array<i64: 2, 64, 32>}, {transform_indices = @transform_1, window_bounds = array<i64: 1, 2, 32, 128>}, {transform_indices = @transform_2, window_bounds = array<i64: 1, 1, 128>}, {transform_indices = @transform_3, window_bounds = array<i64: 1, 64, 128>}]} {
    %c0 = arith.constant 0 : index
    %c0_0 = arith.constant 0 : index
    %c0_1 = arith.constant 0 : index
    %0 = vector.load %arg1[%c0, %c0_0, %c0_1] : memref<2x64x32xf32, #tpu.memory_space<vmem>>, vector<1x64x32xf32>
    %1 = vector.shape_cast %0 : vector<1x64x32xf32> to vector<64x32xf32>
    %c0_2 = arith.constant 0 : index
    %c0_3 = arith.constant 0 : index
    %c0_4 = arith.constant 0 : index
    %c0_5 = arith.constant 0 : index
    %2 = vector.load %arg2[%c0_2, %c0_3, %c0_4, %c0_5] : memref<1x2x32x128xf32, #tpu.memory_space<vmem>>, vector<1x1x32x128xf32>
    %3 = vector.shape_cast %2 : vector<1x1x32x128xf32> to vector<32x128xf32>
    %cst = arith.constant dense<0.000000e+00> : vector<64x128xf32>
    %4 = tpu.matmul %1, %3, %cst {dimension_numbers = #tpu.dot_dimension_numbers<[1], [0], [0], [1], [0, 0, 1, 1], [], []>} : vector<64x32xf32>, vector<32x128xf32>, vector<64x128xf32> -> vector<64x128xf32>
    %c1 = arith.constant 1 : index
    %c0_6 = arith.constant 0 : index
    %c0_7 = arith.constant 0 : index
    %5 = vector.load %arg1[%c1, %c0_6, %c0_7] : memref<2x64x32xf32, #tpu.memory_space<vmem>>, vector<1x64x32xf32>
    %6 = vector.shape_cast %5 : vector<1x64x32xf32> to vector<64x32xf32>
    %c0_8 = arith.constant 0 : index
    %c1_9 = arith.constant 1 : index
    %c0_10 = arith.constant 0 : index
    %c0_11 = arith.constant 0 : index
    %7 = vector.load %arg2[%c0_8, %c1_9, %c0_10, %c0_11] : memref<1x2x32x128xf32, #tpu.memory_space<vmem>>, vector<1x1x32x128xf32>
    %8 = vector.shape_cast %7 : vector<1x1x32x128xf32> to vector<32x128xf32>
    %cst_12 = arith.constant dense<0.000000e+00> : vector<64x128xf32>
    %9 = tpu.matmul %6, %8, %cst_12 {dimension_numbers = #tpu.dot_dimension_numbers<[1], [0], [0], [1], [0, 0, 1, 1], [], []>} : vector<64x32xf32>, vector<32x128xf32>, vector<64x128xf32> -> vector<64x128xf32>
    %10 = arith.addf %4, %9 : vector<64x128xf32>
    %c0_13 = arith.constant 0 : index
    %c0_14 = arith.constant 0 : index
    %c0_15 = arith.constant 0 : index
    %11 = vector.load %arg3[%c0_13, %c0_14, %c0_15] : memref<1x1x128xf32, #tpu.memory_space<vmem>>, vector<1x1x128xf32>
    %12 = vector.shape_cast %11 : vector<1x1x128xf32> to vector<1x128xf32>
    %13 = vector.broadcast %12 : vector<1x128xf32> to vector<64x128xf32>
    %14 = arith.addf %10, %13 : vector<64x128xf32>
    %c0_16 = arith.constant 0 : index
    %c0_17 = arith.constant 0 : index
    %c0_18 = arith.constant 0 : index
    %15 = vector.load %arg4[%c0_16, %c0_17, %c0_18] : memref<1x64x128xf32, #tpu.memory_space<vmem>>, vector<1x64x128xf32>
    %16 = vector.shape_cast %15 : vector<1x64x128xf32> to vector<64x128xf32>
    %17 = vector.shape_cast %14 : vector<64x128xf32> to vector<1x64x128xf32>
    tpu.vector_store %arg4[%c0_16, %c0_17, %c0_18], %17 {strides = array<i32>} : memref<1x64x128xf32, #tpu.memory_space<vmem>>, vector<1x64x128xf32>,
    return
  }
  func.func @transform_0(%arg0: i32) -> (i32, i32, i32) {
    %c0_i32 = arith.constant 0 : i32
    %c0_i32_0 = arith.constant 0 : i32
    %c0_i32_1 = arith.constant 0 : i32
    %c0_i32_2 = arith.constant 0 : i32
    return %c0_i32, %c0_i32_0, %c0_i32_1 : i32, i32, i32
  }
  func.func @transform_1(%arg0: i32) -> (i32, i32, i32, i32) {
    %c0_i32 = arith.constant 0 : i32
    %c0_i32_0 = arith.constant 0 : i32
    %c0_i32_1 = arith.constant 0 : i32
    %c0_i32_2 = arith.constant 0 : i32
    return %arg0, %c0_i32, %c0_i32_0, %c0_i32_1 : i32, i32, i32, i32
  }
  func.func @transform_2(%arg0: i32) -> (i32, i32, i32) {
    %c0_i32 = arith.constant 0 : i32
    %c0_i32_0 = arith.constant 0 : i32
    %c0_i32_1 = arith.constant 0 : i32
    return %arg0, %c0_i32, %c0_i32_0 : i32, i32, i32
  }
  func.func @transform_3(%arg0: i32) -> (i32, i32, i32) {
    %c0_i32 = arith.constant 0 : i32
    %c0_i32_0 = arith.constant 0 : i32
    %c0_i32_1 = arith.constant 0 : i32
    return %arg0, %c0_i32, %c0_i32_0 : i32, i32, i32
  }
}

</mosaic_0001>

<llo_original>
// kernel: simple_lstm_forward.5
$region0: #{simple_lstm_forward.5}
  #allocation0 [shape = 'u32[]', space=smem, size = 0x4, offset = 0x4, fixed_abs, tag = 'smem constant byte address 0x4 - core index']
  #allocation1 [shape = 'u32[144,128]{1,0:T(1,128)}', space=vmem, size = 0x12000, scoped, tag = 'internal scratch']
  %s0 = inlined_call_operand.vmem [shape: f32[1,64,16], index: 0, kind: input, shape index: {}]
  %s1 = inlined_call_operand.vmem [shape: f32[2,1,16,128], index: 1, kind: input, shape index: {}]
  %s2 = inlined_call_operand.vmem [shape: f32[2,1,128], index: 2, kind: input, shape index: {}]
  %s3 = inlined_call_operand.vmem [shape: f32[2,64,128], index: 3, kind: output, shape index: {}]
  %s4 = sld [smem:[#allocation0]]
  $region45: #{simple_lstm_forward.5} parent=0
    _
  %s6 = ssub.s32 1, %s4
  %s7 = scalar_select 0, %s6, %s4
  loop: start=0, step=1, limit=4
  $region2: #{simple_lstm_forward.5} parent=0 // loop_pre_header
    _
  $region3: #{simple_lstm_forward.5} parent=0 // loop_header
    %s9 = sphi 0, %s13
    %p10 = scmp.ge.s32.totalorder %s9, 4
    %s17 = sphi 0, %s17
    %s19 = sphi 0, %s17
    %s20 = sphi 0, %s19
    %s34 = sphi 0, %s20
    %s40 = sphi 0, %s42
    %s43 = sphi 0, %s40
    %s44 = sphi 0, %s43
    %s60 = sphi 0, %s44
    %s66 = sphi 0, %s68
    %s69 = sphi 0, %s66
    %s70 = sphi 0, %s69
    %s86 = sphi 0, %s70
    %s92 = sphi 0, %s94
    %s95 = sphi 0, %s92
    %s96 = sphi 0, %s95
    %s112 = sphi 0, %s96
  $region4: #{simple_lstm_forward.5} parent=0 // loop_header_branch
    %12 = sbr.rel (%p10) target = $region8
  $region5: #{simple_lstm_forward.5} parent=0 // loop_body
    %s14 = ssub.s32 %s9, 1
    %s15 = ssub.s32 %s9, 2
    %s16 = sadd.s32 %s9, 1
    %s18 = sadd.s32 %s17, 1
    %p21 = scmp.eq.s32.totalorder %s9, 1
    %p22 = scmp.ne.s32.totalorder %s17, %s19
    %p23 = scmp.eq.s32.totalorder %s9, 0
    %p24 = por %p22, %p23
    %p25 = scmp.ne.s32.totalorder %s17, %s19
    %p26 = scmp.eq.s32.totalorder %s14, 1
    %p27 = por %p25, %p26
    %p28 = scmp.ne.s32.totalorder %s19, %s20
    %p29 = scmp.eq.s32.totalorder %s14, 0
    %p30 = por %p28, %p29
    %p31 = scmp.ne.s32.totalorder %s19, %s20
    %p32 = scmp.eq.s32.totalorder %s15, 1
    %p33 = por %p31, %p32
    %p35 = scmp.ne.s32.totalorder %s20, %s34
    %p36 = scmp.eq.s32.totalorder %s15, 0
    %p37 = por %p35, %p36
    %s38 = ssub.s32 %s9, %s16
    %p39 = scmp.eq.s32.totalorder %s38, 0
    %s41 = sadd.s32 %s40, 1
    %s42 = scalar_select %p39, %s40, %s41
    %p45 = pneg %p39
    %p46 = scmp.eq.s32.totalorder %s9, 1
    %p47 = por %p45, %p46
    %p48 = scmp.ne.s32.totalorder %s40, %s43
    %p49 = scmp.eq.s32.totalorder %s9, 0
    %p50 = por %p48, %p49
    %p51 = scmp.ne.s32.totalorder %s40, %s43
    %p52 = scmp.eq.s32.totalorder %s14, 1
    %p53 = por %p51, %p52
    %p54 = scmp.ne.s32.totalorder %s43, %s44
    %p55 = scmp.eq.s32.totalorder %s14, 0
    %p56 = por %p54, %p55
    %p57 = scmp.ne.s32.totalorder %s43, %s44
    %p58 = scmp.eq.s32.totalorder %s15, 1
    %p59 = por %p57, %p58
    %p61 = scmp.ne.s32.totalorder %s44, %s60
    %p62 = scmp.eq.s32.totalorder %s15, 0
    %p63 = por %p61, %p62
    %s64 = ssub.s32 %s9, %s16
    %p65 = scmp.eq.s32.totalorder %s64, 0
    %s67 = sadd.s32 %s66, 1
    %s68 = scalar_select %p65, %s66, %s67
    %p71 = pneg %p65
    %p72 = scmp.eq.s32.totalorder %s9, 1
    %p73 = por %p71, %p72
    %p74 = scmp.ne.s32.totalorder %s66, %s69
    %p75 = scmp.eq.s32.totalorder %s9, 0
    %p76 = por %p74, %p75
    %p77 = scmp.ne.s32.totalorder %s66, %s69
    %p78 = scmp.eq.s32.totalorder %s14, 1
    %p79 = por %p77, %p78
    %p80 = scmp.ne.s32.totalorder %s69, %s70
    %p81 = scmp.eq.s32.totalorder %s14, 0
    %p82 = por %p80, %p81
    %p83 = scmp.ne.s32.totalorder %s69, %s70
    %p84 = scmp.eq.s32.totalorder %s15, 1
    %p85 = por %p83, %p84
    %p87 = scmp.ne.s32.totalorder %s70, %s86
    %p88 = scmp.eq.s32.totalorder %s15, 0
    %p89 = por %p87, %p88
    %s90 = ssub.s32 %s9, %s16
    %p91 = scmp.eq.s32.totalorder %s90, 0
    %s93 = sadd.s32 %s92, 1
    %s94 = scalar_select %p91, %s92, %s93
    %p97 = pneg %p91
    %p98 = scmp.eq.s32.totalorder %s9, 1
    %p99 = por %p97, %p98
    %p100 = scmp.ne.s32.totalorder %s92, %s95
    %p101 = scmp.eq.s32.totalorder %s9, 0
    %p102 = por %p100, %p101
    %p103 = scmp.ne.s32.totalorder %s92, %s95
    %p104 = scmp.eq.s32.totalorder %s14, 1
    %p105 = por %p103, %p104
    %p106 = scmp.ne.s32.totalorder %s95, %s96
    %p107 = scmp.eq.s32.totalorder %s14, 0
    %p108 = por %p106, %p107
    %p109 = scmp.ne.s32.totalorder %s95, %s96
    %p110 = scmp.eq.s32.totalorder %s15, 1
    %p111 = por %p109, %p110
    %p113 = scmp.ne.s32.totalorder %s96, %s112
    %p114 = scmp.eq.s32.totalorder %s15, 0
    %p115 = por %p113, %p114
    %p116 = scmp.le.s32.totalorder 1, %s9
    %p117 = scmp.lt.s32.totalorder %s9, 3
    %p118 = pnand %p116, %p117
    %p119 = pneg %p118
    // Predicated region
    $region9: #{simple_lstm_forward.5} parent=5 // pred_check
      _
    $region10: #{simple_lstm_forward.5} parent=5 // pred_check_branch
      %121 = sbr.rel (%p118) target = $region12
    $region11: #{simple_lstm_forward.5} parent=5 // pred_region
      %s122 = ssub.s32 %s9, 1
      // Predicated region
      $region13: #{simple_lstm_forward.5} parent=11 // pred_check
        %p123 = pneg %p30
      $region14: #{simple_lstm_forward.5} parent=11 // pred_check_branch
        %125 = sbr.rel (%p123) target = $region16
      $region15: #{simple_lstm_forward.5} parent=11 // pred_region
        _
      $region16: #{simple_lstm_forward.5} parent=11 // pred_fallthru
        _
    $region12: #{simple_lstm_forward.5} parent=5 // pred_fallthru
      _
    %p126 = scmp.lt.s32.totalorder %s9, 2
    // Predicated region
    $region17: #{simple_lstm_forward.5} parent=5 // pred_check
      %p127 = pneg %p126
    $region18: #{simple_lstm_forward.5} parent=5 // pred_check_branch
      %129 = sbr.rel (%p127) target = $region20
    $region19: #{simple_lstm_forward.5} parent=5 // pred_region
      // Predicated region
      $region21: #{simple_lstm_forward.5} parent=19 // pred_check
        %p130 = pneg %p50
      $region22: #{simple_lstm_forward.5} parent=19 // pred_check_branch
        %132 = sbr.rel (%p130) target = $region24
      $region23: #{simple_lstm_forward.5} parent=19 // pred_region
        %p133 = scmp.lt.s32.totalorder %s9, 1
        %s134 = scalar_select %p133, %s9, 1
        %s135 = smul.addr %s134, 2
        %s136 = smul.addr %s135, 8
        %s137 = scalar_lea.vmem %s1, %s136
      $region24: #{simple_lstm_forward.5} parent=19 // pred_fallthru
        _
      // Predicated region
      $region25: #{simple_lstm_forward.5} parent=19 // pred_check
        %p138 = pneg %p76
      $region26: #{simple_lstm_forward.5} parent=19 // pred_check_branch
        %140 = sbr.rel (%p138) target = $region28
      $region27: #{simple_lstm_forward.5} parent=19 // pred_region
        %p141 = scmp.lt.s32.totalorder %s9, 1
        %s142 = scalar_select %p141, %s9, 1
        %s143 = scalar_lea.vmem %s2, %s142
      $region28: #{simple_lstm_forward.5} parent=19 // pred_fallthru
        _
    $region20: #{simple_lstm_forward.5} parent=5 // pred_fallthru
      _
    %p144 = scmp.le.s32.totalorder 1, %s9
    %p145 = scmp.lt.s32.totalorder %s9, 3
    %p146 = pnand %p144, %p145
    %p147 = pneg %p146
    // Predicated region
    $region29: #{simple_lstm_forward.5} parent=5 // pred_check
      _
    $region30: #{simple_lstm_forward.5} parent=5 // pred_check_branch
      %149 = sbr.rel (%p146) target = $region32
    $region31: #{simple_lstm_forward.5} parent=5 // pred_region
      %s150 = ssub.s32 %s9, 1
      %p151 = pneg %p30
      %p152 = pneg %p27
      %p153 = scmp.lt.s32.totalorder %s14, 1
      %s154 = scalar_select %p153, %s14, 1
      %s155 = smul.addr %s154, 2
      %s156 = smul.addr %s155, 8
      %s157 = scalar_lea.vmem %s1, %s156
      %p158 = pneg %p56
      %p159 = pneg %p53
      %p160 = scmp.lt.s32.totalorder %s14, 1
      %s161 = scalar_select %p160, %s14, 1
      %s162 = scalar_lea.vmem %s2, %s161
      %p163 = pneg %p82
      %p164 = pneg %p79
      %p165 = pneg %p108
      %p166 = pneg %p105
      %p167 = scmp.lt.s32.totalorder %s14, 1
      %s168 = scalar_select %p167, %s14, 1
      %s169 = smul.addr %s168, 8
      %s170 = smul.addr %s169, 8
      %s171 = scalar_lea.vmem %s3, %s170
      %p172 = scmp.lt.s32.totalorder %s14, 1
      %s173 = scalar_select %p172, %s14, 1
      %s174 = smul.addr %s173, 2
      %s175 = smul.addr %s174, 8
      %s176 = scalar_lea.vmem %s1, %s175
      %p177 = scmp.lt.s32.totalorder %s14, 1
      %s178 = scalar_select %p177, %s14, 1
      %s179 = scalar_lea.vmem %s2, %s178
      %p180 = scmp.lt.s32.totalorder %s14, 1
      %s181 = scalar_select %p180, %s14, 1
      %s182 = smul.addr %s181, 8
      %s183 = smul.addr %s182, 8
      %s184 = scalar_lea.vmem %s3, %s183
      %v185 = vld [vmem:[%s0] sm:$0xff]
      %v186 = vld [vmem:[%s0 + $0x8] sm:$0xff]
      %v187 = vld [vmem:[%s0 + $0x10] sm:$0xff]
      %v188 = vld [vmem:[%s0 + $0x18] sm:$0xff]
      %v189 = vld [vmem:[%s0 + $0x20] sm:$0xff]
      %v190 = vld [vmem:[%s0 + $0x28] sm:$0xff]
      %v191 = vld [vmem:[%s0 + $0x30] sm:$0xff]
      %v192 = vld [vmem:[%s0 + $0x38] sm:$0xff]
      %v193 = vld [vmem:[%s176] sm:$0xff]
      %v194 = vld [vmem:[%s176 + $0x8] sm:$0xff]
      %v195 = vld [vmem:[%s179] sm:$0x1]
      %v197 = vlaneseq
      %v198 = vshrl.u32 %v197, 7
      %v199 = vsub.s32 0, %v198
      %v200 = vrot.slane %v195, %v199
      %vm202 = vcmask 130048
      %v204 = vsel %vm202, %v185, 0
      %v207 = vsel %vm202, %v186, 0
      %v210 = vsel %vm202, %v187, 0
      %v213 = vsel %vm202, %v188, 0
      %v216 = vsel %vm202, %v189, 0
      %v219 = vsel %vm202, %v190, 0
      %v222 = vsel %vm202, %v191, 0
      %v225 = vsel %vm202, %v192, 0
      %227 = vmatprep.subr.mxu0 0.0
      %228 = vmatpush1.msra.mxu0 %v193
      %229 = vmatprep.subr.mxu0 0.0
      %230 = vmatpush1.msra.mxu0 %v194
      %231 = vmatprep.subr.mxu0 0.0
      %232 = vmatpush1.msra.mxu0 0.0
      %233 = vmatprep.subr.mxu0 0.0
      %234 = vmatpush1.msra.mxu0 0.0
      %235 = vmatprep.subr.mxu0 0.0
      %236 = vmatpush1.msra.mxu0 0.0
      %237 = vmatprep.subr.mxu0 0.0
      %238 = vmatpush1.msra.mxu0 0.0
      %239 = vmatprep.subr.mxu0 0.0
      %240 = vmatpush1.msra.mxu0 0.0
      %241 = vmatprep.subr.mxu0 0.0
      %242 = vmatpush1.msra.mxu0 0.0
      %243 = vmatprep.subr.mxu0 0.0
      %244 = vmatpush1.msra.mxu0 0.0
      %245 = vmatprep.subr.mxu0 0.0
      %246 = vmatpush1.msra.mxu0 0.0
      %247 = vmatprep.subr.mxu0 0.0
      %248 = vmatpush1.msra.mxu0 0.0
      %249 = vmatprep.subr.mxu0 0.0
      %250 = vmatpush1.msra.mxu0 0.0
      %251 = vmatprep.subr.mxu0 0.0
      %252 = vmatpush1.msra.mxu0 0.0
      %253 = vmatprep.subr.mxu0 0.0
      %254 = vmatpush1.msra.mxu0 0.0
      %255 = vmatprep.subr.mxu0 0.0
      %256 = vmatpush1.msra.mxu0 0.0
      %257 = vmatprep.subr.mxu0 0.0
      %258 = vmatpush1.msra.mxu0 0.0
      %259 = vmatprep.subr.mxu0 0.0
      %260 = vmatpush1.msra.mxu0 0.0
      %261 = vmatprep.subr.mxu0 0.0
      %262 = vmatpush1.msra.mxu0 0.0
      %263 = vmatprep.subr.mxu0 0.0
      %264 = vmatpush1.msra.mxu0 0.0
      %265 = vmatprep.subr.mxu0 0.0
      %266 = vmatpush1.msra.mxu0 0.0
      %267 = vmatprep.subr.mxu0 0.0
      %268 = vmatpush1.msra.mxu0 0.0
      %269 = vmatprep.subr.mxu0 0.0
      %270 = vmatpush1.msra.mxu0 0.0
      %271 = vmatprep.subr.mxu0 0.0
      %272 = vmatpush1.msra.mxu0 0.0
      %273 = vmatprep.subr.mxu0 0.0
      %274 = vmatpush1.msra.mxu0 0.0
      %275 = vmatprep.subr.mxu0 0.0
      %276 = vmatpush1.msra.mxu0 0.0
      %277 = vmatprep.subr.mxu0 0.0
      %278 = vmatpush1.msra.mxu0 0.0
      %279 = vmatprep.subr.mxu0 0.0
      %280 = vmatpush1.msra.mxu0 0.0
      %281 = vmatprep.subr.mxu0 0.0
      %282 = vmatpush1.msra.mxu0 0.0
      %283 = vmatprep.subr.mxu0 0.0
      %284 = vmatpush1.msra.mxu0 0.0
      %285 = vmatprep.subr.mxu0 0.0
      %286 = vmatpush1.msra.mxu0 0.0
      %287 = vmatprep.subr.mxu0 0.0
      %288 = vmatpush1.msra.mxu0 0.0
      %289 = vmatprep.subr.mxu0 0.0
      %290 = vmatpush1.msra.mxu0 0.0
      %291 = vmatprep.mubr.f32.mxu0 0.0
      %292 = vmatmul.mubr.f32.gmra.mrb[0].mxu0 %v204
      %v293 = vpop.f32.mrb[0].mxu0
      %v294 = vadd.f32 %v200, %v293
      %v295 = vpop.f32.mrb[0].mxu0
      %296 = vmatprep.mubr.f32.mxu0 0.0
      %297 = vmatmul.mubr.f32.gmra.mrb[0].mxu0 %v207
      %v298 = vpop.f32.mrb[0].mxu0
      %v299 = vadd.f32 %v200, %v298
      %v300 = vpop.f32.mrb[0].mxu0
      %301 = vmatprep.mubr.f32.mxu0 0.0
      %302 = vmatmul.mubr.f32.gmra.mrb[0].mxu0 %v210
      %v303 = vpop.f32.mrb[0].mxu0
      %v304 = vadd.f32 %v200, %v303
      %v305 = vpop.f32.mrb[0].mxu0
      %306 = vmatprep.mubr.f32.mxu0 0.0
      %307 = vmatmul.mubr.f32.gmra.mrb[0].mxu0 %v213
      %v308 = vpop.f32.mrb[0].mxu0
      %v309 = vadd.f32 %v200, %v308
      %v310 = vpop.f32.mrb[0].mxu0
      %311 = vmatprep.mubr.f32.mxu0 0.0
      %312 = vmatmul.mubr.f32.gmra.mrb[0].mxu0 %v216
      %v313 = vpop.f32.mrb[0].mxu0
      %v314 = vadd.f32 %v200, %v313
      %v315 = vpop.f32.mrb[0].mxu0
      %316 = vmatprep.mubr.f32.mxu0 0.0
      %317 = vmatmul.mubr.f32.gmra.mrb[0].mxu0 %v219
      %v318 = vpop.f32.mrb[0].mxu0
      %v319 = vadd.f32 %v200, %v318
      %v320 = vpop.f32.mrb[0].mxu0
      %321 = vmatprep.mubr.f32.mxu0 0.0
      %322 = vmatmul.mubr.f32.gmra.mrb[0].mxu0 %v222
      %v323 = vpop.f32.mrb[0].mxu0
      %v324 = vadd.f32 %v200, %v323
      %v325 = vpop.f32.mrb[0].mxu0
      %326 = vmatprep.mubr.f32.mxu0 0.0
      %327 = vmatmul.mubr.f32.gmra.mrb[0].mxu0 %v225
      %v328 = vpop.f32.mrb[0].mxu0
      %v329 = vadd.f32 %v200, %v328
      %v330 = vpop.f32.mrb[0].mxu0
      %331 = vdwg.mxu0
      %332 = vst [vmem:[%s184] sm:$0xff] %v294
      %333 = vst [vmem:[%s184 + $0x8] sm:$0xff] %v299
      %334 = vst [vmem:[%s184 + $0x10] sm:$0xff] %v304
      %335 = vst [vmem:[%s184 + $0x18] sm:$0xff] %v309
      %336 = vst [vmem:[%s184 + $0x20] sm:$0xff] %v314
      %337 = vst [vmem:[%s184 + $0x28] sm:$0xff] %v319
      %338 = vst [vmem:[%s184 + $0x30] sm:$0xff] %v324
      %339 = vst [vmem:[%s184 + $0x38] sm:$0xff] %v329
      %p340 = scmp.lt.s32.totalorder %s14, 1
      %s341 = scalar_select %p340, %s14, 1
      %s342 = smul.addr %s341, 8
      %s343 = smul.addr %s342, 8
      %s344 = scalar_lea.vmem %s3, %s343
      // Predicated region
      $region33: #{simple_lstm_forward.5} parent=31 // pred_check
        %p345 = pneg %p105
      $region34: #{simple_lstm_forward.5} parent=31 // pred_check_branch
        %347 = sbr.rel (%p345) target = $region36
      $region35: #{simple_lstm_forward.5} parent=31 // pred_region
        _
      $region36: #{simple_lstm_forward.5} parent=31 // pred_fallthru
        _
    $region32: #{simple_lstm_forward.5} parent=5 // pred_fallthru
      _
    %p348 = scmp.le.s32.totalorder 2, %s9
    // Predicated region
    $region37: #{simple_lstm_forward.5} parent=5 // pred_check
      %p349 = pneg %p348
    $region38: #{simple_lstm_forward.5} parent=5 // pred_check_branch
      %351 = sbr.rel (%p349) target = $region40
    $region39: #{simple_lstm_forward.5} parent=5 // pred_region
      %s352 = ssub.s32 %s9, 2
      // Predicated region
      $region41: #{simple_lstm_forward.5} parent=39 // pred_check
        %p353 = pneg %p111
      $region42: #{simple_lstm_forward.5} parent=39 // pred_check_branch
        %355 = sbr.rel (%p353) target = $region44
      $region43: #{simple_lstm_forward.5} parent=39 // pred_region
        %p356 = scmp.lt.s32.totalorder %s15, 1
        %s357 = scalar_select %p356, %s15, 1
        %s358 = smul.addr %s357, 8
        %s359 = smul.addr %s358, 8
        %s360 = scalar_lea.vmem %s3, %s359
      $region44: #{simple_lstm_forward.5} parent=39 // pred_fallthru
        _
    $region40: #{simple_lstm_forward.5} parent=5 // pred_fallthru
      _
  $region6: #{simple_lstm_forward.5} parent=0 // loop_footer
    %s13 = sadd.s32 1, %s9
  $region7: #{simple_lstm_forward.5} parent=0 // loop_footer_branch
    %8 = sbr.rel target = $region3
  $region8: #{simple_lstm_forward.5} parent=0 // loop_exit
    _

// kernel: simple_lstm_forward.9
$region0: #{simple_lstm_forward.9}
  #allocation0 [shape = 'u32[]', space=smem, size = 0x4, offset = 0x4, fixed_abs, tag = 'smem constant byte address 0x4 - core index']
  #allocation1 [shape = 'u32[144,128]{1,0:T(1,128)}', space=vmem, size = 0x12000, scoped, tag = 'internal scratch']
  %s0 = inlined_call_operand.vmem [shape: f32[8,32], index: 0, kind: input, shape index: {}]
  %s1 = inlined_call_operand.vmem [shape: f32[8,32], index: 1, kind: input, shape index: {}]
  %s2 = inlined_call_operand.vmem [shape: f32[32,128], index: 2, kind: input, shape index: {}]
  %s3 = inlined_call_operand.vmem [shape: f32[32,128], index: 3, kind: input, shape index: {}]
  %s4 = inlined_call_operand.vmem [shape: f32[1,128], index: 4, kind: input, shape index: {}]
  %s5 = inlined_call_operand.vmem [shape: f32[8,128], index: 5, kind: output, shape index: {}]
  %s6 = sld [smem:[#allocation0]]
  $region30: #{simple_lstm_forward.9} parent=0
    _
  %s8 = ssub.s32 1, %s6
  %s9 = scalar_select 0, %s8, %s6
  // Predicated region
  $region2: #{simple_lstm_forward.9} parent=0 // pred_check
    _
  $region3: #{simple_lstm_forward.9} parent=0 // pred_check_branch
    %11 = sbr.rel (0) target = $region5
  $region4: #{simple_lstm_forward.9} parent=0 // pred_region
    _
  $region5: #{simple_lstm_forward.9} parent=0 // pred_fallthru
    _
  // Predicated region
  $region6: #{simple_lstm_forward.9} parent=0 // pred_check
    _
  $region7: #{simple_lstm_forward.9} parent=0 // pred_check_branch
    %13 = sbr.rel (0) target = $region9
  $region8: #{simple_lstm_forward.9} parent=0 // pred_region
    _
  $region9: #{simple_lstm_forward.9} parent=0 // pred_fallthru
    _
  // Predicated region
  $region10: #{simple_lstm_forward.9} parent=0 // pred_check
    _
  $region11: #{simple_lstm_forward.9} parent=0 // pred_check_branch
    %15 = sbr.rel (0) target = $region13
  $region12: #{simple_lstm_forward.9} parent=0 // pred_region
    _
  $region13: #{simple_lstm_forward.9} parent=0 // pred_fallthru
    _
  // Predicated region
  $region14: #{simple_lstm_forward.9} parent=0 // pred_check
    _
  $region15: #{simple_lstm_forward.9} parent=0 // pred_check_branch
    %17 = sbr.rel (0) target = $region17
  $region16: #{simple_lstm_forward.9} parent=0 // pred_region
    _
  $region17: #{simple_lstm_forward.9} parent=0 // pred_fallthru
    _
  // Predicated region
  $region18: #{simple_lstm_forward.9} parent=0 // pred_check
    _
  $region19: #{simple_lstm_forward.9} parent=0 // pred_check_branch
    %19 = sbr.rel (0) target = $region21
  $region20: #{simple_lstm_forward.9} parent=0 // pred_region
    _
  $region21: #{simple_lstm_forward.9} parent=0 // pred_fallthru
    _
  %v20 = vld [vmem:[%s0] sm:$0xff]
  %v21 = vld [vmem:[%s2] sm:$0xff]
  %v22 = vld [vmem:[%s2 + $0x8] sm:$0xff]
  %v23 = vld [vmem:[%s2 + $0x10] sm:$0xff]
  %v24 = vld [vmem:[%s2 + $0x18] sm:$0xff]
  %v25 = vld [vmem:[%s1] sm:$0xff]
  %v26 = vld [vmem:[%s3] sm:$0xff]
  %v27 = vld [vmem:[%s3 + $0x8] sm:$0xff]
  %v28 = vld [vmem:[%s3 + $0x10] sm:$0xff]
  %v29 = vld [vmem:[%s3 + $0x18] sm:$0xff]
  %vm30 = vcmask 261120
  %v32 = vsel %vm30, %v25, 0
  %34 = vmatprep.subr.mxu0 0.0
  %35 = vmatpush1.msra.mxu0 %v26
  %36 = vmatprep.subr.mxu0 0.0
  %37 = vmatpush1.msra.mxu0 %v27
  %38 = vmatprep.subr.mxu0 0.0
  %39 = vmatpush1.msra.mxu0 %v28
  %40 = vmatprep.subr.mxu0 0.0
  %41 = vmatpush1.msra.mxu0 %v29
  %42 = vmatprep.subr.mxu0 0.0
  %43 = vmatpush1.msra.mxu0 0.0
  %44 = vmatprep.subr.mxu0 0.0
  %45 = vmatpush1.msra.mxu0 0.0
  %46 = vmatprep.subr.mxu0 0.0
  %47 = vmatpush1.msra.mxu0 0.0
  %48 = vmatprep.subr.mxu0 0.0
  %49 = vmatpush1.msra.mxu0 0.0
  %50 = vmatprep.subr.mxu0 0.0
  %51 = vmatpush1.msra.mxu0 0.0
  %52 = vmatprep.subr.mxu0 0.0
  %53 = vmatpush1.msra.mxu0 0.0
  %54 = vmatprep.subr.mxu0 0.0
  %55 = vmatpush1.msra.mxu0 0.0
  %56 = vmatprep.subr.mxu0 0.0
  %57 = vmatpush1.msra.mxu0 0.0
  %58 = vmatprep.subr.mxu0 0.0
  %59 = vmatpush1.msra.mxu0 0.0
  %60 = vmatprep.subr.mxu0 0.0
  %61 = vmatpush1.msra.mxu0 0.0
  %62 = vmatprep.subr.mxu0 0.0
  %63 = vmatpush1.msra.mxu0 0.0
  %64 = vmatprep.subr.mxu0 0.0
  %65 = vmatpush1.msra.mxu0 0.0
  %66 = vmatprep.subr.mxu0 0.0
  %67 = vmatpush1.msra.mxu0 0.0
  %68 = vmatprep.subr.mxu0 0.0
  %69 = vmatpush1.msra.mxu0 0.0
  %70 = vmatprep.subr.mxu0 0.0
  %71 = vmatpush1.msra.mxu0 0.0
  %72 = vmatprep.subr.mxu0 0.0
  %73 = vmatpush1.msra.mxu0 0.0
  %74 = vmatprep.subr.mxu0 0.0
  %75 = vmatpush1.msra.mxu0 0.0
  %76 = vmatprep.subr.mxu0 0.0
  %77 = vmatpush1.msra.mxu0 0.0
  %78 = vmatprep.subr.mxu0 0.0
  %79 = vmatpush1.msra.mxu0 0.0
  %80 = vmatprep.subr.mxu0 0.0
  %81 = vmatpush1.msra.mxu0 0.0
  %82 = vmatprep.subr.mxu0 0.0
  %83 = vmatpush1.msra.mxu0 0.0
  %84 = vmatprep.subr.mxu0 0.0
  %85 = vmatpush1.msra.mxu0 0.0
  %86 = vmatprep.subr.mxu0 0.0
  %87 = vmatpush1.msra.mxu0 0.0
  %88 = vmatprep.subr.mxu0 0.0
  %89 = vmatpush1.msra.mxu0 0.0
  %90 = vmatprep.subr.mxu0 0.0
  %91 = vmatpush1.msra.mxu0 0.0
  %92 = vmatprep.subr.mxu0 0.0
  %93 = vmatpush1.msra.mxu0 0.0
  %94 = vmatprep.subr.mxu0 0.0
  %95 = vmatpush1.msra.mxu0 0.0
  %96 = vmatprep.subr.mxu0 0.0
  %97 = vmatpush1.msra.mxu0 0.0
  %98 = vmatprep.mubr.f32.mxu0 0.0
  %99 = vmatmul.mubr.f32.gmra.mrb[0].mxu0 %v32
  %v100 = vpop.f32.mrb[0].mxu0
  %v101 = vadd.f32 0.0, %v100
  %v102 = vpop.f32.mrb[0].mxu0
  %103 = vdwg.mxu0
  %v105 = vsel %vm30, %v20, 0
  %107 = vmatprep.subr.mxu0 0.0
  %108 = vmatpush1.msra.mxu0 %v21
  %109 = vmatprep.subr.mxu0 0.0
  %110 = vmatpush1.msra.mxu0 %v22
  %111 = vmatprep.subr.mxu0 0.0
  %112 = vmatpush1.msra.mxu0 %v23
  %113 = vmatprep.subr.mxu0 0.0
  %114 = vmatpush1.msra.mxu0 %v24
  %115 = vmatprep.subr.mxu0 0.0
  %116 = vmatpush1.msra.mxu0 0.0
  %117 = vmatprep.subr.mxu0 0.0
  %118 = vmatpush1.msra.mxu0 0.0
  %119 = vmatprep.subr.mxu0 0.0
  %120 = vmatpush1.msra.mxu0 0.0
  %121 = vmatprep.subr.mxu0 0.0
  %122 = vmatpush1.msra.mxu0 0.0
  %123 = vmatprep.subr.mxu0 0.0
  %124 = vmatpush1.msra.mxu0 0.0
  %125 = vmatprep.subr.mxu0 0.0
  %126 = vmatpush1.msra.mxu0 0.0
  %127 = vmatprep.subr.mxu0 0.0
  %128 = vmatpush1.msra.mxu0 0.0
  %129 = vmatprep.subr.mxu0 0.0
  %130 = vmatpush1.msra.mxu0 0.0
  %131 = vmatprep.subr.mxu0 0.0
  %132 = vmatpush1.msra.mxu0 0.0
  %133 = vmatprep.subr.mxu0 0.0
  %134 = vmatpush1.msra.mxu0 0.0
  %135 = vmatprep.subr.mxu0 0.0
  %136 = vmatpush1.msra.mxu0 0.0
  %137 = vmatprep.subr.mxu0 0.0
  %138 = vmatpush1.msra.mxu0 0.0
  %139 = vmatprep.subr.mxu0 0.0
  %140 = vmatpush1.msra.mxu0 0.0
  %141 = vmatprep.subr.mxu0 0.0
  %142 = vmatpush1.msra.mxu0 0.0
  %143 = vmatprep.subr.mxu0 0.0
  %144 = vmatpush1.msra.mxu0 0.0
  %145 = vmatprep.subr.mxu0 0.0
  %146 = vmatpush1.msra.mxu0 0.0
  %147 = vmatprep.subr.mxu0 0.0
  %148 = vmatpush1.msra.mxu0 0.0
  %149 = vmatprep.subr.mxu0 0.0
  %150 = vmatpush1.msra.mxu0 0.0
  %151 = vmatprep.subr.mxu0 0.0
  %152 = vmatpush1.msra.mxu0 0.0
  %153 = vmatprep.subr.mxu0 0.0
  %154 = vmatpush1.msra.mxu0 0.0
  %155 = vmatprep.subr.mxu0 0.0
  %156 = vmatpush1.msra.mxu0 0.0
  %157 = vmatprep.subr.mxu0 0.0
  %158 = vmatpush1.msra.mxu0 0.0
  %159 = vmatprep.subr.mxu0 0.0
  %160 = vmatpush1.msra.mxu0 0.0
  %161 = vmatprep.subr.mxu0 0.0
  %162 = vmatpush1.msra.mxu0 0.0
  %163 = vmatprep.subr.mxu0 0.0
  %164 = vmatpush1.msra.mxu0 0.0
  %165 = vmatprep.subr.mxu0 0.0
  %166 = vmatpush1.msra.mxu0 0.0
  %167 = vmatprep.subr.mxu0 0.0
  %168 = vmatpush1.msra.mxu0 0.0
  %169 = vmatprep.subr.mxu0 0.0
  %170 = vmatpush1.msra.mxu0 0.0
  %171 = vmatprep.mubr.f32.mxu0 0.0
  %172 = vmatmul.mubr.f32.gmra.mrb[0].mxu0 %v105
  %v173 = vpop.f32.mrb[0].mxu0
  %v174 = vadd.f32 %v101, %v173
  %v175 = vpop.f32.mrb[0].mxu0
  %176 = vdwg.mxu0
  %v177 = vld [vmem:[%s4] sm:$0x1]
  %v179 = vlaneseq
  %v180 = vshrl.u32 %v179, 7
  %v181 = vsub.s32 0, %v180
  %v182 = vrot.slane %v177, %v181
  %v184 = vadd.f32 %v174, %v182
  %185 = vst [vmem:[%s5] sm:$0xff] %v184
  // Predicated region
  $region22: #{simple_lstm_forward.9} parent=0 // pred_check
    _
  $region23: #{simple_lstm_forward.9} parent=0 // pred_check_branch
    %187 = sbr.rel (0) target = $region25
  $region24: #{simple_lstm_forward.9} parent=0 // pred_region
    _
  $region25: #{simple_lstm_forward.9} parent=0 // pred_fallthru
    _
  // Predicated region
  $region26: #{simple_lstm_forward.9} parent=0 // pred_check
    _
  $region27: #{simple_lstm_forward.9} parent=0 // pred_check_branch
    %189 = sbr.rel (0) target = $region29
  $region28: #{simple_lstm_forward.9} parent=0 // pred_region
    _
  $region29: #{simple_lstm_forward.9} parent=0 // pred_fallthru
    _

// kernel: simple_lstm_forward.7
$region0: #{simple_lstm_forward.7}
  #allocation0 [shape = 'u32[]', space=smem, size = 0x4, offset = 0x4, fixed_abs, tag = 'smem constant byte address 0x4 - core index']
  #allocation1 [shape = 'u32[144,128]{1,0:T(1,128)}', space=vmem, size = 0x12000, scoped, tag = 'internal scratch']
  %s0 = inlined_call_operand.vmem [shape: f32[2,64,32], index: 0, kind: input, shape index: {}]
  %s1 = inlined_call_operand.vmem [shape: f32[2,2,32,128], index: 1, kind: input, shape index: {}]
  %s2 = inlined_call_operand.vmem [shape: f32[2,1,128], index: 2, kind: input, shape index: {}]
  %s3 = inlined_call_operand.vmem [shape: f32[2,64,128], index: 3, kind: output, shape index: {}]
  %s4 = sld [smem:[#allocation0]]
  $region45: #{simple_lstm_forward.7} parent=0
    _
  %s6 = ssub.s32 1, %s4
  %s7 = scalar_select 0, %s6, %s4
  loop: start=0, step=1, limit=4
  $region2: #{simple_lstm_forward.7} parent=0 // loop_pre_header
    _
  $region3: #{simple_lstm_forward.7} parent=0 // loop_header
    %s9 = sphi 0, %s13
    %p10 = scmp.ge.s32.totalorder %s9, 4
    %s17 = sphi 0, %s17
    %s19 = sphi 0, %s17
    %s20 = sphi 0, %s19
    %s34 = sphi 0, %s20
    %s40 = sphi 0, %s42
    %s43 = sphi 0, %s40
    %s44 = sphi 0, %s43
    %s60 = sphi 0, %s44
    %s66 = sphi 0, %s68
    %s69 = sphi 0, %s66
    %s70 = sphi 0, %s69
    %s86 = sphi 0, %s70
    %s92 = sphi 0, %s94
    %s95 = sphi 0, %s92
    %s96 = sphi 0, %s95
    %s112 = sphi 0, %s96
  $region4: #{simple_lstm_forward.7} parent=0 // loop_header_branch
    %12 = sbr.rel (%p10) target = $region8
  $region5: #{simple_lstm_forward.7} parent=0 // loop_body
    %s14 = ssub.s32 %s9, 1
    %s15 = ssub.s32 %s9, 2
    %s16 = sadd.s32 %s9, 1
    %s18 = sadd.s32 %s17, 1
    %p21 = scmp.eq.s32.totalorder %s9, 1
    %p22 = scmp.ne.s32.totalorder %s17, %s19
    %p23 = scmp.eq.s32.totalorder %s9, 0
    %p24 = por %p22, %p23
    %p25 = scmp.ne.s32.totalorder %s17, %s19
    %p26 = scmp.eq.s32.totalorder %s14, 1
    %p27 = por %p25, %p26
    %p28 = scmp.ne.s32.totalorder %s19, %s20
    %p29 = scmp.eq.s32.totalorder %s14, 0
    %p30 = por %p28, %p29
    %p31 = scmp.ne.s32.totalorder %s19, %s20
    %p32 = scmp.eq.s32.totalorder %s15, 1
    %p33 = por %p31, %p32
    %p35 = scmp.ne.s32.totalorder %s20, %s34
    %p36 = scmp.eq.s32.totalorder %s15, 0
    %p37 = por %p35, %p36
    %s38 = ssub.s32 %s9, %s16
    %p39 = scmp.eq.s32.totalorder %s38, 0
    %s41 = sadd.s32 %s40, 1
    %s42 = scalar_select %p39, %s40, %s41
    %p45 = pneg %p39
    %p46 = scmp.eq.s32.totalorder %s9, 1
    %p47 = por %p45, %p46
    %p48 = scmp.ne.s32.totalorder %s40, %s43
    %p49 = scmp.eq.s32.totalorder %s9, 0
    %p50 = por %p48, %p49
    %p51 = scmp.ne.s32.totalorder %s40, %s43
    %p52 = scmp.eq.s32.totalorder %s14, 1
    %p53 = por %p51, %p52
    %p54 = scmp.ne.s32.totalorder %s43, %s44
    %p55 = scmp.eq.s32.totalorder %s14, 0
    %p56 = por %p54, %p55
    %p57 = scmp.ne.s32.totalorder %s43, %s44
    %p58 = scmp.eq.s32.totalorder %s15, 1
    %p59 = por %p57, %p58
    %p61 = scmp.ne.s32.totalorder %s44, %s60
    %p62 = scmp.eq.s32.totalorder %s15, 0
    %p63 = por %p61, %p62
    %s64 = ssub.s32 %s9, %s16
    %p65 = scmp.eq.s32.totalorder %s64, 0
    %s67 = sadd.s32 %s66, 1
    %s68 = scalar_select %p65, %s66, %s67
    %p71 = pneg %p65
    %p72 = scmp.eq.s32.totalorder %s9, 1
    %p73 = por %p71, %p72
    %p74 = scmp.ne.s32.totalorder %s66, %s69
    %p75 = scmp.eq.s32.totalorder %s9, 0
    %p76 = por %p74, %p75
    %p77 = scmp.ne.s32.totalorder %s66, %s69
    %p78 = scmp.eq.s32.totalorder %s14, 1
    %p79 = por %p77, %p78
    %p80 = scmp.ne.s32.totalorder %s69, %s70
    %p81 = scmp.eq.s32.totalorder %s14, 0
    %p82 = por %p80, %p81
    %p83 = scmp.ne.s32.totalorder %s69, %s70
    %p84 = scmp.eq.s32.totalorder %s15, 1
    %p85 = por %p83, %p84
    %p87 = scmp.ne.s32.totalorder %s70, %s86
    %p88 = scmp.eq.s32.totalorder %s15, 0
    %p89 = por %p87, %p88
    %s90 = ssub.s32 %s9, %s16
    %p91 = scmp.eq.s32.totalorder %s90, 0
    %s93 = sadd.s32 %s92, 1
    %s94 = scalar_select %p91, %s92, %s93
    %p97 = pneg %p91
    %p98 = scmp.eq.s32.totalorder %s9, 1
    %p99 = por %p97, %p98
    %p100 = scmp.ne.s32.totalorder %s92, %s95
    %p101 = scmp.eq.s32.totalorder %s9, 0
    %p102 = por %p100, %p101
    %p103 = scmp.ne.s32.totalorder %s92, %s95
    %p104 = scmp.eq.s32.totalorder %s14, 1
    %p105 = por %p103, %p104
    %p106 = scmp.ne.s32.totalorder %s95, %s96
    %p107 = scmp.eq.s32.totalorder %s14, 0
    %p108 = por %p106, %p107
    %p109 = scmp.ne.s32.totalorder %s95, %s96
    %p110 = scmp.eq.s32.totalorder %s15, 1
    %p111 = por %p109, %p110
    %p113 = scmp.ne.s32.totalorder %s96, %s112
    %p114 = scmp.eq.s32.totalorder %s15, 0
    %p115 = por %p113, %p114
    %p116 = scmp.le.s32.totalorder 1, %s9
    %p117 = scmp.lt.s32.totalorder %s9, 3
    %p118 = pnand %p116, %p117
    %p119 = pneg %p118
    // Predicated region
    $region9: #{simple_lstm_forward.7} parent=5 // pred_check
      _
    $region10: #{simple_lstm_forward.7} parent=5 // pred_check_branch
      %121 = sbr.rel (%p118) target = $region12
    $region11: #{simple_lstm_forward.7} parent=5 // pred_region
      %s122 = ssub.s32 %s9, 1
      // Predicated region
      $region13: #{simple_lstm_forward.7} parent=11 // pred_check
        %p123 = pneg %p30
      $region14: #{simple_lstm_forward.7} parent=11 // pred_check_branch
        %125 = sbr.rel (%p123) target = $region16
      $region15: #{simple_lstm_forward.7} parent=11 // pred_region
        _
      $region16: #{simple_lstm_forward.7} parent=11 // pred_fallthru
        _
    $region12: #{simple_lstm_forward.7} parent=5 // pred_fallthru
      _
    %p126 = scmp.lt.s32.totalorder %s9, 2
    // Predicated region
    $region17: #{simple_lstm_forward.7} parent=5 // pred_check
      %p127 = pneg %p126
    $region18: #{simple_lstm_forward.7} parent=5 // pred_check_branch
      %129 = sbr.rel (%p127) target = $region20
    $region19: #{simple_lstm_forward.7} parent=5 // pred_region
      // Predicated region
      $region21: #{simple_lstm_forward.7} parent=19 // pred_check
        %p130 = pneg %p50
      $region22: #{simple_lstm_forward.7} parent=19 // pred_check_branch
        %132 = sbr.rel (%p130) target = $region24
      $region23: #{simple_lstm_forward.7} parent=19 // pred_region
        %p133 = scmp.lt.s32.totalorder %s9, 1
        %s134 = scalar_select %p133, %s9, 1
        %s135 = smul.addr %s134, 8
        %s136 = smul.addr %s135, 8
        %s137 = scalar_lea.vmem %s1, %s136
      $region24: #{simple_lstm_forward.7} parent=19 // pred_fallthru
        _
      // Predicated region
      $region25: #{simple_lstm_forward.7} parent=19 // pred_check
        %p138 = pneg %p76
      $region26: #{simple_lstm_forward.7} parent=19 // pred_check_branch
        %140 = sbr.rel (%p138) target = $region28
      $region27: #{simple_lstm_forward.7} parent=19 // pred_region
        %p141 = scmp.lt.s32.totalorder %s9, 1
        %s142 = scalar_select %p141, %s9, 1
        %s143 = scalar_lea.vmem %s2, %s142
      $region28: #{simple_lstm_forward.7} parent=19 // pred_fallthru
        _
    $region20: #{simple_lstm_forward.7} parent=5 // pred_fallthru
      _
    %p144 = scmp.le.s32.totalorder 1, %s9
    %p145 = scmp.lt.s32.totalorder %s9, 3
    %p146 = pnand %p144, %p145
    %p147 = pneg %p146
    // Predicated region
    $region29: #{simple_lstm_forward.7} parent=5 // pred_check
      _
    $region30: #{simple_lstm_forward.7} parent=5 // pred_check_branch
      %149 = sbr.rel (%p146) target = $region32
    $region31: #{simple_lstm_forward.7} parent=5 // pred_region
      %s150 = ssub.s32 %s9, 1
      %p151 = pneg %p30
      %p152 = pneg %p27
      %p153 = scmp.lt.s32.totalorder %s14, 1
      %s154 = scalar_select %p153, %s14, 1
      %s155 = smul.addr %s154, 8
      %s156 = smul.addr %s155, 8
      %s157 = scalar_lea.vmem %s1, %s156
      %p158 = pneg %p56
      %p159 = pneg %p53
      %p160 = scmp.lt.s32.totalorder %s14, 1
      %s161 = scalar_select %p160, %s14, 1
      %s162 = scalar_lea.vmem %s2, %s161
      %p163 = pneg %p82
      %p164 = pneg %p79
      %p165 = pneg %p108
      %p166 = pneg %p105
      %p167 = scmp.lt.s32.totalorder %s14, 1
      %s168 = scalar_select %p167, %s14, 1
      %s169 = smul.addr %s168, 8
      %s170 = smul.addr %s169, 8
      %s171 = scalar_lea.vmem %s3, %s170
      %p172 = scmp.lt.s32.totalorder %s14, 1
      %s173 = scalar_select %p172, %s14, 1
      %s174 = smul.addr %s173, 8
      %s175 = smul.addr %s174, 8
      %s176 = scalar_lea.vmem %s1, %s175
      %p177 = scmp.lt.s32.totalorder %s14, 1
      %s178 = scalar_select %p177, %s14, 1
      %s179 = scalar_lea.vmem %s2, %s178
      %p180 = scmp.lt.s32.totalorder %s14, 1
      %s181 = scalar_select %p180, %s14, 1
      %s182 = smul.addr %s181, 8
      %s183 = smul.addr %s182, 8
      %s184 = scalar_lea.vmem %s3, %s183
      %v185 = vld [vmem:[%s0] sm:$0xff]
      %v186 = vld [vmem:[%s0 + $0x8] sm:$0xff]
      %v187 = vld [vmem:[%s0 + $0x10] sm:$0xff]
      %v188 = vld [vmem:[%s0 + $0x18] sm:$0xff]
      %v189 = vld [vmem:[%s0 + $0x20] sm:$0xff]
      %v190 = vld [vmem:[%s0 + $0x28] sm:$0xff]
      %v191 = vld [vmem:[%s0 + $0x30] sm:$0xff]
      %v192 = vld [vmem:[%s0 + $0x38] sm:$0xff]
      %v193 = vld [vmem:[%s176] sm:$0xff]
      %v194 = vld [vmem:[%s176 + $0x8] sm:$0xff]
      %v195 = vld [vmem:[%s176 + $0x10] sm:$0xff]
      %v196 = vld [vmem:[%s176 + $0x18] sm:$0xff]
      %s197 = scalar_lea.vmem %s0, 64
      %v198 = vld [vmem:[%s197] sm:$0xff]
      %v199 = vld [vmem:[%s197 + $0x8] sm:$0xff]
      %v200 = vld [vmem:[%s197 + $0x10] sm:$0xff]
      %v201 = vld [vmem:[%s197 + $0x18] sm:$0xff]
      %v202 = vld [vmem:[%s197 + $0x20] sm:$0xff]
      %v203 = vld [vmem:[%s197 + $0x28] sm:$0xff]
      %v204 = vld [vmem:[%s197 + $0x30] sm:$0xff]
      %v205 = vld [vmem:[%s197 + $0x38] sm:$0xff]
      %s206 = scalar_lea.vmem %s176, 32
      %v207 = vld [vmem:[%s206] sm:$0xff]
      %v208 = vld [vmem:[%s206 + $0x8] sm:$0xff]
      %v209 = vld [vmem:[%s206 + $0x10] sm:$0xff]
      %v210 = vld [vmem:[%s206 + $0x18] sm:$0xff]
      %vm211 = vcmask 261120
      %v213 = vsel %vm211, %v198, 0
      %v216 = vsel %vm211, %v199, 0
      %v219 = vsel %vm211, %v200, 0
      %v222 = vsel %vm211, %v201, 0
      %v225 = vsel %vm211, %v202, 0
      %v228 = vsel %vm211, %v203, 0
      %v231 = vsel %vm211, %v204, 0
      %v234 = vsel %vm211, %v205, 0
      %236 = vmatprep.subr.mxu0 0.0
      %237 = vmatpush1.msra.mxu0 %v207
      %238 = vmatprep.subr.mxu0 0.0
      %239 = vmatpush1.msra.mxu0 %v208
      %240 = vmatprep.subr.mxu0 0.0
      %241 = vmatpush1.msra.mxu0 %v209
      %242 = vmatprep.subr.mxu0 0.0
      %243 = vmatpush1.msra.mxu0 %v210
      %244 = vmatprep.subr.mxu0 0.0
      %245 = vmatpush1.msra.mxu0 0.0
      %246 = vmatprep.subr.mxu0 0.0
      %247 = vmatpush1.msra.mxu0 0.0
      %248 = vmatprep.subr.mxu0 0.0
      %249 = vmatpush1.msra.mxu0 0.0
      %250 = vmatprep.subr.mxu0 0.0
      %251 = vmatpush1.msra.mxu0 0.0
      %252 = vmatprep.subr.mxu0 0.0
      %253 = vmatpush1.msra.mxu0 0.0
      %254 = vmatprep.subr.mxu0 0.0
      %255 = vmatpush1.msra.mxu0 0.0
      %256 = vmatprep.subr.mxu0 0.0
      %257 = vmatpush1.msra.mxu0 0.0
      %258 = vmatprep.subr.mxu0 0.0
      %259 = vmatpush1.msra.mxu0 0.0
      %260 = vmatprep.subr.mxu0 0.0
      %261 = vmatpush1.msra.mxu0 0.0
      %262 = vmatprep.subr.mxu0 0.0
      %263 = vmatpush1.msra.mxu0 0.0
      %264 = vmatprep.subr.mxu0 0.0
      %265 = vmatpush1.msra.mxu0 0.0
      %266 = vmatprep.subr.mxu0 0.0
      %267 = vmatpush1.msra.mxu0 0.0
      %268 = vmatprep.subr.mxu0 0.0
      %269 = vmatpush1.msra.mxu0 0.0
      %270 = vmatprep.subr.mxu0 0.0
      %271 = vmatpush1.msra.mxu0 0.0
      %272 = vmatprep.subr.mxu0 0.0
      %273 = vmatpush1.msra.mxu0 0.0
      %274 = vmatprep.subr.mxu0 0.0
      %275 = vmatpush1.msra.mxu0 0.0
      %276 = vmatprep.subr.mxu0 0.0
      %277 = vmatpush1.msra.mxu0 0.0
      %278 = vmatprep.subr.mxu0 0.0
      %279 = vmatpush1.msra.mxu0 0.0
      %280 = vmatprep.subr.mxu0 0.0
      %281 = vmatpush1.msra.mxu0 0.0
      %282 = vmatprep.subr.mxu0 0.0
      %283 = vmatpush1.msra.mxu0 0.0
      %284 = vmatprep.subr.mxu0 0.0
      %285 = vmatpush1.msra.mxu0 0.0
      %286 = vmatprep.subr.mxu0 0.0
      %287 = vmatpush1.msra.mxu0 0.0
      %288 = vmatprep.subr.mxu0 0.0
      %289 = vmatpush1.msra.mxu0 0.0
      %290 = vmatprep.subr.mxu0 0.0
      %291 = vmatpush1.msra.mxu0 0.0
      %292 = vmatprep.subr.mxu0 0.0
      %293 = vmatpush1.msra.mxu0 0.0
      %294 = vmatprep.subr.mxu0 0.0
      %295 = vmatpush1.msra.mxu0 0.0
      %296 = vmatprep.subr.mxu0 0.0
      %297 = vmatpush1.msra.mxu0 0.0
      %298 = vmatprep.subr.mxu0 0.0
      %299 = vmatpush1.msra.mxu0 0.0
      %300 = vmatprep.mubr.f32.mxu0 0.0
      %301 = vmatmul.mubr.f32.gmra.mrb[0].mxu0 %v213
      %v302 = vpop.f32.mrb[0].mxu0
      %v303 = vadd.f32 0.0, %v302
      %v304 = vpop.f32.mrb[0].mxu0
      %305 = vmatprep.mubr.f32.mxu0 0.0
      %306 = vmatmul.mubr.f32.gmra.mrb[0].mxu0 %v216
      %v307 = vpop.f32.mrb[0].mxu0
      %v308 = vadd.f32 0.0, %v307
      %v309 = vpop.f32.mrb[0].mxu0
      %310 = vmatprep.mubr.f32.mxu0 0.0
      %311 = vmatmul.mubr.f32.gmra.mrb[0].mxu0 %v219
      %v312 = vpop.f32.mrb[0].mxu0
      %v313 = vadd.f32 0.0, %v312
      %v314 = vpop.f32.mrb[0].mxu0
      %315 = vmatprep.mubr.f32.mxu0 0.0
      %316 = vmatmul.mubr.f32.gmra.mrb[0].mxu0 %v222
      %v317 = vpop.f32.mrb[0].mxu0
      %v318 = vadd.f32 0.0, %v317
      %v319 = vpop.f32.mrb[0].mxu0
      %320 = vmatprep.mubr.f32.mxu0 0.0
      %321 = vmatmul.mubr.f32.gmra.mrb[0].mxu0 %v225
      %v322 = vpop.f32.mrb[0].mxu0
      %v323 = vadd.f32 0.0, %v322
      %v324 = vpop.f32.mrb[0].mxu0
      %325 = vmatprep.mubr.f32.mxu0 0.0
      %326 = vmatmul.mubr.f32.gmra.mrb[0].mxu0 %v228
      %v327 = vpop.f32.mrb[0].mxu0
      %v328 = vadd.f32 0.0, %v327
      %v329 = vpop.f32.mrb[0].mxu0
      %330 = vmatprep.mubr.f32.mxu0 0.0
      %331 = vmatmul.mubr.f32.gmra.mrb[0].mxu0 %v231
      %v332 = vpop.f32.mrb[0].mxu0
      %v333 = vadd.f32 0.0, %v332
      %v334 = vpop.f32.mrb[0].mxu0
      %335 = vmatprep.mubr.f32.mxu0 0.0
      %336 = vmatmul.mubr.f32.gmra.mrb[0].mxu0 %v234
      %v337 = vpop.f32.mrb[0].mxu0
      %v338 = vadd.f32 0.0, %v337
      %v339 = vpop.f32.mrb[0].mxu0
      %340 = vdwg.mxu0
      %v342 = vsel %vm211, %v185, 0
      %v345 = vsel %vm211, %v186, 0
      %v348 = vsel %vm211, %v187, 0
      %v351 = vsel %vm211, %v188, 0
      %v354 = vsel %vm211, %v189, 0
      %v357 = vsel %vm211, %v190, 0
      %v360 = vsel %vm211, %v191, 0
      %v363 = vsel %vm211, %v192, 0
      %365 = vmatprep.subr.mxu0 0.0
      %366 = vmatpush1.msra.mxu0 %v193
      %367 = vmatprep.subr.mxu0 0.0
      %368 = vmatpush1.msra.mxu0 %v194
      %369 = vmatprep.subr.mxu0 0.0
      %370 = vmatpush1.msra.mxu0 %v195
      %371 = vmatprep.subr.mxu0 0.0
      %372 = vmatpush1.msra.mxu0 %v196
      %373 = vmatprep.subr.mxu0 0.0
      %374 = vmatpush1.msra.mxu0 0.0
      %375 = vmatprep.subr.mxu0 0.0
      %376 = vmatpush1.msra.mxu0 0.0
      %377 = vmatprep.subr.mxu0 0.0
      %378 = vmatpush1.msra.mxu0 0.0
      %379 = vmatprep.subr.mxu0 0.0
      %380 = vmatpush1.msra.mxu0 0.0
      %381 = vmatprep.subr.mxu0 0.0
      %382 = vmatpush1.msra.mxu0 0.0
      %383 = vmatprep.subr.mxu0 0.0
      %384 = vmatpush1.msra.mxu0 0.0
      %385 = vmatprep.subr.mxu0 0.0
      %386 = vmatpush1.msra.mxu0 0.0
      %387 = vmatprep.subr.mxu0 0.0
      %388 = vmatpush1.msra.mxu0 0.0
      %389 = vmatprep.subr.mxu0 0.0
      %390 = vmatpush1.msra.mxu0 0.0
      %391 = vmatprep.subr.mxu0 0.0
      %392 = vmatpush1.msra.mxu0 0.0
      %393 = vmatprep.subr.mxu0 0.0
      %394 = vmatpush1.msra.mxu0 0.0
      %395 = vmatprep.subr.mxu0 0.0
      %396 = vmatpush1.msra.mxu0 0.0
      %397 = vmatprep.subr.mxu0 0.0
      %398 = vmatpush1.msra.mxu0 0.0
      %399 = vmatprep.subr.mxu0 0.0
      %400 = vmatpush1.msra.mxu0 0.0
      %401 = vmatprep.subr.mxu0 0.0
      %402 = vmatpush1.msra.mxu0 0.0
      %403 = vmatprep.subr.mxu0 0.0
      %404 = vmatpush1.msra.mxu0 0.0
      %405 = vmatprep.subr.mxu0 0.0
      %406 = vmatpush1.msra.mxu0 0.0
      %407 = vmatprep.subr.mxu0 0.0
      %408 = vmatpush1.msra.mxu0 0.0
      %409 = vmatprep.subr.mxu0 0.0
      %410 = vmatpush1.msra.mxu0 0.0
      %411 = vmatprep.subr.mxu0 0.0
      %412 = vmatpush1.msra.mxu0 0.0
      %413 = vmatprep.subr.mxu0 0.0
      %414 = vmatpush1.msra.mxu0 0.0
      %415 = vmatprep.subr.mxu0 0.0
      %416 = vmatpush1.msra.mxu0 0.0
      %417 = vmatprep.subr.mxu0 0.0
      %418 = vmatpush1.msra.mxu0 0.0
      %419 = vmatprep.subr.mxu0 0.0
      %420 = vmatpush1.msra.mxu0 0.0
      %421 = vmatprep.subr.mxu0 0.0
      %422 = vmatpush1.msra.mxu0 0.0
      %423 = vmatprep.subr.mxu0 0.0
      %424 = vmatpush1.msra.mxu0 0.0
      %425 = vmatprep.subr.mxu0 0.0
      %426 = vmatpush1.msra.mxu0 0.0
      %427 = vmatprep.subr.mxu0 0.0
      %428 = vmatpush1.msra.mxu0 0.0
      %429 = vmatprep.mubr.f32.mxu0 0.0
      %430 = vmatmul.mubr.f32.gmra.mrb[0].mxu0 %v342
      %v431 = vpop.f32.mrb[0].mxu0
      %v432 = vadd.f32 %v303, %v431
      %v433 = vpop.f32.mrb[0].mxu0
      %434 = vmatprep.mubr.f32.mxu0 0.0
      %435 = vmatmul.mubr.f32.gmra.mrb[0].mxu0 %v345
      %v436 = vpop.f32.mrb[0].mxu0
      %v437 = vadd.f32 %v308, %v436
      %v438 = vpop.f32.mrb[0].mxu0
      %439 = vmatprep.mubr.f32.mxu0 0.0
      %440 = vmatmul.mubr.f32.gmra.mrb[0].mxu0 %v348
      %v441 = vpop.f32.mrb[0].mxu0
      %v442 = vadd.f32 %v313, %v441
      %v443 = vpop.f32.mrb[0].mxu0
      %444 = vmatprep.mubr.f32.mxu0 0.0
      %445 = vmatmul.mubr.f32.gmra.mrb[0].mxu0 %v351
      %v446 = vpop.f32.mrb[0].mxu0
      %v447 = vadd.f32 %v318, %v446
      %v448 = vpop.f32.mrb[0].mxu0
      %449 = vmatprep.mubr.f32.mxu0 0.0
      %450 = vmatmul.mubr.f32.gmra.mrb[0].mxu0 %v354
      %v451 = vpop.f32.mrb[0].mxu0
      %v452 = vadd.f32 %v323, %v451
      %v453 = vpop.f32.mrb[0].mxu0
      %454 = vmatprep.mubr.f32.mxu0 0.0
      %455 = vmatmul.mubr.f32.gmra.mrb[0].mxu0 %v357
      %v456 = vpop.f32.mrb[0].mxu0
      %v457 = vadd.f32 %v328, %v456
      %v458 = vpop.f32.mrb[0].mxu0
      %459 = vmatprep.mubr.f32.mxu0 0.0
      %460 = vmatmul.mubr.f32.gmra.mrb[0].mxu0 %v360
      %v461 = vpop.f32.mrb[0].mxu0
      %v462 = vadd.f32 %v333, %v461
      %v463 = vpop.f32.mrb[0].mxu0
      %464 = vmatprep.mubr.f32.mxu0 0.0
      %465 = vmatmul.mubr.f32.gmra.mrb[0].mxu0 %v363
      %v466 = vpop.f32.mrb[0].mxu0
      %v467 = vadd.f32 %v338, %v466
      %v468 = vpop.f32.mrb[0].mxu0
      %469 = vdwg.mxu0
      %v470 = vld [vmem:[%s179] sm:$0x1]
      %v472 = vlaneseq
      %v473 = vshrl.u32 %v472, 7
      %v474 = vsub.s32 0, %v473
      %v475 = vrot.slane %v470, %v474
      %v477 = vadd.f32 %v432, %v475
      %v478 = vadd.f32 %v437, %v475
      %v479 = vadd.f32 %v442, %v475
      %v480 = vadd.f32 %v447, %v475
      %v481 = vadd.f32 %v452, %v475
      %v482 = vadd.f32 %v457, %v475
      %v483 = vadd.f32 %v462, %v475
      %v484 = vadd.f32 %v467, %v475
      %485 = vst [vmem:[%s184] sm:$0xff] %v477
      %486 = vst [vmem:[%s184 + $0x8] sm:$0xff] %v478
      %487 = vst [vmem:[%s184 + $0x10] sm:$0xff] %v479
      %488 = vst [vmem:[%s184 + $0x18] sm:$0xff] %v480
      %489 = vst [vmem:[%s184 + $0x20] sm:$0xff] %v481
      %490 = vst [vmem:[%s184 + $0x28] sm:$0xff] %v482
      %491 = vst [vmem:[%s184 + $0x30] sm:$0xff] %v483
      %492 = vst [vmem:[%s184 + $0x38] sm:$0xff] %v484
      %p493 = scmp.lt.s32.totalorder %s14, 1
      %s494 = scalar_select %p493, %s14, 1
      %s495 = smul.addr %s494, 8
      %s496 = smul.addr %s495, 8
      %s497 = scalar_lea.vmem %s3, %s496
      // Predicated region
      $region33: #{simple_lstm_forward.7} parent=31 // pred_check
        %p498 = pneg %p105
      $region34: #{simple_lstm_forward.7} parent=31 // pred_check_branch
        %500 = sbr.rel (%p498) target = $region36
      $region35: #{simple_lstm_forward.7} parent=31 // pred_region
        _
      $region36: #{simple_lstm_forward.7} parent=31 // pred_fallthru
        _
    $region32: #{simple_lstm_forward.7} parent=5 // pred_fallthru
      _
    %p501 = scmp.le.s32.totalorder 2, %s9
    // Predicated region
    $region37: #{simple_lstm_forward.7} parent=5 // pred_check
      %p502 = pneg %p501
    $region38: #{simple_lstm_forward.7} parent=5 // pred_check_branch
      %504 = sbr.rel (%p502) target = $region40
    $region39: #{simple_lstm_forward.7} parent=5 // pred_region
      %s505 = ssub.s32 %s9, 2
      // Predicated region
      $region41: #{simple_lstm_forward.7} parent=39 // pred_check
        %p506 = pneg %p111
      $region42: #{simple_lstm_forward.7} parent=39 // pred_check_branch
        %508 = sbr.rel (%p506) target = $region44
      $region43: #{simple_lstm_forward.7} parent=39 // pred_region
        %p509 = scmp.lt.s32.totalorder %s15, 1
        %s510 = scalar_select %p509, %s15, 1
        %s511 = smul.addr %s510, 8
        %s512 = smul.addr %s511, 8
        %s513 = scalar_lea.vmem %s3, %s512
      $region44: #{simple_lstm_forward.7} parent=39 // pred_fallthru
        _
    $region40: #{simple_lstm_forward.7} parent=5 // pred_fallthru
      _
  $region6: #{simple_lstm_forward.7} parent=0 // loop_footer
    %s13 = sadd.s32 1, %s9
  $region7: #{simple_lstm_forward.7} parent=0 // loop_footer_branch
    %8 = sbr.rel target = $region3
  $region8: #{simple_lstm_forward.7} parent=0 // loop_exit
    _

// kernel: simple_lstm_forward.6
$region0: #{simple_lstm_forward.6}
  #allocation0 [shape = 'u32[]', space=smem, size = 0x4, offset = 0x4, fixed_abs, tag = 'smem constant byte address 0x4 - core index']
  #allocation1 [shape = 'u32[144,128]{1,0:T(1,128)}', space=vmem, size = 0x12000, scoped, tag = 'internal scratch']
  #allocation2 [shape = 'f32[8,32]{1,0:T(8,128)}', space=vmem, size = 0x1000, scoped, tag = 'scratch operand']
  #allocation3 [shape = 'f32[8,32]{1,0:T(8,128)}', space=vmem, size = 0x1000, scoped, tag = 'scratch operand']
  %s0 = inlined_call_operand.vmem [shape: f32[2,64,128], index: 0, kind: input, shape index: {}]
  %s1 = inlined_call_operand.vmem [shape: f32[2,32,128], index: 1, kind: input, shape index: {}]
  %s2 = inlined_call_operand.vmem [shape: f32[2,64,32], index: 2, kind: output, shape index: {}]
  %s3 = sld [smem:[#allocation0]]
  $region45: #{simple_lstm_forward.6} parent=0
    _
  %s5 = ssub.s32 1, %s3
  %s6 = scalar_select 0, %s5, %s3
  loop: start=0, step=1, limit=4
  $region2: #{simple_lstm_forward.6} parent=0 // loop_pre_header
    _
  $region3: #{simple_lstm_forward.6} parent=0 // loop_header
    %s8 = sphi 0, %s12
    %p9 = scmp.ge.s32.totalorder %s8, 4
    %s15 = sphi 0, %s27
    %s16 = sphi 0, %s23
    %s17 = sphi 0, %s15
    %s18 = sphi 0, %s16
    %s19 = sphi 0, %s17
    %s20 = sphi 0, %s18
    %s42 = sphi 0, %s44
    %s45 = sphi 0, %s42
    %s46 = sphi 0, %s45
    %s62 = sphi 0, %s46
    %s68 = sphi 0, %s70
    %s71 = sphi 0, %s68
    %s72 = sphi 0, %s71
    %s88 = sphi 0, %s72
    %s106 = sphi 0, %s108
    %s109 = sphi 0, %s106
    %s110 = sphi 0, %s109
    %s126 = sphi 0, %s110
  $region4: #{simple_lstm_forward.6} parent=0 // loop_header_branch
    %11 = sbr.rel (%p9) target = $region8
  $region5: #{simple_lstm_forward.6} parent=0 // loop_body
    %s13 = ssub.s32 %s8, 1
    %s14 = ssub.s32 %s8, 2
    %s21 = sadd.s32 1, %s16
    %p22 = scmp.ge.s32.totalorder %s21, 1
    %s23 = scalar_select %p22, 0, %s21
    %s24 = sadd.s32 1, %s15
    %s25 = scalar_select %p22, %s24, %s15
    %p26 = scmp.ge.s32.totalorder %s25, 2
    %s27 = scalar_select %p26, 0, %s25
    %s28 = ssub.s32 1, %s15
    %s29 = smul.u32 %s28, %s16
    %s30 = ssub.s32 0, %s16
    %s31 = smul.u32 %s15, %s30
    %s32 = sadd.s32 %s29, %s31
    %s33 = ssub.s32 1, %s27
    %s34 = smul.u32 %s33, %s23
    %s35 = ssub.s32 0, %s23
    %s36 = smul.u32 %s27, %s35
    %s37 = sadd.s32 %s34, %s36
    %s38 = ssub.s32 %s15, %s27
    %s39 = ssub.s32 %s32, %s37
    %s40 = sor.u32 %s38, %s39
    %p41 = scmp.eq.s32.totalorder %s40, 0
    %s43 = sadd.s32 %s42, 1
    %s44 = scalar_select %p41, %s42, %s43
    %p47 = pneg %p41
    %p48 = scmp.eq.s32.totalorder %s8, 1
    %p49 = por %p47, %p48
    %p50 = scmp.ne.s32.totalorder %s42, %s45
    %p51 = scmp.eq.s32.totalorder %s8, 0
    %p52 = por %p50, %p51
    %p53 = scmp.ne.s32.totalorder %s42, %s45
    %p54 = scmp.eq.s32.totalorder %s13, 1
    %p55 = por %p53, %p54
    %p56 = scmp.ne.s32.totalorder %s45, %s46
    %p57 = scmp.eq.s32.totalorder %s13, 0
    %p58 = por %p56, %p57
    %p59 = scmp.ne.s32.totalorder %s45, %s46
    %p60 = scmp.eq.s32.totalorder %s14, 1
    %p61 = por %p59, %p60
    %p63 = scmp.ne.s32.totalorder %s46, %s62
    %p64 = scmp.eq.s32.totalorder %s14, 0
    %p65 = por %p63, %p64
    %s66 = ssub.s32 %s15, %s27
    %p67 = scmp.eq.s32.totalorder %s66, 0
    %s69 = sadd.s32 %s68, 1
    %s70 = scalar_select %p67, %s68, %s69
    %p73 = pneg %p67
    %p74 = scmp.eq.s32.totalorder %s8, 1
    %p75 = por %p73, %p74
    %p76 = scmp.ne.s32.totalorder %s68, %s71
    %p77 = scmp.eq.s32.totalorder %s8, 0
    %p78 = por %p76, %p77
    %p79 = scmp.ne.s32.totalorder %s68, %s71
    %p80 = scmp.eq.s32.totalorder %s13, 1
    %p81 = por %p79, %p80
    %p82 = scmp.ne.s32.totalorder %s71, %s72
    %p83 = scmp.eq.s32.totalorder %s13, 0
    %p84 = por %p82, %p83
    %p85 = scmp.ne.s32.totalorder %s71, %s72
    %p86 = scmp.eq.s32.totalorder %s14, 1
    %p87 = por %p85, %p86
    %p89 = scmp.ne.s32.totalorder %s72, %s88
    %p90 = scmp.eq.s32.totalorder %s14, 0
    %p91 = por %p89, %p90
    %s92 = ssub.s32 1, %s15
    %s93 = smul.u32 %s92, %s16
    %s94 = ssub.s32 0, %s16
    %s95 = smul.u32 %s15, %s94
    %s96 = sadd.s32 %s93, %s95
    %s97 = ssub.s32 1, %s27
    %s98 = smul.u32 %s97, %s23
    %s99 = ssub.s32 0, %s23
    %s100 = smul.u32 %s27, %s99
    %s101 = sadd.s32 %s98, %s100
    %s102 = ssub.s32 %s15, %s27
    %s103 = ssub.s32 %s96, %s101
    %s104 = sor.u32 %s102, %s103
    %p105 = scmp.eq.s32.totalorder %s104, 0
    %s107 = sadd.s32 %s106, 1
    %s108 = scalar_select %p105, %s106, %s107
    %p111 = pneg %p105
    %p112 = scmp.eq.s32.totalorder %s8, 1
    %p113 = por %p111, %p112
    %p114 = scmp.ne.s32.totalorder %s106, %s109
    %p115 = scmp.eq.s32.totalorder %s8, 0
    %p116 = por %p114, %p115
    %p117 = scmp.ne.s32.totalorder %s106, %s109
    %p118 = scmp.eq.s32.totalorder %s13, 1
    %p119 = por %p117, %p118
    %p120 = scmp.ne.s32.totalorder %s109, %s110
    %p121 = scmp.eq.s32.totalorder %s13, 0
    %p122 = por %p120, %p121
    %p123 = scmp.ne.s32.totalorder %s109, %s110
    %p124 = scmp.eq.s32.totalorder %s14, 1
    %p125 = por %p123, %p124
    %p127 = scmp.ne.s32.totalorder %s110, %s126
    %p128 = scmp.eq.s32.totalorder %s14, 0
    %p129 = por %p127, %p128
    %p130 = scmp.le.s32.totalorder 1, %s8
    %p131 = scmp.lt.s32.totalorder %s8, 3
    %p132 = pnand %p130, %p131
    %p133 = pneg %p132
    // Predicated region
    $region9: #{simple_lstm_forward.6} parent=5 // pred_check
      _
    $region10: #{simple_lstm_forward.6} parent=5 // pred_check_branch
      %135 = sbr.rel (%p132) target = $region12
    $region11: #{simple_lstm_forward.6} parent=5 // pred_region
      %s136 = ssub.s32 %s8, 1
    $region12: #{simple_lstm_forward.6} parent=5 // pred_fallthru
      _
    %p137 = scmp.lt.s32.totalorder %s8, 2
    // Predicated region
    $region13: #{simple_lstm_forward.6} parent=5 // pred_check
      %p138 = pneg %p137
    $region14: #{simple_lstm_forward.6} parent=5 // pred_check_branch
      %140 = sbr.rel (%p138) target = $region16
    $region15: #{simple_lstm_forward.6} parent=5 // pred_region
      // Predicated region
      $region17: #{simple_lstm_forward.6} parent=15 // pred_check
        %p141 = pneg %p52
      $region18: #{simple_lstm_forward.6} parent=15 // pred_check_branch
        %143 = sbr.rel (%p141) target = $region20
      $region19: #{simple_lstm_forward.6} parent=15 // pred_region
        %s144 = ssub.s32 1, %s15
        %s145 = smul.u32 %s144, %s16
        %s146 = ssub.s32 0, %s16
        %s147 = smul.u32 %s15, %s146
        %s148 = sadd.s32 %s145, %s147
        %s149 = smul.u32 8, %s148
        %p150 = scmp.lt.s32.totalorder %s15, 1
        %s151 = scalar_select %p150, %s15, 1
        %p152 = scmp.lt.s32.totalorder %s149, 7
        %s153 = scalar_select %p152, %s149, 7
        %s154 = smul.addr %s151, 8
        %s155 = sadd.s32 %s153, %s154
        %s156 = smul.addr %s155, 8
        %s157 = scalar_lea.vmem %s0, %s156
        %s158 = ssub.s32 1, %s15
        %s159 = smul.u32 %s158, %s16
        %s160 = ssub.s32 0, %s16
        %s161 = smul.u32 %s15, %s160
        %s162 = sadd.s32 %s159, %s161
        %s163 = smul.u32 8, %s162
      $region20: #{simple_lstm_forward.6} parent=15 // pred_fallthru
        _
      // Predicated region
      $region21: #{simple_lstm_forward.6} parent=15 // pred_check
        %p164 = pneg %p78
      $region22: #{simple_lstm_forward.6} parent=15 // pred_check_branch
        %166 = sbr.rel (%p164) target = $region24
      $region23: #{simple_lstm_forward.6} parent=15 // pred_region
        %p167 = scmp.lt.s32.totalorder %s15, 1
        %s168 = scalar_select %p167, %s15, 1
        %s169 = smul.addr %s168, 4
        %s170 = smul.addr %s169, 8
        %s171 = scalar_lea.vmem %s1, %s170
      $region24: #{simple_lstm_forward.6} parent=15 // pred_fallthru
        _
    $region16: #{simple_lstm_forward.6} parent=5 // pred_fallthru
      _
    %p172 = scmp.le.s32.totalorder 1, %s8
    %p173 = scmp.lt.s32.totalorder %s8, 3
    %p174 = pnand %p172, %p173
    %p175 = pneg %p174
    // Predicated region
    $region25: #{simple_lstm_forward.6} parent=5 // pred_check
      _
    $region26: #{simple_lstm_forward.6} parent=5 // pred_check_branch
      %177 = sbr.rel (%p174) target = $region28
    $region27: #{simple_lstm_forward.6} parent=5 // pred_region
      %s178 = ssub.s32 %s8, 1
      %s179 = ssub.s32 1, %s17
      %s180 = smul.u32 %s179, %s18
      %s181 = ssub.s32 0, %s18
      %s182 = smul.u32 %s17, %s181
      %s183 = sadd.s32 %s180, %s182
      %s184 = smul.u32 8, %s183
      %p185 = scmp.lt.s32.totalorder %s17, 1
      %s186 = scalar_select %p185, %s17, 1
      %p187 = scmp.lt.s32.totalorder %s184, 7
      %s188 = scalar_select %p187, %s184, 7
      %s189 = smul.addr %s186, 8
      %s190 = sadd.s32 %s188, %s189
      %s191 = smul.addr %s190, 8
      %s192 = scalar_lea.vmem %s0, %s191
      %p193 = pneg %p58
      %p194 = pneg %p55
      %p195 = scmp.lt.s32.totalorder %s17, 1
      %s196 = scalar_select %p195, %s17, 1
      %s197 = smul.addr %s196, 4
      %s198 = smul.addr %s197, 8
      %s199 = scalar_lea.vmem %s1, %s198
      %p200 = pneg %p84
      %p201 = pneg %p81
      %p202 = pneg %p122
      %p203 = pneg %p119
      %s204 = ssub.s32 1, %s17
      %s205 = smul.u32 %s204, %s18
      %s206 = ssub.s32 0, %s18
      %s207 = smul.u32 %s17, %s206
      %s208 = sadd.s32 %s205, %s207
      %s209 = smul.u32 8, %s208
      %p210 = scmp.lt.s32.totalorder %s17, 1
      %s211 = scalar_select %p210, %s17, 1
      %p212 = scmp.lt.s32.totalorder %s209, 7
      %s213 = scalar_select %p212, %s209, 7
      %s214 = smul.addr %s211, 8
      %s215 = sadd.s32 %s213, %s214
      %s216 = smul.addr %s215, 8
      %s217 = scalar_lea.vmem %s2, %s216
      %s218 = ssub.s32 1, %s17
      %s219 = smul.u32 %s218, %s18
      %s220 = ssub.s32 0, %s18
      %s221 = smul.u32 %s17, %s220
      %s222 = sadd.s32 %s219, %s221
      %s223 = smul.u32 8, %s222
      %p224 = scmp.lt.s32.totalorder %s17, 1
      %s225 = scalar_select %p224, %s17, 1
      %p226 = scmp.lt.s32.totalorder %s223, 7
      %s227 = scalar_select %p226, %s223, 7
      %s228 = smul.addr %s225, 8
      %s229 = sadd.s32 %s227, %s228
      %s230 = smul.addr %s229, 8
      %s231 = scalar_lea.vmem %s0, %s230
      %s232 = ssub.s32 1, %s17
      %s233 = smul.u32 %s232, %s18
      %s234 = ssub.s32 0, %s18
      %s235 = smul.u32 %s17, %s234
      %s236 = sadd.s32 %s233, %s235
      %s237 = smul.u32 8, %s236
      %p238 = scmp.lt.s32.totalorder %s17, 1
      %s239 = scalar_select %p238, %s17, 1
      %s240 = smul.addr %s239, 4
      %s241 = smul.addr %s240, 8
      %s242 = scalar_lea.vmem %s1, %s241
      %s243 = ssub.s32 1, %s17
      %s244 = smul.u32 %s243, %s18
      %s245 = ssub.s32 0, %s18
      %s246 = smul.u32 %s17, %s245
      %s247 = sadd.s32 %s244, %s246
      %s248 = smul.u32 8, %s247
      %p249 = scmp.lt.s32.totalorder %s17, 1
      %s250 = scalar_select %p249, %s17, 1
      %p251 = scmp.lt.s32.totalorder %s248, 7
      %s252 = scalar_select %p251, %s248, 7
      %s253 = smul.addr %s250, 8
      %s254 = sadd.s32 %s252, %s253
      %s255 = smul.addr %s254, 8
      %s256 = scalar_lea.vmem %s2, %s255
      %s257 = ssub.s32 1, %s17
      %s258 = smul.u32 %s257, %s18
      %s259 = ssub.s32 0, %s18
      %s260 = smul.u32 %s17, %s259
      %s261 = sadd.s32 %s258, %s260
      %s262 = smul.u32 8, %s261
      %p263 = scmp.eq.s32.totalorder %s18, 0
      // Predicated region
      $region29: #{simple_lstm_forward.6} parent=27 // pred_check
        %p264 = pneg %p263
      $region30: #{simple_lstm_forward.6} parent=27 // pred_check_branch
        %266 = sbr.rel (%p264) target = $region32
      $region31: #{simple_lstm_forward.6} parent=27 // pred_region
        %vm267 = vcmask 261120
        %268 = vst.msk [vmem:[#allocation2] sm:$0xff] %vm267, 0.0
        %269 = vst.msk [vmem:[#allocation3] sm:$0xff] %vm267, 0.0
      $region32: #{simple_lstm_forward.6} parent=27 // pred_fallthru
        _
      %v270 = vld [vmem:[%s242] sm:$0xff]
      %v271 = vld [vmem:[%s242 + $0x8] sm:$0xff]
      %v272 = vld [vmem:[%s242 + $0x10] sm:$0xff]
      %v273 = vld [vmem:[%s242 + $0x18] sm:$0xff]
      %v274 = vld [vmem:[#allocation2] sm:$0xff]
      %v275 = vld [vmem:[#allocation3] sm:$0xff]
      %s276 = smul.u32 %s17, 56
      %s277 = scalar_lea.vmem %s231, %s276
      %v278 = vld [vmem:[%s277] sm:$0xff]
      %vm279 = vcmask 261120
      %v281 = vsel %vm279, %v274, 0
      %283 = vmatprep.subr.mxu0 0.0
      %284 = vmatpush1.msra.mxu0 %v270
      %285 = vmatprep.subr.mxu0 0.0
      %286 = vmatpush1.msra.mxu0 %v271
      %287 = vmatprep.subr.mxu0 0.0
      %288 = vmatpush1.msra.mxu0 %v272
      %289 = vmatprep.subr.mxu0 0.0
      %290 = vmatpush1.msra.mxu0 %v273
      %291 = vmatprep.subr.mxu0 0.0
      %292 = vmatpush1.msra.mxu0 0.0
      %293 = vmatprep.subr.mxu0 0.0
      %294 = vmatpush1.msra.mxu0 0.0
      %295 = vmatprep.subr.mxu0 0.0
      %296 = vmatpush1.msra.mxu0 0.0
      %297 = vmatprep.subr.mxu0 0.0
      %298 = vmatpush1.msra.mxu0 0.0
      %299 = vmatprep.subr.mxu0 0.0
      %300 = vmatpush1.msra.mxu0 0.0
      %301 = vmatprep.subr.mxu0 0.0
      %302 = vmatpush1.msra.mxu0 0.0
      %303 = vmatprep.subr.mxu0 0.0
      %304 = vmatpush1.msra.mxu0 0.0
      %305 = vmatprep.subr.mxu0 0.0
      %306 = vmatpush1.msra.mxu0 0.0
      %307 = vmatprep.subr.mxu0 0.0
      %308 = vmatpush1.msra.mxu0 0.0
      %309 = vmatprep.subr.mxu0 0.0
      %310 = vmatpush1.msra.mxu0 0.0
      %311 = vmatprep.subr.mxu0 0.0
      %312 = vmatpush1.msra.mxu0 0.0
      %313 = vmatprep.subr.mxu0 0.0
      %314 = vmatpush1.msra.mxu0 0.0
      %315 = vmatprep.subr.mxu0 0.0
      %316 = vmatpush1.msra.mxu0 0.0
      %317 = vmatprep.subr.mxu0 0.0
      %318 = vmatpush1.msra.mxu0 0.0
      %319 = vmatprep.subr.mxu0 0.0
      %320 = vmatpush1.msra.mxu0 0.0
      %321 = vmatprep.subr.mxu0 0.0
      %322 = vmatpush1.msra.mxu0 0.0
      %323 = vmatprep.subr.mxu0 0.0
      %324 = vmatpush1.msra.mxu0 0.0
      %325 = vmatprep.subr.mxu0 0.0
      %326 = vmatpush1.msra.mxu0 0.0
      %327 = vmatprep.subr.mxu0 0.0
      %328 = vmatpush1.msra.mxu0 0.0
      %329 = vmatprep.subr.mxu0 0.0
      %330 = vmatpush1.msra.mxu0 0.0
      %331 = vmatprep.subr.mxu0 0.0
      %332 = vmatpush1.msra.mxu0 0.0
      %333 = vmatprep.subr.mxu0 0.0
      %334 = vmatpush1.msra.mxu0 0.0
      %335 = vmatprep.subr.mxu0 0.0
      %336 = vmatpush1.msra.mxu0 0.0
      %337 = vmatprep.subr.mxu0 0.0
      %338 = vmatpush1.msra.mxu0 0.0
      %339 = vmatprep.subr.mxu0 0.0
      %340 = vmatpush1.msra.mxu0 0.0
      %341 = vmatprep.subr.mxu0 0.0
      %342 = vmatpush1.msra.mxu0 0.0
      %343 = vmatprep.subr.mxu0 0.0
      %344 = vmatpush1.msra.mxu0 0.0
      %345 = vmatprep.subr.mxu0 0.0
      %346 = vmatpush1.msra.mxu0 0.0
      %347 = vmatprep.mubr.f32.mxu0 0.0
      %348 = vmatmul.mubr.f32.gmra.mrb[0].mxu0 %v281
      %v349 = vpop.f32.mrb[0].mxu0
      %v350 = vadd.f32 0.0, %v349
      %v351 = vpop.f32.mrb[0].mxu0
      %352 = vdwg.mxu0
      %v353 = vadd.f32 %v278, %v350
      %v354 = vxor.u32 %v353, 2147483648
      %v355 = vmul.f32 %v354, 1.442695
      %v356 = vpow.pop %v355
      %v357 = vadd.f32 %v356, 1.0
      %v358 = vrcp.pop %v357
      %v359 = vmul.f32 1.0, %v358
      %v360 = vtanh.pop %v353
      %362 = vrot.lane.b32.xlu0 %v275, 32
      %v363 = vpop.permute.xlu0 %362
      %v365 = vmul.f32 %v359, %v363
      %367 = vrot.lane.b32.xlu0 %v360, 64
      %v368 = vpop.permute.xlu0 %367
      %v370 = vmul.f32 %v359, %v368
      %372 = vrot.lane.b32.xlu0 %v370, 32
      %v373 = vpop.permute.xlu0 %372
      %v375 = vadd.f32 %v365, %v373
      %v376 = vtanh.pop %v375
      %378 = vrot.lane.b32.xlu0 %v376, 64
      %v379 = vpop.permute.xlu0 %378
      %v381 = vmul.f32 %v359, %v379
      %383 = vrot.lane.b32.xlu0 %v381, 32
      %v384 = vpop.permute.xlu0 %383
      %s386 = scalar_lea.vmem %s256, %s276
      %387 = vst.msk [vmem:[%s386] sm:$0xff] %vm279, %v384
      %s388 = ssub.s32 1, %s17
      %s389 = smul.u32 %s17, 6
      %s390 = sadd.s32 %s388, %s389
      %s391 = smul.u32 %s390, 8
      %s392 = scalar_lea.vmem %s231, %s391
      %v393 = vld [vmem:[%s392] sm:$0xff]
      %v394 = vsel %vm279, %v384, 0
      %396 = vmatprep.subr.mxu0 0.0
      %397 = vmatpush1.msra.mxu0 %v270
      %398 = vmatprep.subr.mxu0 0.0
      %399 = vmatpush1.msra.mxu0 %v271
      %400 = vmatprep.subr.mxu0 0.0
      %401 = vmatpush1.msra.mxu0 %v272
      %402 = vmatprep.subr.mxu0 0.0
      %403 = vmatpush1.msra.mxu0 %v273
      %404 = vmatprep.subr.mxu0 0.0
      %405 = vmatpush1.msra.mxu0 0.0
      %406 = vmatprep.subr.mxu0 0.0
      %407 = vmatpush1.msra.mxu0 0.0
      %408 = vmatprep.subr.mxu0 0.0
      %409 = vmatpush1.msra.mxu0 0.0
      %410 = vmatprep.subr.mxu0 0.0
      %411 = vmatpush1.msra.mxu0 0.0
      %412 = vmatprep.subr.mxu0 0.0
      %413 = vmatpush1.msra.mxu0 0.0
      %414 = vmatprep.subr.mxu0 0.0
      %415 = vmatpush1.msra.mxu0 0.0
      %416 = vmatprep.subr.mxu0 0.0
      %417 = vmatpush1.msra.mxu0 0.0
      %418 = vmatprep.subr.mxu0 0.0
      %419 = vmatpush1.msra.mxu0 0.0
      %420 = vmatprep.subr.mxu0 0.0
      %421 = vmatpush1.msra.mxu0 0.0
      %422 = vmatprep.subr.mxu0 0.0
      %423 = vmatpush1.msra.mxu0 0.0
      %424 = vmatprep.subr.mxu0 0.0
      %425 = vmatpush1.msra.mxu0 0.0
      %426 = vmatprep.subr.mxu0 0.0
      %427 = vmatpush1.msra.mxu0 0.0
      %428 = vmatprep.subr.mxu0 0.0
      %429 = vmatpush1.msra.mxu0 0.0
      %430 = vmatprep.subr.mxu0 0.0
      %431 = vmatpush1.msra.mxu0 0.0
      %432 = vmatprep.subr.mxu0 0.0
      %433 = vmatpush1.msra.mxu0 0.0
      %434 = vmatprep.subr.mxu0 0.0
      %435 = vmatpush1.msra.mxu0 0.0
      %436 = vmatprep.subr.mxu0 0.0
      %437 = vmatpush1.msra.mxu0 0.0
      %438 = vmatprep.subr.mxu0 0.0
      %439 = vmatpush1.msra.mxu0 0.0
      %440 = vmatprep.subr.mxu0 0.0
      %441 = vmatpush1.msra.mxu0 0.0
      %442 = vmatprep.subr.mxu0 0.0
      %443 = vmatpush1.msra.mxu0 0.0
      %444 = vmatprep.subr.mxu0 0.0
      %445 = vmatpush1.msra.mxu0 0.0
      %446 = vmatprep.subr.mxu0 0.0
      %447 = vmatpush1.msra.mxu0 0.0
      %448 = vmatprep.subr.mxu0 0.0
      %449 = vmatpush1.msra.mxu0 0.0
      %450 = vmatprep.subr.mxu0 0.0
      %451 = vmatpush1.msra.mxu0 0.0
      %452 = vmatprep.subr.mxu0 0.0
      %453 = vmatpush1.msra.mxu0 0.0
      %454 = vmatprep.subr.mxu0 0.0
      %455 = vmatpush1.msra.mxu0 0.0
      %456 = vmatprep.subr.mxu0 0.0
      %457 = vmatpush1.msra.mxu0 0.0
      %458 = vmatprep.subr.mxu0 0.0
      %459 = vmatpush1.msra.mxu0 0.0
      %460 = vmatprep.mubr.f32.mxu0 0.0
      %461 = vmatmul.mubr.f32.gmra.mrb[0].mxu0 %v394
      %v462 = vpop.f32.mrb[0].mxu0
      %v463 = vadd.f32 0.0, %v462
      %v464 = vpop.f32.mrb[0].mxu0
      %465 = vdwg.mxu0
      %v466 = vadd.f32 %v393, %v463
      %v467 = vxor.u32 %v466, 2147483648
      %v468 = vmul.f32 %v467, 1.442695
      %v469 = vpow.pop %v468
      %v470 = vadd.f32 %v469, 1.0
      %v471 = vrcp.pop %v470
      %v472 = vmul.f32 1.0, %v471
      %v473 = vtanh.pop %v466
      %v474 = vmul.f32 %v472, %v375
      %476 = vrot.lane.b32.xlu0 %v473, 64
      %v477 = vpop.permute.xlu0 %476
      %v479 = vmul.f32 %v472, %v477
      %481 = vrot.lane.b32.xlu0 %v479, 32
      %v482 = vpop.permute.xlu0 %481
      %v484 = vadd.f32 %v474, %v482
      %v485 = vtanh.pop %v484
      %487 = vrot.lane.b32.xlu0 %v485, 64
      %v488 = vpop.permute.xlu0 %487
      %v490 = vmul.f32 %v472, %v488
      %492 = vrot.lane.b32.xlu0 %v490, 32
      %v493 = vpop.permute.xlu0 %492
      %s495 = scalar_lea.vmem %s256, %s391
      %496 = vst.msk [vmem:[%s495] sm:$0xff] %vm279, %v493
      %s497 = smul.u32 %s388, 2
      %s498 = smul.u32 %s17, 5
      %s499 = sadd.s32 %s497, %s498
      %s500 = smul.u32 %s499, 8
      %s501 = scalar_lea.vmem %s231, %s500
      %v502 = vld [vmem:[%s501] sm:$0xff]
      %v503 = vsel %vm279, %v493, 0
      %505 = vmatprep.subr.mxu0 0.0
      %506 = vmatpush1.msra.mxu0 %v270
      %507 = vmatprep.subr.mxu0 0.0
      %508 = vmatpush1.msra.mxu0 %v271
      %509 = vmatprep.subr.mxu0 0.0
      %510 = vmatpush1.msra.mxu0 %v272
      %511 = vmatprep.subr.mxu0 0.0
      %512 = vmatpush1.msra.mxu0 %v273
      %513 = vmatprep.subr.mxu0 0.0
      %514 = vmatpush1.msra.mxu0 0.0
      %515 = vmatprep.subr.mxu0 0.0
      %516 = vmatpush1.msra.mxu0 0.0
      %517 = vmatprep.subr.mxu0 0.0
      %518 = vmatpush1.msra.mxu0 0.0
      %519 = vmatprep.subr.mxu0 0.0
      %520 = vmatpush1.msra.mxu0 0.0
      %521 = vmatprep.subr.mxu0 0.0
      %522 = vmatpush1.msra.mxu0 0.0
      %523 = vmatprep.subr.mxu0 0.0
      %524 = vmatpush1.msra.mxu0 0.0
      %525 = vmatprep.subr.mxu0 0.0
      %526 = vmatpush1.msra.mxu0 0.0
      %527 = vmatprep.subr.mxu0 0.0
      %528 = vmatpush1.msra.mxu0 0.0
      %529 = vmatprep.subr.mxu0 0.0
      %530 = vmatpush1.msra.mxu0 0.0
      %531 = vmatprep.subr.mxu0 0.0
      %532 = vmatpush1.msra.mxu0 0.0
      %533 = vmatprep.subr.mxu0 0.0
      %534 = vmatpush1.msra.mxu0 0.0
      %535 = vmatprep.subr.mxu0 0.0
      %536 = vmatpush1.msra.mxu0 0.0
      %537 = vmatprep.subr.mxu0 0.0
      %538 = vmatpush1.msra.mxu0 0.0
      %539 = vmatprep.subr.mxu0 0.0
      %540 = vmatpush1.msra.mxu0 0.0
      %541 = vmatprep.subr.mxu0 0.0
      %542 = vmatpush1.msra.mxu0 0.0
      %543 = vmatprep.subr.mxu0 0.0
      %544 = vmatpush1.msra.mxu0 0.0
      %545 = vmatprep.subr.mxu0 0.0
      %546 = vmatpush1.msra.mxu0 0.0
      %547 = vmatprep.subr.mxu0 0.0
      %548 = vmatpush1.msra.mxu0 0.0
      %549 = vmatprep.subr.mxu0 0.0
      %550 = vmatpush1.msra.mxu0 0.0
      %551 = vmatprep.subr.mxu0 0.0
      %552 = vmatpush1.msra.mxu0 0.0
      %553 = vmatprep.subr.mxu0 0.0
      %554 = vmatpush1.msra.mxu0 0.0
      %555 = vmatprep.subr.mxu0 0.0
      %556 = vmatpush1.msra.mxu0 0.0
      %557 = vmatprep.subr.mxu0 0.0
      %558 = vmatpush1.msra.mxu0 0.0
      %559 = vmatprep.subr.mxu0 0.0
      %560 = vmatpush1.msra.mxu0 0.0
      %561 = vmatprep.subr.mxu0 0.0
      %562 = vmatpush1.msra.mxu0 0.0
      %563 = vmatprep.subr.mxu0 0.0
      %564 = vmatpush1.msra.mxu0 0.0
      %565 = vmatprep.subr.mxu0 0.0
      %566 = vmatpush1.msra.mxu0 0.0
      %567 = vmatprep.subr.mxu0 0.0
      %568 = vmatpush1.msra.mxu0 0.0
      %569 = vmatprep.mubr.f32.mxu0 0.0
      %570 = vmatmul.mubr.f32.gmra.mrb[0].mxu0 %v503
      %v571 = vpop.f32.mrb[0].mxu0
      %v572 = vadd.f32 0.0, %v571
      %v573 = vpop.f32.mrb[0].mxu0
      %574 = vdwg.mxu0
      %v575 = vadd.f32 %v502, %v572
      %v576 = vxor.u32 %v575, 2147483648
      %v577 = vmul.f32 %v576, 1.442695
      %v578 = vpow.pop %v577
      %v579 = vadd.f32 %v578, 1.0
      %v580 = vrcp.pop %v579
      %v581 = vmul.f32 1.0, %v580
      %v582 = vtanh.pop %v575
      %v583 = vmul.f32 %v581, %v484
      %585 = vrot.lane.b32.xlu0 %v582, 64
      %v586 = vpop.permute.xlu0 %585
      %v588 = vmul.f32 %v581, %v586
      %590 = vrot.lane.b32.xlu0 %v588, 32
      %v591 = vpop.permute.xlu0 %590
      %v593 = vadd.f32 %v583, %v591
      %v594 = vtanh.pop %v593
      %596 = vrot.lane.b32.xlu0 %v594, 64
      %v597 = vpop.permute.xlu0 %596
      %v599 = vmul.f32 %v581, %v597
      %601 = vrot.lane.b32.xlu0 %v599, 32
      %v602 = vpop.permute.xlu0 %601
      %s604 = scalar_lea.vmem %s256, %s500
      %605 = vst.msk [vmem:[%s604] sm:$0xff] %vm279, %v602
      %s606 = smul.u32 %s388, 3
      %s607 = smul.u32 %s17, 4
      %s608 = sadd.s32 %s606, %s607
      %s609 = smul.u32 %s608, 8
      %s610 = scalar_lea.vmem %s231, %s609
      %v611 = vld [vmem:[%s610] sm:$0xff]
      %v612 = vsel %vm279, %v602, 0
      %614 = vmatprep.subr.mxu0 0.0
      %615 = vmatpush1.msra.mxu0 %v270
      %616 = vmatprep.subr.mxu0 0.0
      %617 = vmatpush1.msra.mxu0 %v271
      %618 = vmatprep.subr.mxu0 0.0
      %619 = vmatpush1.msra.mxu0 %v272
      %620 = vmatprep.subr.mxu0 0.0
      %621 = vmatpush1.msra.mxu0 %v273
      %622 = vmatprep.subr.mxu0 0.0
      %623 = vmatpush1.msra.mxu0 0.0
      %624 = vmatprep.subr.mxu0 0.0
      %625 = vmatpush1.msra.mxu0 0.0
      %626 = vmatprep.subr.mxu0 0.0
      %627 = vmatpush1.msra.mxu0 0.0
      %628 = vmatprep.subr.mxu0 0.0
      %629 = vmatpush1.msra.mxu0 0.0
      %630 = vmatprep.subr.mxu0 0.0
      %631 = vmatpush1.msra.mxu0 0.0
      %632 = vmatprep.subr.mxu0 0.0
      %633 = vmatpush1.msra.mxu0 0.0
      %634 = vmatprep.subr.mxu0 0.0
      %635 = vmatpush1.msra.mxu0 0.0
      %636 = vmatprep.subr.mxu0 0.0
      %637 = vmatpush1.msra.mxu0 0.0
      %638 = vmatprep.subr.mxu0 0.0
      %639 = vmatpush1.msra.mxu0 0.0
      %640 = vmatprep.subr.mxu0 0.0
      %641 = vmatpush1.msra.mxu0 0.0
      %642 = vmatprep.subr.mxu0 0.0
      %643 = vmatpush1.msra.mxu0 0.0
      %644 = vmatprep.subr.mxu0 0.0
      %645 = vmatpush1.msra.mxu0 0.0
      %646 = vmatprep.subr.mxu0 0.0
      %647 = vmatpush1.msra.mxu0 0.0
      %648 = vmatprep.subr.mxu0 0.0
      %649 = vmatpush1.msra.mxu0 0.0
      %650 = vmatprep.subr.mxu0 0.0
      %651 = vmatpush1.msra.mxu0 0.0
      %652 = vmatprep.subr.mxu0 0.0
      %653 = vmatpush1.msra.mxu0 0.0
      %654 = vmatprep.subr.mxu0 0.0
      %655 = vmatpush1.msra.mxu0 0.0
      %656 = vmatprep.subr.mxu0 0.0
      %657 = vmatpush1.msra.mxu0 0.0
      %658 = vmatprep.subr.mxu0 0.0
      %659 = vmatpush1.msra.mxu0 0.0
      %660 = vmatprep.subr.mxu0 0.0
      %661 = vmatpush1.msra.mxu0 0.0
      %662 = vmatprep.subr.mxu0 0.0
      %663 = vmatpush1.msra.mxu0 0.0
      %664 = vmatprep.subr.mxu0 0.0
      %665 = vmatpush1.msra.mxu0 0.0
      %666 = vmatprep.subr.mxu0 0.0
      %667 = vmatpush1.msra.mxu0 0.0
      %668 = vmatprep.subr.mxu0 0.0
      %669 = vmatpush1.msra.mxu0 0.0
      %670 = vmatprep.subr.mxu0 0.0
      %671 = vmatpush1.msra.mxu0 0.0
      %672 = vmatprep.subr.mxu0 0.0
      %673 = vmatpush1.msra.mxu0 0.0
      %674 = vmatprep.subr.mxu0 0.0
      %675 = vmatpush1.msra.mxu0 0.0
      %676 = vmatprep.subr.mxu0 0.0
      %677 = vmatpush1.msra.mxu0 0.0
      %678 = vmatprep.mubr.f32.mxu0 0.0
      %679 = vmatmul.mubr.f32.gmra.mrb[0].mxu0 %v612
      %v680 = vpop.f32.mrb[0].mxu0
      %v681 = vadd.f32 0.0, %v680
      %v682 = vpop.f32.mrb[0].mxu0
      %683 = vdwg.mxu0
      %v684 = vadd.f32 %v611, %v681
      %v685 = vxor.u32 %v684, 2147483648
      %v686 = vmul.f32 %v685, 1.442695
      %v687 = vpow.pop %v686
      %v688 = vadd.f32 %v687, 1.0
      %v689 = vrcp.pop %v688
      %v690 = vmul.f32 1.0, %v689
      %v691 = vtanh.pop %v684
      %v692 = vmul.f32 %v690, %v593
      %694 = vrot.lane.b32.xlu0 %v691, 64
      %v695 = vpop.permute.xlu0 %694
      %v697 = vmul.f32 %v690, %v695
      %699 = vrot.lane.b32.xlu0 %v697, 32
      %v700 = vpop.permute.xlu0 %699
      %v702 = vadd.f32 %v692, %v700
      %v703 = vtanh.pop %v702
      %705 = vrot.lane.b32.xlu0 %v703, 64
      %v706 = vpop.permute.xlu0 %705
      %v708 = vmul.f32 %v690, %v706
      %710 = vrot.lane.b32.xlu0 %v708, 32
      %v711 = vpop.permute.xlu0 %710
      %s713 = scalar_lea.vmem %s256, %s609
      %714 = vst.msk [vmem:[%s713] sm:$0xff] %vm279, %v711
      %s715 = smul.u32 %s388, 4
      %s716 = smul.u32 %s17, 3
      %s717 = sadd.s32 %s715, %s716
      %s718 = smul.u32 %s717, 8
      %s719 = scalar_lea.vmem %s231, %s718
      %v720 = vld [vmem:[%s719] sm:$0xff]
      %v721 = vsel %vm279, %v711, 0
      %723 = vmatprep.subr.mxu0 0.0
      %724 = vmatpush1.msra.mxu0 %v270
      %725 = vmatprep.subr.mxu0 0.0
      %726 = vmatpush1.msra.mxu0 %v271
      %727 = vmatprep.subr.mxu0 0.0
      %728 = vmatpush1.msra.mxu0 %v272
      %729 = vmatprep.subr.mxu0 0.0
      %730 = vmatpush1.msra.mxu0 %v273
      %731 = vmatprep.subr.mxu0 0.0
      %732 = vmatpush1.msra.mxu0 0.0
      %733 = vmatprep.subr.mxu0 0.0
      %734 = vmatpush1.msra.mxu0 0.0
      %735 = vmatprep.subr.mxu0 0.0
      %736 = vmatpush1.msra.mxu0 0.0
      %737 = vmatprep.subr.mxu0 0.0
      %738 = vmatpush1.msra.mxu0 0.0
      %739 = vmatprep.subr.mxu0 0.0
      %740 = vmatpush1.msra.mxu0 0.0
      %741 = vmatprep.subr.mxu0 0.0
      %742 = vmatpush1.msra.mxu0 0.0
      %743 = vmatprep.subr.mxu0 0.0
      %744 = vmatpush1.msra.mxu0 0.0
      %745 = vmatprep.subr.mxu0 0.0
      %746 = vmatpush1.msra.mxu0 0.0
      %747 = vmatprep.subr.mxu0 0.0
      %748 = vmatpush1.msra.mxu0 0.0
      %749 = vmatprep.subr.mxu0 0.0
      %750 = vmatpush1.msra.mxu0 0.0
      %751 = vmatprep.subr.mxu0 0.0
      %752 = vmatpush1.msra.mxu0 0.0
      %753 = vmatprep.subr.mxu0 0.0
      %754 = vmatpush1.msra.mxu0 0.0
      %755 = vmatprep.subr.mxu0 0.0
      %756 = vmatpush1.msra.mxu0 0.0
      %757 = vmatprep.subr.mxu0 0.0
      %758 = vmatpush1.msra.mxu0 0.0
      %759 = vmatprep.subr.mxu0 0.0
      %760 = vmatpush1.msra.mxu0 0.0
      %761 = vmatprep.subr.mxu0 0.0
      %762 = vmatpush1.msra.mxu0 0.0
      %763 = vmatprep.subr.mxu0 0.0
      %764 = vmatpush1.msra.mxu0 0.0
      %765 = vmatprep.subr.mxu0 0.0
      %766 = vmatpush1.msra.mxu0 0.0
      %767 = vmatprep.subr.mxu0 0.0
      %768 = vmatpush1.msra.mxu0 0.0
      %769 = vmatprep.subr.mxu0 0.0
      %770 = vmatpush1.msra.mxu0 0.0
      %771 = vmatprep.subr.mxu0 0.0
      %772 = vmatpush1.msra.mxu0 0.0
      %773 = vmatprep.subr.mxu0 0.0
      %774 = vmatpush1.msra.mxu0 0.0
      %775 = vmatprep.subr.mxu0 0.0
      %776 = vmatpush1.msra.mxu0 0.0
      %777 = vmatprep.subr.mxu0 0.0
      %778 = vmatpush1.msra.mxu0 0.0
      %779 = vmatprep.subr.mxu0 0.0
      %780 = vmatpush1.msra.mxu0 0.0
      %781 = vmatprep.subr.mxu0 0.0
      %782 = vmatpush1.msra.mxu0 0.0
      %783 = vmatprep.subr.mxu0 0.0
      %784 = vmatpush1.msra.mxu0 0.0
      %785 = vmatprep.subr.mxu0 0.0
      %786 = vmatpush1.msra.mxu0 0.0
      %787 = vmatprep.mubr.f32.mxu0 0.0
      %788 = vmatmul.mubr.f32.gmra.mrb[0].mxu0 %v721
      %v789 = vpop.f32.mrb[0].mxu0
      %v790 = vadd.f32 0.0, %v789
      %v791 = vpop.f32.mrb[0].mxu0
      %792 = vdwg.mxu0
      %v793 = vadd.f32 %v720, %v790
      %v794 = vxor.u32 %v793, 2147483648
      %v795 = vmul.f32 %v794, 1.442695
      %v796 = vpow.pop %v795
      %v797 = vadd.f32 %v796, 1.0
      %v798 = vrcp.pop %v797
      %v799 = vmul.f32 1.0, %v798
      %v800 = vtanh.pop %v793
      %v801 = vmul.f32 %v799, %v702
      %803 = vrot.lane.b32.xlu0 %v800, 64
      %v804 = vpop.permute.xlu0 %803
      %v806 = vmul.f32 %v799, %v804
      %808 = vrot.lane.b32.xlu0 %v806, 32
      %v809 = vpop.permute.xlu0 %808
      %v811 = vadd.f32 %v801, %v809
      %v812 = vtanh.pop %v811
      %814 = vrot.lane.b32.xlu0 %v812, 64
      %v815 = vpop.permute.xlu0 %814
      %v817 = vmul.f32 %v799, %v815
      %819 = vrot.lane.b32.xlu0 %v817, 32
      %v820 = vpop.permute.xlu0 %819
      %s822 = scalar_lea.vmem %s256, %s718
      %823 = vst.msk [vmem:[%s822] sm:$0xff] %vm279, %v820
      %s824 = smul.u32 %s388, 5
      %s825 = smul.u32 %s17, 2
      %s826 = sadd.s32 %s824, %s825
      %s827 = smul.u32 %s826, 8
      %s828 = scalar_lea.vmem %s231, %s827
      %v829 = vld [vmem:[%s828] sm:$0xff]
      %v830 = vsel %vm279, %v820, 0
      %832 = vmatprep.subr.mxu0 0.0
      %833 = vmatpush1.msra.mxu0 %v270
      %834 = vmatprep.subr.mxu0 0.0
      %835 = vmatpush1.msra.mxu0 %v271
      %836 = vmatprep.subr.mxu0 0.0
      %837 = vmatpush1.msra.mxu0 %v272
      %838 = vmatprep.subr.mxu0 0.0
      %839 = vmatpush1.msra.mxu0 %v273
      %840 = vmatprep.subr.mxu0 0.0
      %841 = vmatpush1.msra.mxu0 0.0
      %842 = vmatprep.subr.mxu0 0.0
      %843 = vmatpush1.msra.mxu0 0.0
      %844 = vmatprep.subr.mxu0 0.0
      %845 = vmatpush1.msra.mxu0 0.0
      %846 = vmatprep.subr.mxu0 0.0
      %847 = vmatpush1.msra.mxu0 0.0
      %848 = vmatprep.subr.mxu0 0.0
      %849 = vmatpush1.msra.mxu0 0.0
      %850 = vmatprep.subr.mxu0 0.0
      %851 = vmatpush1.msra.mxu0 0.0
      %852 = vmatprep.subr.mxu0 0.0
      %853 = vmatpush1.msra.mxu0 0.0
      %854 = vmatprep.subr.mxu0 0.0
      %855 = vmatpush1.msra.mxu0 0.0
      %856 = vmatprep.subr.mxu0 0.0
      %857 = vmatpush1.msra.mxu0 0.0
      %858 = vmatprep.subr.mxu0 0.0
      %859 = vmatpush1.msra.mxu0 0.0
      %860 = vmatprep.subr.mxu0 0.0
      %861 = vmatpush1.msra.mxu0 0.0
      %862 = vmatprep.subr.mxu0 0.0
      %863 = vmatpush1.msra.mxu0 0.0
      %864 = vmatprep.subr.mxu0 0.0
      %865 = vmatpush1.msra.mxu0 0.0
      %866 = vmatprep.subr.mxu0 0.0
      %867 = vmatpush1.msra.mxu0 0.0
      %868 = vmatprep.subr.mxu0 0.0
      %869 = vmatpush1.msra.mxu0 0.0
      %870 = vmatprep.subr.mxu0 0.0
      %871 = vmatpush1.msra.mxu0 0.0
      %872 = vmatprep.subr.mxu0 0.0
      %873 = vmatpush1.msra.mxu0 0.0
      %874 = vmatprep.subr.mxu0 0.0
      %875 = vmatpush1.msra.mxu0 0.0
      %876 = vmatprep.subr.mxu0 0.0
      %877 = vmatpush1.msra.mxu0 0.0
      %878 = vmatprep.subr.mxu0 0.0
      %879 = vmatpush1.msra.mxu0 0.0
      %880 = vmatprep.subr.mxu0 0.0
      %881 = vmatpush1.msra.mxu0 0.0
      %882 = vmatprep.subr.mxu0 0.0
      %883 = vmatpush1.msra.mxu0 0.0
      %884 = vmatprep.subr.mxu0 0.0
      %885 = vmatpush1.msra.mxu0 0.0
      %886 = vmatprep.subr.mxu0 0.0
      %887 = vmatpush1.msra.mxu0 0.0
      %888 = vmatprep.subr.mxu0 0.0
      %889 = vmatpush1.msra.mxu0 0.0
      %890 = vmatprep.subr.mxu0 0.0
      %891 = vmatpush1.msra.mxu0 0.0
      %892 = vmatprep.subr.mxu0 0.0
      %893 = vmatpush1.msra.mxu0 0.0
      %894 = vmatprep.subr.mxu0 0.0
      %895 = vmatpush1.msra.mxu0 0.0
      %896 = vmatprep.mubr.f32.mxu0 0.0
      %897 = vmatmul.mubr.f32.gmra.mrb[0].mxu0 %v830
      %v898 = vpop.f32.mrb[0].mxu0
      %v899 = vadd.f32 0.0, %v898
      %v900 = vpop.f32.mrb[0].mxu0
      %901 = vdwg.mxu0
      %v902 = vadd.f32 %v829, %v899
      %v903 = vxor.u32 %v902, 2147483648
      %v904 = vmul.f32 %v903, 1.442695
      %v905 = vpow.pop %v904
      %v906 = vadd.f32 %v905, 1.0
      %v907 = vrcp.pop %v906
      %v908 = vmul.f32 1.0, %v907
      %v909 = vtanh.pop %v902
      %v910 = vmul.f32 %v908, %v811
      %912 = vrot.lane.b32.xlu0 %v909, 64
      %v913 = vpop.permute.xlu0 %912
      %v915 = vmul.f32 %v908, %v913
      %917 = vrot.lane.b32.xlu0 %v915, 32
      %v918 = vpop.permute.xlu0 %917
      %v920 = vadd.f32 %v910, %v918
      %v921 = vtanh.pop %v920
      %923 = vrot.lane.b32.xlu0 %v921, 64
      %v924 = vpop.permute.xlu0 %923
      %v926 = vmul.f32 %v908, %v924
      %928 = vrot.lane.b32.xlu0 %v926, 32
      %v929 = vpop.permute.xlu0 %928
      %s931 = scalar_lea.vmem %s256, %s827
      %932 = vst.msk [vmem:[%s931] sm:$0xff] %vm279, %v929
      %s933 = smul.u32 %s388, 6
      %s934 = sadd.s32 %s933, %s17
      %s935 = smul.u32 %s934, 8
      %s936 = scalar_lea.vmem %s231, %s935
      %v937 = vld [vmem:[%s936] sm:$0xff]
      %v938 = vsel %vm279, %v929, 0
      %940 = vmatprep.subr.mxu0 0.0
      %941 = vmatpush1.msra.mxu0 %v270
      %942 = vmatprep.subr.mxu0 0.0
      %943 = vmatpush1.msra.mxu0 %v271
      %944 = vmatprep.subr.mxu0 0.0
      %945 = vmatpush1.msra.mxu0 %v272
      %946 = vmatprep.subr.mxu0 0.0
      %947 = vmatpush1.msra.mxu0 %v273
      %948 = vmatprep.subr.mxu0 0.0
      %949 = vmatpush1.msra.mxu0 0.0
      %950 = vmatprep.subr.mxu0 0.0
      %951 = vmatpush1.msra.mxu0 0.0
      %952 = vmatprep.subr.mxu0 0.0
      %953 = vmatpush1.msra.mxu0 0.0
      %954 = vmatprep.subr.mxu0 0.0
      %955 = vmatpush1.msra.mxu0 0.0
      %956 = vmatprep.subr.mxu0 0.0
      %957 = vmatpush1.msra.mxu0 0.0
      %958 = vmatprep.subr.mxu0 0.0
      %959 = vmatpush1.msra.mxu0 0.0
      %960 = vmatprep.subr.mxu0 0.0
      %961 = vmatpush1.msra.mxu0 0.0
      %962 = vmatprep.subr.mxu0 0.0
      %963 = vmatpush1.msra.mxu0 0.0
      %964 = vmatprep.subr.mxu0 0.0
      %965 = vmatpush1.msra.mxu0 0.0
      %966 = vmatprep.subr.mxu0 0.0
      %967 = vmatpush1.msra.mxu0 0.0
      %968 = vmatprep.subr.mxu0 0.0
      %969 = vmatpush1.msra.mxu0 0.0
      %970 = vmatprep.subr.mxu0 0.0
      %971 = vmatpush1.msra.mxu0 0.0
      %972 = vmatprep.subr.mxu0 0.0
      %973 = vmatpush1.msra.mxu0 0.0
      %974 = vmatprep.subr.mxu0 0.0
      %975 = vmatpush1.msra.mxu0 0.0
      %976 = vmatprep.subr.mxu0 0.0
      %977 = vmatpush1.msra.mxu0 0.0
      %978 = vmatprep.subr.mxu0 0.0
      %979 = vmatpush1.msra.mxu0 0.0
      %980 = vmatprep.subr.mxu0 0.0
      %981 = vmatpush1.msra.mxu0 0.0
      %982 = vmatprep.subr.mxu0 0.0
      %983 = vmatpush1.msra.mxu0 0.0
      %984 = vmatprep.subr.mxu0 0.0
      %985 = vmatpush1.msra.mxu0 0.0
      %986 = vmatprep.subr.mxu0 0.0
      %987 = vmatpush1.msra.mxu0 0.0
      %988 = vmatprep.subr.mxu0 0.0
      %989 = vmatpush1.msra.mxu0 0.0
      %990 = vmatprep.subr.mxu0 0.0
      %991 = vmatpush1.msra.mxu0 0.0
      %992 = vmatprep.subr.mxu0 0.0
      %993 = vmatpush1.msra.mxu0 0.0
      %994 = vmatprep.subr.mxu0 0.0
      %995 = vmatpush1.msra.mxu0 0.0
      %996 = vmatprep.subr.mxu0 0.0
      %997 = vmatpush1.msra.mxu0 0.0
      %998 = vmatprep.subr.mxu0 0.0
      %999 = vmatpush1.msra.mxu0 0.0
      %1000 = vmatprep.subr.mxu0 0.0
      %1001 = vmatpush1.msra.mxu0 0.0
      %1002 = vmatprep.subr.mxu0 0.0
      %1003 = vmatpush1.msra.mxu0 0.0
      %1004 = vmatprep.mubr.f32.mxu0 0.0
      %1005 = vmatmul.mubr.f32.gmra.mrb[0].mxu0 %v938
      %v1006 = vpop.f32.mrb[0].mxu0
      %v1007 = vadd.f32 0.0, %v1006
      %v1008 = vpop.f32.mrb[0].mxu0
      %1009 = vdwg.mxu0
      %v1010 = vadd.f32 %v937, %v1007
      %v1011 = vxor.u32 %v1010, 2147483648
      %v1012 = vmul.f32 %v1011, 1.442695
      %v1013 = vpow.pop %v1012
      %v1014 = vadd.f32 %v1013, 1.0
      %v1015 = vrcp.pop %v1014
      %v1016 = vmul.f32 1.0, %v1015
      %v1017 = vtanh.pop %v1010
      %v1018 = vmul.f32 %v1016, %v920
      %1020 = vrot.lane.b32.xlu0 %v1017, 64
      %v1021 = vpop.permute.xlu0 %1020
      %v1023 = vmul.f32 %v1016, %v1021
      %1025 = vrot.lane.b32.xlu0 %v1023, 32
      %v1026 = vpop.permute.xlu0 %1025
      %v1028 = vadd.f32 %v1018, %v1026
      %v1029 = vtanh.pop %v1028
      %1031 = vrot.lane.b32.xlu0 %v1029, 64
      %v1032 = vpop.permute.xlu0 %1031
      %v1034 = vmul.f32 %v1016, %v1032
      %1036 = vrot.lane.b32.xlu0 %v1034, 32
      %v1037 = vpop.permute.xlu0 %1036
      %s1039 = scalar_lea.vmem %s256, %s935
      %1040 = vst.msk [vmem:[%s1039] sm:$0xff] %vm279, %v1037
      %s1041 = smul.u32 %s388, 56
      %s1042 = scalar_lea.vmem %s231, %s1041
      %v1043 = vld [vmem:[%s1042] sm:$0xff]
      %v1044 = vsel %vm279, %v1037, 0
      %1046 = vmatprep.subr.mxu0 0.0
      %1047 = vmatpush1.msra.mxu0 %v270
      %1048 = vmatprep.subr.mxu0 0.0
      %1049 = vmatpush1.msra.mxu0 %v271
      %1050 = vmatprep.subr.mxu0 0.0
      %1051 = vmatpush1.msra.mxu0 %v272
      %1052 = vmatprep.subr.mxu0 0.0
      %1053 = vmatpush1.msra.mxu0 %v273
      %1054 = vmatprep.subr.mxu0 0.0
      %1055 = vmatpush1.msra.mxu0 0.0
      %1056 = vmatprep.subr.mxu0 0.0
      %1057 = vmatpush1.msra.mxu0 0.0
      %1058 = vmatprep.subr.mxu0 0.0
      %1059 = vmatpush1.msra.mxu0 0.0
      %1060 = vmatprep.subr.mxu0 0.0
      %1061 = vmatpush1.msra.mxu0 0.0
      %1062 = vmatprep.subr.mxu0 0.0
      %1063 = vmatpush1.msra.mxu0 0.0
      %1064 = vmatprep.subr.mxu0 0.0
      %1065 = vmatpush1.msra.mxu0 0.0
      %1066 = vmatprep.subr.mxu0 0.0
      %1067 = vmatpush1.msra.mxu0 0.0
      %1068 = vmatprep.subr.mxu0 0.0
      %1069 = vmatpush1.msra.mxu0 0.0
      %1070 = vmatprep.subr.mxu0 0.0
      %1071 = vmatpush1.msra.mxu0 0.0
      %1072 = vmatprep.subr.mxu0 0.0
      %1073 = vmatpush1.msra.mxu0 0.0
      %1074 = vmatprep.subr.mxu0 0.0
      %1075 = vmatpush1.msra.mxu0 0.0
      %1076 = vmatprep.subr.mxu0 0.0
      %1077 = vmatpush1.msra.mxu0 0.0
      %1078 = vmatprep.subr.mxu0 0.0
      %1079 = vmatpush1.msra.mxu0 0.0
      %1080 = vmatprep.subr.mxu0 0.0
      %1081 = vmatpush1.msra.mxu0 0.0
      %1082 = vmatprep.subr.mxu0 0.0
      %1083 = vmatpush1.msra.mxu0 0.0
      %1084 = vmatprep.subr.mxu0 0.0
      %1085 = vmatpush1.msra.mxu0 0.0
      %1086 = vmatprep.subr.mxu0 0.0
      %1087 = vmatpush1.msra.mxu0 0.0
      %1088 = vmatprep.subr.mxu0 0.0
      %1089 = vmatpush1.msra.mxu0 0.0
      %1090 = vmatprep.subr.mxu0 0.0
      %1091 = vmatpush1.msra.mxu0 0.0
      %1092 = vmatprep.subr.mxu0 0.0
      %1093 = vmatpush1.msra.mxu0 0.0
      %1094 = vmatprep.subr.mxu0 0.0
      %1095 = vmatpush1.msra.mxu0 0.0
      %1096 = vmatprep.subr.mxu0 0.0
      %1097 = vmatpush1.msra.mxu0 0.0
      %1098 = vmatprep.subr.mxu0 0.0
      %1099 = vmatpush1.msra.mxu0 0.0
      %1100 = vmatprep.subr.mxu0 0.0
      %1101 = vmatpush1.msra.mxu0 0.0
      %1102 = vmatprep.subr.mxu0 0.0
      %1103 = vmatpush1.msra.mxu0 0.0
      %1104 = vmatprep.subr.mxu0 0.0
      %1105 = vmatpush1.msra.mxu0 0.0
      %1106 = vmatprep.subr.mxu0 0.0
      %1107 = vmatpush1.msra.mxu0 0.0
      %1108 = vmatprep.subr.mxu0 0.0
      %1109 = vmatpush1.msra.mxu0 0.0
      %1110 = vmatprep.mubr.f32.mxu0 0.0
      %1111 = vmatmul.mubr.f32.gmra.mrb[0].mxu0 %v1044
      %v1112 = vpop.f32.mrb[0].mxu0
      %v1113 = vadd.f32 0.0, %v1112
      %v1114 = vpop.f32.mrb[0].mxu0
      %1115 = vdwg.mxu0
      %v1116 = vadd.f32 %v1043, %v1113
      %v1117 = vxor.u32 %v1116, 2147483648
      %v1118 = vmul.f32 %v1117, 1.442695
      %v1119 = vpow.pop %v1118
      %v1120 = vadd.f32 %v1119, 1.0
      %v1121 = vrcp.pop %v1120
      %v1122 = vmul.f32 1.0, %v1121
      %v1123 = vtanh.pop %v1116
      %v1124 = vmul.f32 %v1122, %v1028
      %1126 = vrot.lane.b32.xlu0 %v1123, 64
      %v1127 = vpop.permute.xlu0 %1126
      %v1129 = vmul.f32 %v1122, %v1127
      %1131 = vrot.lane.b32.xlu0 %v1129, 32
      %v1132 = vpop.permute.xlu0 %1131
      %v1134 = vadd.f32 %v1124, %v1132
      %v1135 = vtanh.pop %v1134
      %1137 = vrot.lane.b32.xlu0 %v1135, 64
      %v1138 = vpop.permute.xlu0 %1137
      %v1140 = vmul.f32 %v1122, %v1138
      %1142 = vrot.lane.b32.xlu0 %v1140, 32
      %v1143 = vpop.permute.xlu0 %1142
      %s1145 = scalar_lea.vmem %s256, %s1041
      %1146 = vst.msk [vmem:[%s1145] sm:$0xff] %vm279, %v1143
      %1147 = vst.msk [vmem:[#allocation2] sm:$0xff] %vm279, %v1143
      %1149 = vrot.lane.b32.xlu0 %v1134, 96
      %v1150 = vpop.permute.xlu0 %1149
      %1152 = vst.msk [vmem:[#allocation3] sm:$0xff] %vm279, %v1150
      %s1153 = ssub.s32 1, %s17
      %s1154 = smul.u32 %s1153, %s18
      %s1155 = ssub.s32 0, %s18
      %s1156 = smul.u32 %s17, %s1155
      %s1157 = sadd.s32 %s1154, %s1156
      %s1158 = smul.u32 8, %s1157
      %p1159 = scmp.lt.s32.totalorder %s17, 1
      %s1160 = scalar_select %p1159, %s17, 1
      %p1161 = scmp.lt.s32.totalorder %s1158, 7
      %s1162 = scalar_select %p1161, %s1158, 7
      %s1163 = smul.addr %s1160, 8
      %s1164 = sadd.s32 %s1162, %s1163
      %s1165 = smul.addr %s1164, 8
      %s1166 = scalar_lea.vmem %s2, %s1165
      // Predicated region
      $region33: #{simple_lstm_forward.6} parent=27 // pred_check
        %p1167 = pneg %p119
      $region34: #{simple_lstm_forward.6} parent=27 // pred_check_branch
        %1169 = sbr.rel (%p1167) target = $region36
      $region35: #{simple_lstm_forward.6} parent=27 // pred_region
        %s1170 = ssub.s32 1, %s17
        %s1171 = smul.u32 %s1170, %s18
        %s1172 = ssub.s32 0, %s18
        %s1173 = smul.u32 %s17, %s1172
        %s1174 = sadd.s32 %s1171, %s1173
        %s1175 = smul.u32 8, %s1174
      $region36: #{simple_lstm_forward.6} parent=27 // pred_fallthru
        _
    $region28: #{simple_lstm_forward.6} parent=5 // pred_fallthru
      _
    %p1176 = scmp.le.s32.totalorder 2, %s8
    // Predicated region
    $region37: #{simple_lstm_forward.6} parent=5 // pred_check
      %p1177 = pneg %p1176
    $region38: #{simple_lstm_forward.6} parent=5 // pred_check_branch
      %1179 = sbr.rel (%p1177) target = $region40
    $region39: #{simple_lstm_forward.6} parent=5 // pred_region
      %s1180 = ssub.s32 %s8, 2
      // Predicated region
      $region41: #{simple_lstm_forward.6} parent=39 // pred_check
        %p1181 = pneg %p125
      $region42: #{simple_lstm_forward.6} parent=39 // pred_check_branch
        %1183 = sbr.rel (%p1181) target = $region44
      $region43: #{simple_lstm_forward.6} parent=39 // pred_region
        %s1184 = ssub.s32 1, %s19
        %s1185 = smul.u32 %s1184, %s20
        %s1186 = ssub.s32 0, %s20
        %s1187 = smul.u32 %s19, %s1186
        %s1188 = sadd.s32 %s1185, %s1187
        %s1189 = smul.u32 8, %s1188
        %p1190 = scmp.lt.s32.totalorder %s19, 1
        %s1191 = scalar_select %p1190, %s19, 1
        %p1192 = scmp.lt.s32.totalorder %s1189, 7
        %s1193 = scalar_select %p1192, %s1189, 7
        %s1194 = smul.addr %s1191, 8
        %s1195 = sadd.s32 %s1193, %s1194
        %s1196 = smul.addr %s1195, 8
        %s1197 = scalar_lea.vmem %s2, %s1196
      $region44: #{simple_lstm_forward.6} parent=39 // pred_fallthru
        _
    $region40: #{simple_lstm_forward.6} parent=5 // pred_fallthru
      _
  $region6: #{simple_lstm_forward.6} parent=0 // loop_footer
    %s12 = sadd.s32 1, %s8
  $region7: #{simple_lstm_forward.6} parent=0 // loop_footer_branch
    %7 = sbr.rel target = $region3
  $region8: #{simple_lstm_forward.6} parent=0 // loop_exit
    _

</llo_original>
